<compile_context>
chip_gen: v7x
topology: tpu7x:2x2x1
jax: 0.10.0
libtpu: 0.0.40
codegen_flags: <defaults>
</compile_context>

<pallas_src>
import math

import jax
import jax.numpy as jnp
from jax.experimental import pallas as pl
from jax.experimental.pallas import tpu as pltpu


def _round_up(x, m):
    return ((x + m - 1) // m) * m


def _tile_sizes(batch):
    # bf16 MXU operands pack 16 rows per packed sublane group -> round to 16.
    # Raise the per-tile batch toward 256 (MXU row occupancy on v6e/v7x);
    # cap by the padded batch itself so tiny batches stay tiny.
    tm = min(256, _round_up(batch, 16))
    m_pad = _round_up(batch, tm)
    return tm, m_pad


# ------------------------------ fused kernel ------------------------------- #

def _pair_vae_kernel(
    # data (bf16) / noise (f32) -- per batch tile
    x_a_ref, x_b_ref, eps_a_ref, eps_b_ref,
    # VAE A parameters (weights bf16, biases f32) -- VMEM resident
    a_ew1, a_eb1, a_ew2_mu, a_eb2_mu, a_ew2_lv, a_eb2_lv,
    a_dw1, a_db1, a_dw2, a_db2,
    # VAE B parameters
    b_ew1, b_eb1, b_ew2_mu, b_eb2_mu, b_ew2_lv, b_eb2_lv,
    b_dw1, b_db1, b_dw2, b_db2,
    # outputs (per tile)
    dec_a_ref, dec_b_ref, z_a_ref, z_b_ref,
    # scratch: stacked latents [z_a ; z_b] for the batched decoders
    z_stack,
):
    tm = x_a_ref.shape[0]

    def encode_reparam(x_ref, ew1, eb1, ew2_mu, eb2_mu, ew2_lv, eb2_lv, eps_ref):
        # h = relu(x @ W1 + b1)   -- bf16 MXU operands, f32 accumulate/epilogue
        h = jnp.dot(x_ref[...], ew1[...], preferred_element_type=jnp.float32) + eb1[...]
        h = jnp.maximum(h, 0.0).astype(jnp.bfloat16)
        # mu / logvar from separate weight slabs (no 2*latent "stats" tensor)
        mu = jnp.dot(h, ew2_mu[...], preferred_element_type=jnp.float32) + eb2_mu[...]
        logvar = jnp.dot(h, ew2_lv[...], preferred_element_type=jnp.float32) + eb2_lv[...]
        # z = mu + exp(0.5 * logvar) * eps   (EUP exp, f32)
        return mu + jnp.exp(0.5 * logvar) * eps_ref[...]

    z_a = encode_reparam(x_a_ref, a_ew1, a_eb1, a_ew2_mu, a_eb2_mu,
                         a_ew2_lv, a_eb2_lv, eps_a_ref)
    z_b = encode_reparam(x_b_ref, b_ew1, b_eb1, b_ew2_mu, b_eb2_mu,
                         b_ew2_lv, b_eb2_lv, eps_b_ref)
    z_a_ref[...] = z_a
    z_b_ref[...] = z_b

    # Stage [z_a ; z_b] in VMEM scratch with two row-range stores instead of a
    # sublane-axis concatenate (avoids the VPU retile/copy path).
    z_stack[0:tm, :] = z_a
    z_stack[tm:2 * tm, :] = z_b

    def decode_two(dw1, db1, dw2, db2, out_ref):
        # Batched decode of [z_a ; z_b]: one pass over the decoder weights
        # produces both reconstructions for this VAE.
        # TODO(synk): if in_dim grows >=2048 with TM=128+, tile the lane (N)
        # axis of dw2 in 512-1024 chunks to bound the sigmoid-epilogue live set.
        z2 = z_stack[...].astype(jnp.bfloat16)
        h = jnp.dot(z2, dw1[...], preferred_element_type=jnp.float32) + db1[...]
        h = jnp.maximum(h, 0.0).astype(jnp.bfloat16)
        y = jnp.dot(h, dw2[...], preferred_element_type=jnp.float32) + db2[...]
        out_ref[...] = jax.nn.sigmoid(y).astype(out_ref.dtype)

    # VAE A decodes [z_a ; z_b]: rows [:TM] -> recon_a, rows [TM:] -> cross_recon_a
    decode_two(a_dw1, a_db1, a_dw2, a_db2, dec_a_ref)
    # VAE B decodes the SAME stack: rows [:TM] -> cross_recon_b, rows [TM:] -> recon_b
    decode_two(b_dw1, b_db1, b_dw2, b_db2, dec_b_ref)


@jax.jit
def _pair_vae_forward(x_a, x_b, rng, params_a, params_b):
    batch = x_a.shape[0]
    image_shape = x_a.shape[1:]
    in_dim = math.prod(image_shape)
    latent_dim = params_a[6].shape[0]          # dec_w1: (latent, hidden)
    tm, m_pad = _tile_sizes(batch)
    n_tiles = m_pad // tm

    pad_rows = ((0, m_pad - batch), (0, 0))
    # Inputs padded to full tiles AND cast to bf16 here -> halved input DMA.
    x_a_p = jnp.pad(x_a.reshape(batch, in_dim).astype(jnp.bfloat16), pad_rows)
    x_b_p = jnp.pad(x_b.reshape(batch, in_dim).astype(jnp.bfloat16), pad_rows)

    # TODO(synk): eps could be generated in-kernel with pltpu.prng_seed /
    # prng_random_bits; kept host-side (jax.random) for deterministic testing.
    k_a, k_b = jax.random.split(rng)
    eps_a = jax.random.normal(k_a, (m_pad, latent_dim), jnp.float32)
    eps_b = jax.random.normal(k_b, (m_pad, latent_dim), jnp.float32)

    batch_spec = lambda cols: pl.BlockSpec((tm, cols), lambda i: (i, 0))
    resident = lambda p: pl.BlockSpec(p.shape, lambda i: (0, 0))   # weights: DMA once

    grid_spec = pltpu.PrefetchScalarGridSpec(
        num_scalar_prefetch=0,
        grid=(n_tiles,),
        in_specs=[
            batch_spec(in_dim),       # x_a
            batch_spec(in_dim),       # x_b
            batch_spec(latent_dim),   # eps_a
            batch_spec(latent_dim),   # eps_b
        ] + [resident(p) for p in params_a] + [resident(p) for p in params_b],
        out_specs=[
            pl.BlockSpec((2 * tm, in_dim), lambda i: (i, 0)),      # dec_a
            pl.BlockSpec((2 * tm, in_dim), lambda i: (i, 0)),      # dec_b
            pl.BlockSpec((tm, latent_dim), lambda i: (i, 0)),      # z_a
            pl.BlockSpec((tm, latent_dim), lambda i: (i, 0)),      # z_b
        ],
        scratch_shapes=[pltpu.VMEM((2 * tm, latent_dim), jnp.float32)],
    )

    dec_a, dec_b, z_a_p, z_b_p = pl.pallas_call(
        _pair_vae_kernel,
        out_shape=(
            jax.ShapeDtypeStruct((2 * m_pad, in_dim), jnp.bfloat16),
            jax.ShapeDtypeStruct((2 * m_pad, in_dim), jnp.bfloat16),
            jax.ShapeDtypeStruct((m_pad, latent_dim), jnp.float32),
            jax.ShapeDtypeStruct((m_pad, latent_dim), jnp.float32),
        ),
        grid_spec=grid_spec,
        compiler_params=pltpu.CompilerParams(
            # batch tiles are independent -> shard across v7x's 2 TensorCores
            dimension_semantics=("parallel",),
            # per-tile footprint (TM<=256, in_dim~1K): ~8 MiB incl. double
            # buffers + resident weights -> fits every generation, incl. v7x.
            vmem_limit_bytes=32 * 1024 * 1024,
        ),
    )(x_a_p, x_b_p, eps_a, eps_b, *params_a, *params_b)

    def unpack(dec):
        # per-tile layout: rows [:TM] = top half, rows [TM:2*TM] = bottom half
        d = dec.reshape(n_tiles, 2, tm, in_dim)
        top = d[:, 0].reshape(m_pad, in_dim)[:batch].reshape((batch,) + image_shape)
        bot = d[:, 1].reshape(m_pad, in_dim)[:batch].reshape((batch,) + image_shape)
        return top, bot

    recon_a, cross_recon_a = unpack(dec_a)      # A decodes [z_a ; z_b]
    cross_recon_b, recon_b = unpack(dec_b)      # B decodes [z_a ; z_b]
    return {
        "recon_a": recon_a,
        "recon_b": recon_b,
        "cross_recon_a": cross_recon_a,
        "cross_recon_b": cross_recon_b,
        "z_a": z_a_p[:batch],
        "z_b": z_b_p[:batch],
    }


# ------------------------------- VAE modules ------------------------------- #

class MLPVAE:
    """Simple MLP VAE on flattened NCHW images; params packed for the fused kernel."""

    def __init__(self, key, image_shape, hidden_dim, latent_dim):
        self.image_shape = tuple(image_shape)
        self.latent_dim = latent_dim
        c, h, w = self.image_shape
        in_dim = c * h * w
        self.in_dim = in_dim

        ks = jax.random.split(key, 4)
        s = lambda fan_in: 1.0 / jnp.sqrt(jnp.float32(fan_in))
        enc_w1 = jax.random.normal(ks[0], (in_dim, hidden_dim), jnp.float32) * s(in_dim)
        enc_w2 = jax.random.normal(ks[1], (hidden_dim, 2 * latent_dim), jnp.float32) * s(hidden_dim)
        dec_w1 = jax.random.normal(ks[2], (latent_dim, hidden_dim), jnp.float32) * s(latent_dim)
        dec_w2 = jax.random.normal(ks[3], (hidden_dim, in_dim), jnp.float32) * s(hidden_dim)

        # Weights stored as bf16 (MXU operands); biases stay f32 (f32 epilogue).
        # TODO(synk): on v5e/v6e an int8 weight path would halve weight DMA;
        # not portable to v7x (fp8-only MXU), so kept bf16 here.
        self.enc_w1 = enc_w1.astype(jnp.bfloat16)
        self.enc_b1 = jnp.zeros((1, hidden_dim), jnp.float32)
        # mu / logvar weight slabs split ahead of time so the kernel never
        # materializes a 2*latent-wide "stats" tensor.
        self.enc_w2_mu = enc_w2[:, :latent_dim].astype(jnp.bfloat16)
        self.enc_w2_lv = enc_w2[:, latent_dim:].astype(jnp.bfloat16)
        self.enc_b2_mu = jnp.zeros((1, latent_dim), jnp.float32)
        self.enc_b2_lv = jnp.zeros((1, latent_dim), jnp.float32)
        self.dec_w1 = dec_w1.astype(jnp.bfloat16)
        self.dec_b1 = jnp.zeros((1, hidden_dim), jnp.float32)
        self.dec_w2 = dec_w2.astype(jnp.bfloat16)
        self.dec_b2 = jnp.zeros((1, in_dim), jnp.float32)

    def params(self):
        return (self.enc_w1, self.enc_b1,
                self.enc_w2_mu, self.enc_b2_mu,
                self.enc_w2_lv, self.enc_b2_lv,
                self.dec_w1, self.dec_b1,
                self.dec_w2, self.dec_b2)


class PairVAE:
    """JAX/Pallas port of the PyTorch PairVAE forward pass."""

    def __init__(self, vae_a, vae_b, weight_latent=0.005, weight_a_a=0.04,
                 weight_a_b=0.4, weight_b_b=0.04, weight_b_a=1.0):
        self.vae_a = vae_a
        self.vae_b = vae_b
        self.weight_latent = weight_latent
        self.weight_a_a = weight_a_a
        self.weight_a_b = weight_a_b
        self.weight_b_b = weight_b_b
        self.weight_b_a = weight_b_a

    def forward(self, batch, rng):
        x_a = batch["data_a"]
        x_b = batch["data_b"]
        out = _pair_vae_forward(x_a, x_b, rng,
                                self.vae_a.params(), self.vae_b.params())
        out["x_a"] = x_a
        out["x_b"] = x_b
        return out


# --------------------------- pure-jnp reference ----------------------------- #

def _reference_forward(x_a, x_b, rng, vae_a, vae_b):
    batch = x_a.shape[0]
    latent = vae_a.latent_dim
    _, m_pad = _tile_sizes(batch)
    k_a, k_b = jax.random.split(rng)
    eps_a = jax.random.normal(k_a, (m_pad, latent), jnp.float32)[:batch]
    eps_b = jax.random.normal(k_b, (m_pad, latent), jnp.float32)[:batch]

    def enc(x, v, eps):
        xf = x.reshape(batch, -1).astype(jnp.bfloat16)
        h = jnp.maximum(
            jnp.dot(xf, v.enc_w1, preferred_element_type=jnp.float32) + v.enc_b1, 0.0
        ).astype(jnp.bfloat16)
        mu = jnp.dot(h, v.enc_w2_mu, preferred_element_type=jnp.float32) + v.enc_b2_mu
        lv = jnp.dot(h, v.enc_w2_lv, preferred_element_type=jnp.float32) + v.enc_b2_lv
        return mu + jnp.exp(0.5 * lv) * eps

    def dec(z, v):
        h = jnp.maximum(
            jnp.dot(z.astype(jnp.bfloat16), v.dec_w1,
                    preferred_element_type=jnp.float32) + v.dec_b1, 0.0
        ).astype(jnp.bfloat16)
        y = jnp.dot(h, v.dec_w2, preferred_element_type=jnp.float32) + v.dec_b2
        y = jax.nn.sigmoid(y).astype(jnp.bfloat16)   # kernel writes bf16 recon
        return y.reshape((batch,) + v.image_shape)

    z_a = enc(x_a, vae_a, eps_a)
    z_b = enc(x_b, vae_b, eps_b)
    return {
        "recon_a": dec(z_a, vae_a), "recon_b": dec(z_b, vae_b),
        "cross_recon_a": dec(z_b, vae_a), "cross_recon_b": dec(z_a, vae_b),
        "z_a": z_a, "z_b": z_b,
    }


# ---------------------------------- main ----------------------------------- #

if __name__ == "__main__":
    B, C, H, W = 2, 4, 16, 16           # small NCHW images
    HIDDEN, LATENT = 128, 32

    root = jax.random.PRNGKey(0)
    k_da, k_db, k_va, k_vb, k_eps = jax.random.split(root, 5)

    data_a = jax.random.uniform(k_da, (B, C, H, W), jnp.float32)
    data_b = jax.random.uniform(k_db, (B, C, H, W), jnp.float32)

    vae_a = MLPVAE(k_va, (C, H, W), HIDDEN, LATENT)
    vae_b = MLPVAE(k_vb, (C, H, W), HIDDEN, LATENT)
    pair = PairVAE(vae_a, vae_b)

    outputs = pair.forward({"data_a": data_a, "data_b": data_b}, k_eps)
    jax.block_until_ready(outputs)

    # shape checks mirroring the PyTorch semantics
    assert outputs["recon_a"].shape == (B, C, H, W)
    assert outputs["recon_b"].shape == (B, C, H, W)
    assert outputs["cross_recon_a"].shape == (B, C, H, W)
    assert outputs["cross_recon_b"].shape == (B, C, H, W)
    assert outputs["z_a"].shape == (B, LATENT)
    assert outputs["z_b"].shape == (B, LATENT)
    assert outputs["x_a"].shape == (B, C, H, W)

    # numerical check vs. pure-jnp reference (same bf16 params, same eps)
    ref = _reference_forward(data_a, data_b, k_eps, vae_a, vae_b)
    for name in ("recon_a", "recon_b", "cross_recon_a", "cross_recon_b",
                 "z_a", "z_b"):
        got = outputs[name].astype(jnp.float32)
        want = ref[name].astype(jnp.float32)
        assert bool(jnp.all(jnp.isfinite(got))), name
        assert bool(jnp.allclose(got, want, atol=1.5e-2, rtol=1.5e-2)), name

    print("KERNEL_OK")
</pallas_src>

<mosaic_0001>
module attributes {stable_mosaic.version = 11 : i64} {
  func.func @_pair_vae_kernel(%arg0: i32, %arg1: memref<16x1024xbf16, #tpu.memory_space<vmem>>, %arg2: memref<16x1024xbf16, #tpu.memory_space<vmem>>, %arg3: memref<16x32xf32, #tpu.memory_space<vmem>>, %arg4: memref<16x32xf32, #tpu.memory_space<vmem>>, %arg5: memref<1024x128xbf16, #tpu.memory_space<vmem>>, %arg6: memref<1x128xf32, #tpu.memory_space<vmem>>, %arg7: memref<128x32xbf16, #tpu.memory_space<vmem>>, %arg8: memref<1x32xf32, #tpu.memory_space<vmem>>, %arg9: memref<128x32xbf16, #tpu.memory_space<vmem>>, %arg10: memref<1x32xf32, #tpu.memory_space<vmem>>, %arg11: memref<32x128xbf16, #tpu.memory_space<vmem>>, %arg12: memref<1x128xf32, #tpu.memory_space<vmem>>, %arg13: memref<128x1024xbf16, #tpu.memory_space<vmem>>, %arg14: memref<1x1024xf32, #tpu.memory_space<vmem>>, %arg15: memref<1024x128xbf16, #tpu.memory_space<vmem>>, %arg16: memref<1x128xf32, #tpu.memory_space<vmem>>, %arg17: memref<128x32xbf16, #tpu.memory_space<vmem>>, %arg18: memref<1x32xf32, #tpu.memory_space<vmem>>, %arg19: memref<128x32xbf16, #tpu.memory_space<vmem>>, %arg20: memref<1x32xf32, #tpu.memory_space<vmem>>, %arg21: memref<32x128xbf16, #tpu.memory_space<vmem>>, %arg22: memref<1x128xf32, #tpu.memory_space<vmem>>, %arg23: memref<128x1024xbf16, #tpu.memory_space<vmem>>, %arg24: memref<1x1024xf32, #tpu.memory_space<vmem>>, %arg25: memref<32x1024xbf16, #tpu.memory_space<vmem>>, %arg26: memref<32x1024xbf16, #tpu.memory_space<vmem>>, %arg27: memref<16x32xf32, #tpu.memory_space<vmem>>, %arg28: memref<16x32xf32, #tpu.memory_space<vmem>>, %arg29: memref<32x32xf32, #tpu.memory_space<vmem>>) attributes {dimension_semantics = [#tpu.dimension_semantics<parallel>], iteration_bounds = array<i64: 1>, scalar_prefetch = 0 : i64, scratch_operands = 1 : i64, tpu.core_type = #tpu.core_type<tc>, window_params = [{transform_indices = @transform_0, window_bounds = array<i64: 16, 1024>}, {transform_indices = @transform_1, window_bounds = array<i64: 16, 1024>}, {transform_indices = @transform_2, window_bounds = array<i64: 16, 32>}, {transform_indices = @transform_3, window_bounds = array<i64: 16, 32>}, {pipeline_mode = #tpu.pipeline_mode<synchronous>, transform_indices = @transform_4, window_bounds = array<i64: 1024, 128>}, {pipeline_mode = #tpu.pipeline_mode<synchronous>, transform_indices = @transform_5, window_bounds = array<i64: 1, 128>}, {pipeline_mode = #tpu.pipeline_mode<synchronous>, transform_indices = @transform_6, window_bounds = array<i64: 128, 32>}, {pipeline_mode = #tpu.pipeline_mode<synchronous>, transform_indices = @transform_7, window_bounds = array<i64: 1, 32>}, {pipeline_mode = #tpu.pipeline_mode<synchronous>, transform_indices = @transform_8, window_bounds = array<i64: 128, 32>}, {pipeline_mode = #tpu.pipeline_mode<synchronous>, transform_indices = @transform_9, window_bounds = array<i64: 1, 32>}, {pipeline_mode = #tpu.pipeline_mode<synchronous>, transform_indices = @transform_10, window_bounds = array<i64: 32, 128>}, {pipeline_mode = #tpu.pipeline_mode<synchronous>, transform_indices = @transform_11, window_bounds = array<i64: 1, 128>}, {pipeline_mode = #tpu.pipeline_mode<synchronous>, transform_indices = @transform_12, window_bounds = array<i64: 128, 1024>}, {pipeline_mode = #tpu.pipeline_mode<synchronous>, transform_indices = @transform_13, window_bounds = array<i64: 1, 1024>}, {pipeline_mode = #tpu.pipeline_mode<synchronous>, transform_indices = @transform_14, window_bounds = array<i64: 1024, 128>}, {pipeline_mode = #tpu.pipeline_mode<synchronous>, transform_indices = @transform_15, window_bounds = array<i64: 1, 128>}, {pipeline_mode = #tpu.pipeline_mode<synchronous>, transform_indices = @transform_16, window_bounds = array<i64: 128, 32>}, {pipeline_mode = #tpu.pipeline_mode<synchronous>, transform_indices = @transform_17, window_bounds = array<i64: 1, 32>}, {pipeline_mode = #tpu.pipeline_mode<synchronous>, transform_indices = @transform_18, window_bounds = array<i64: 128, 32>}, {pipeline_mode = #tpu.pipeline_mode<synchronous>, transform_indices = @transform_19, window_bounds = array<i64: 1, 32>}, {pipeline_mode = #tpu.pipeline_mode<synchronous>, transform_indices = @transform_20, window_bounds = array<i64: 32, 128>}, {pipeline_mode = #tpu.pipeline_mode<synchronous>, transform_indices = @transform_21, window_bounds = array<i64: 1, 128>}, {pipeline_mode = #tpu.pipeline_mode<synchronous>, transform_indices = @transform_22, window_bounds = array<i64: 128, 1024>}, {pipeline_mode = #tpu.pipeline_mode<synchronous>, transform_indices = @transform_23, window_bounds = array<i64: 1, 1024>}, {transform_indices = @transform_24, window_bounds = array<i64: 32, 1024>}, {transform_indices = @transform_25, window_bounds = array<i64: 32, 1024>}, {transform_indices = @transform_26, window_bounds = array<i64: 16, 32>}, {transform_indices = @transform_27, window_bounds = array<i64: 16, 32>}]} {
    %c0 = arith.constant 0 : index
    %c0_0 = arith.constant 0 : index
    %0 = vector.load %arg1[%c0, %c0_0] : memref<16x1024xbf16, #tpu.memory_space<vmem>>, vector<16x1024xbf16>
    %c0_1 = arith.constant 0 : index
    %c0_2 = arith.constant 0 : index
    %1 = vector.load %arg5[%c0_1, %c0_2] : memref<1024x128xbf16, #tpu.memory_space<vmem>>, vector<1024x128xbf16>
    %cst = arith.constant dense<0.000000e+00> : vector<16x128xf32>
    %2 = tpu.matmul %0, %1, %cst {dimension_numbers = #tpu.dot_dimension_numbers<[1], [0], [0], [1], [0, 0, 1, 1], [], []>} : vector<16x1024xbf16>, vector<1024x128xbf16>, vector<16x128xf32> -> vector<16x128xf32>
    %c0_3 = arith.constant 0 : index
    %c0_4 = arith.constant 0 : index
    %3 = vector.load %arg6[%c0_3, %c0_4] : memref<1x128xf32, #tpu.memory_space<vmem>>, vector<1x128xf32>
    %4 = vector.broadcast %3 : vector<1x128xf32> to vector<16x128xf32>
    %5 = arith.addf %2, %4 : vector<16x128xf32>
    %cst_5 = arith.constant 0.000000e+00 : f32
    %6 = vector.broadcast %cst_5 : f32 to vector<16x128xf32>
    %7 = arith.maximumf %5, %6 : vector<16x128xf32>
    %8 = arith.truncf %7 : vector<16x128xf32> to vector<16x128xbf16>
    %c0_6 = arith.constant 0 : index
    %c0_7 = arith.constant 0 : index
    %9 = vector.load %arg7[%c0_6, %c0_7] : memref<128x32xbf16, #tpu.memory_space<vmem>>, vector<128x32xbf16>
    %cst_8 = arith.constant dense<0.000000e+00> : vector<16x32xf32>
    %10 = tpu.matmul %8, %9, %cst_8 {dimension_numbers = #tpu.dot_dimension_numbers<[1], [0], [0], [1], [0, 0, 1, 1], [], []>} : vector<16x128xbf16>, vector<128x32xbf16>, vector<16x32xf32> -> vector<16x32xf32>
    %c0_9 = arith.constant 0 : index
    %c0_10 = arith.constant 0 : index
    %11 = vector.load %arg8[%c0_9, %c0_10] : memref<1x32xf32, #tpu.memory_space<vmem>>, vector<1x32xf32>
    %12 = vector.broadcast %11 : vector<1x32xf32> to vector<16x32xf32>
    %13 = arith.addf %10, %12 : vector<16x32xf32>
    %c0_11 = arith.constant 0 : index
    %c0_12 = arith.constant 0 : index
    %14 = vector.load %arg9[%c0_11, %c0_12] : memref<128x32xbf16, #tpu.memory_space<vmem>>, vector<128x32xbf16>
    %cst_13 = arith.constant dense<0.000000e+00> : vector<16x32xf32>
    %15 = tpu.matmul %8, %14, %cst_13 {dimension_numbers = #tpu.dot_dimension_numbers<[1], [0], [0], [1], [0, 0, 1, 1], [], []>} : vector<16x128xbf16>, vector<128x32xbf16>, vector<16x32xf32> -> vector<16x32xf32>
    %c0_14 = arith.constant 0 : index
    %c0_15 = arith.constant 0 : index
    %16 = vector.load %arg10[%c0_14, %c0_15] : memref<1x32xf32, #tpu.memory_space<vmem>>, vector<1x32xf32>
    %17 = vector.broadcast %16 : vector<1x32xf32> to vector<16x32xf32>
    %18 = arith.addf %15, %17 : vector<16x32xf32>
    %cst_16 = arith.constant 5.000000e-01 : f32
    %19 = vector.broadcast %cst_16 : f32 to vector<16x32xf32>
    %20 = arith.mulf %19, %18 : vector<16x32xf32>
    %21 = math.exp %20 : vector<16x32xf32>
    %c0_17 = arith.constant 0 : index
    %c0_18 = arith.constant 0 : index
    %22 = vector.load %arg3[%c0_17, %c0_18] : memref<16x32xf32, #tpu.memory_space<vmem>>, vector<16x32xf32>
    %23 = arith.mulf %21, %22 : vector<16x32xf32>
    %24 = arith.addf %13, %23 : vector<16x32xf32>
    %c0_19 = arith.constant 0 : index
    %c0_20 = arith.constant 0 : index
    %25 = vector.load %arg2[%c0_19, %c0_20] : memref<16x1024xbf16, #tpu.memory_space<vmem>>, vector<16x1024xbf16>
    %c0_21 = arith.constant 0 : index
    %c0_22 = arith.constant 0 : index
    %26 = vector.load %arg15[%c0_21, %c0_22] : memref<1024x128xbf16, #tpu.memory_space<vmem>>, vector<1024x128xbf16>
    %cst_23 = arith.constant dense<0.000000e+00> : vector<16x128xf32>
    %27 = tpu.matmul %25, %26, %cst_23 {dimension_numbers = #tpu.dot_dimension_numbers<[1], [0], [0], [1], [0, 0, 1, 1], [], []>} : vector<16x1024xbf16>, vector<1024x128xbf16>, vector<16x128xf32> -> vector<16x128xf32>
    %c0_24 = arith.constant 0 : index
    %c0_25 = arith.constant 0 : index
    %28 = vector.load %arg16[%c0_24, %c0_25] : memref<1x128xf32, #tpu.memory_space<vmem>>, vector<1x128xf32>
    %29 = vector.broadcast %28 : vector<1x128xf32> to vector<16x128xf32>
    %30 = arith.addf %27, %29 : vector<16x128xf32>
    %cst_26 = arith.constant 0.000000e+00 : f32
    %31 = vector.broadcast %cst_26 : f32 to vector<16x128xf32>
    %32 = arith.maximumf %30, %31 : vector<16x128xf32>
    %33 = arith.truncf %32 : vector<16x128xf32> to vector<16x128xbf16>
    %c0_27 = arith.constant 0 : index
    %c0_28 = arith.constant 0 : index
    %34 = vector.load %arg17[%c0_27, %c0_28] : memref<128x32xbf16, #tpu.memory_space<vmem>>, vector<128x32xbf16>
    %cst_29 = arith.constant dense<0.000000e+00> : vector<16x32xf32>
    %35 = tpu.matmul %33, %34, %cst_29 {dimension_numbers = #tpu.dot_dimension_numbers<[1], [0], [0], [1], [0, 0, 1, 1], [], []>} : vector<16x128xbf16>, vector<128x32xbf16>, vector<16x32xf32> -> vector<16x32xf32>
    %c0_30 = arith.constant 0 : index
    %c0_31 = arith.constant 0 : index
    %36 = vector.load %arg18[%c0_30, %c0_31] : memref<1x32xf32, #tpu.memory_space<vmem>>, vector<1x32xf32>
    %37 = vector.broadcast %36 : vector<1x32xf32> to vector<16x32xf32>
    %38 = arith.addf %35, %37 : vector<16x32xf32>
    %c0_32 = arith.constant 0 : index
    %c0_33 = arith.constant 0 : index
    %39 = vector.load %arg19[%c0_32, %c0_33] : memref<128x32xbf16, #tpu.memory_space<vmem>>, vector<128x32xbf16>
    %cst_34 = arith.constant dense<0.000000e+00> : vector<16x32xf32>
    %40 = tpu.matmul %33, %39, %cst_34 {dimension_numbers = #tpu.dot_dimension_numbers<[1], [0], [0], [1], [0, 0, 1, 1], [], []>} : vector<16x128xbf16>, vector<128x32xbf16>, vector<16x32xf32> -> vector<16x32xf32>
    %c0_35 = arith.constant 0 : index
    %c0_36 = arith.constant 0 : index
    %41 = vector.load %arg20[%c0_35, %c0_36] : memref<1x32xf32, #tpu.memory_space<vmem>>, vector<1x32xf32>
    %42 = vector.broadcast %41 : vector<1x32xf32> to vector<16x32xf32>
    %43 = arith.addf %40, %42 : vector<16x32xf32>
    %cst_37 = arith.constant 5.000000e-01 : f32
    %44 = vector.broadcast %cst_37 : f32 to vector<16x32xf32>
    %45 = arith.mulf %44, %43 : vector<16x32xf32>
    %46 = math.exp %45 : vector<16x32xf32>
    %c0_38 = arith.constant 0 : index
    %c0_39 = arith.constant 0 : index
    %47 = vector.load %arg4[%c0_38, %c0_39] : memref<16x32xf32, #tpu.memory_space<vmem>>, vector<16x32xf32>
    %48 = arith.mulf %46, %47 : vector<16x32xf32>
    %49 = arith.addf %38, %48 : vector<16x32xf32>
    %c0_40 = arith.constant 0 : index
    %c0_41 = arith.constant 0 : index
    %50 = vector.load %arg27[%c0_40, %c0_41] : memref<16x32xf32, #tpu.memory_space<vmem>>, vector<16x32xf32>
    tpu.vector_store %arg27[%c0_40, %c0_41], %24 {strides = array<i32>} : memref<16x32xf32, #tpu.memory_space<vmem>>, vector<16x32xf32>,
    %c0_42 = arith.constant 0 : index
    %c0_43 = arith.constant 0 : index
    %51 = vector.load %arg28[%c0_42, %c0_43] : memref<16x32xf32, #tpu.memory_space<vmem>>, vector<16x32xf32>
    tpu.vector_store %arg28[%c0_42, %c0_43], %49 {strides = array<i32>} : memref<16x32xf32, #tpu.memory_space<vmem>>, vector<16x32xf32>,
    %c0_44 = arith.constant 0 : index
    %c0_45 = arith.constant 0 : index
    %52 = vector.load %arg29[%c0_44, %c0_45] : memref<32x32xf32, #tpu.memory_space<vmem>>, vector<16x32xf32>
    tpu.vector_store %arg29[%c0_44, %c0_45], %24 {strides = array<i32>} : memref<32x32xf32, #tpu.memory_space<vmem>>, vector<16x32xf32>,
    %c16 = arith.constant 16 : index
    %c0_46 = arith.constant 0 : index
    %53 = vector.load %arg29[%c16, %c0_46] : memref<32x32xf32, #tpu.memory_space<vmem>>, vector<16x32xf32>
    tpu.vector_store %arg29[%c16, %c0_46], %49 {strides = array<i32>} : memref<32x32xf32, #tpu.memory_space<vmem>>, vector<16x32xf32>,
    %c0_47 = arith.constant 0 : index
    %c0_48 = arith.constant 0 : index
    %54 = vector.load %arg29[%c0_47, %c0_48] : memref<32x32xf32, #tpu.memory_space<vmem>>, vector<32x32xf32>
    %55 = arith.truncf %54 : vector<32x32xf32> to vector<32x32xbf16>
    %c0_49 = arith.constant 0 : index
    %c0_50 = arith.constant 0 : index
    %56 = vector.load %arg11[%c0_49, %c0_50] : memref<32x128xbf16, #tpu.memory_space<vmem>>, vector<32x128xbf16>
    %cst_51 = arith.constant dense<0.000000e+00> : vector<32x128xf32>
    %57 = tpu.matmul %55, %56, %cst_51 {dimension_numbers = #tpu.dot_dimension_numbers<[1], [0], [0], [1], [0, 0, 1, 1], [], []>} : vector<32x32xbf16>, vector<32x128xbf16>, vector<32x128xf32> -> vector<32x128xf32>
    %c0_52 = arith.constant 0 : index
    %c0_53 = arith.constant 0 : index
    %58 = vector.load %arg12[%c0_52, %c0_53] : memref<1x128xf32, #tpu.memory_space<vmem>>, vector<1x128xf32>
    %59 = vector.broadcast %58 : vector<1x128xf32> to vector<32x128xf32>
    %60 = arith.addf %57, %59 : vector<32x128xf32>
    %cst_54 = arith.constant 0.000000e+00 : f32
    %61 = vector.broadcast %cst_54 : f32 to vector<32x128xf32>
    %62 = arith.maximumf %60, %61 : vector<32x128xf32>
    %63 = arith.truncf %62 : vector<32x128xf32> to vector<32x128xbf16>
    %c0_55 = arith.constant 0 : index
    %c0_56 = arith.constant 0 : index
    %64 = vector.load %arg13[%c0_55, %c0_56] : memref<128x1024xbf16, #tpu.memory_space<vmem>>, vector<128x1024xbf16>
    %cst_57 = arith.constant dense<0.000000e+00> : vector<32x1024xf32>
    %65 = tpu.matmul %63, %64, %cst_57 {dimension_numbers = #tpu.dot_dimension_numbers<[1], [0], [0], [1], [0, 0, 1, 1], [], []>} : vector<32x128xbf16>, vector<128x1024xbf16>, vector<32x1024xf32> -> vector<32x1024xf32>
    %c0_58 = arith.constant 0 : index
    %c0_59 = arith.constant 0 : index
    %66 = vector.load %arg14[%c0_58, %c0_59] : memref<1x1024xf32, #tpu.memory_space<vmem>>, vector<1x1024xf32>
    %67 = vector.broadcast %66 : vector<1x1024xf32> to vector<32x1024xf32>
    %68 = arith.addf %65, %67 : vector<32x1024xf32>
    %69 = arith.negf %68 : vector<32x1024xf32>
    %70 = math.exp %69 : vector<32x1024xf32>
    %cst_60 = arith.constant 1.000000e+00 : f32
    %71 = vector.broadcast %cst_60 : f32 to vector<32x1024xf32>
    %72 = arith.addf %71, %70 : vector<32x1024xf32>
    %73 = arith.divf %71, %72 : vector<32x1024xf32>
    %74 = arith.truncf %73 : vector<32x1024xf32> to vector<32x1024xbf16>
    %c0_61 = arith.constant 0 : index
    %c0_62 = arith.constant 0 : index
    %75 = vector.load %arg25[%c0_61, %c0_62] : memref<32x1024xbf16, #tpu.memory_space<vmem>>, vector<32x1024xbf16>
    tpu.vector_store %arg25[%c0_61, %c0_62], %74 {strides = array<i32>} : memref<32x1024xbf16, #tpu.memory_space<vmem>>, vector<32x1024xbf16>,
    %c0_63 = arith.constant 0 : index
    %c0_64 = arith.constant 0 : index
    %76 = vector.load %arg29[%c0_63, %c0_64] : memref<32x32xf32, #tpu.memory_space<vmem>>, vector<32x32xf32>
    %77 = arith.truncf %76 : vector<32x32xf32> to vector<32x32xbf16>
    %c0_65 = arith.constant 0 : index
    %c0_66 = arith.constant 0 : index
    %78 = vector.load %arg21[%c0_65, %c0_66] : memref<32x128xbf16, #tpu.memory_space<vmem>>, vector<32x128xbf16>
    %cst_67 = arith.constant dense<0.000000e+00> : vector<32x128xf32>
    %79 = tpu.matmul %77, %78, %cst_67 {dimension_numbers = #tpu.dot_dimension_numbers<[1], [0], [0], [1], [0, 0, 1, 1], [], []>} : vector<32x32xbf16>, vector<32x128xbf16>, vector<32x128xf32> -> vector<32x128xf32>
    %c0_68 = arith.constant 0 : index
    %c0_69 = arith.constant 0 : index
    %80 = vector.load %arg22[%c0_68, %c0_69] : memref<1x128xf32, #tpu.memory_space<vmem>>, vector<1x128xf32>
    %81 = vector.broadcast %80 : vector<1x128xf32> to vector<32x128xf32>
    %82 = arith.addf %79, %81 : vector<32x128xf32>
    %cst_70 = arith.constant 0.000000e+00 : f32
    %83 = vector.broadcast %cst_70 : f32 to vector<32x128xf32>
    %84 = arith.maximumf %82, %83 : vector<32x128xf32>
    %85 = arith.truncf %84 : vector<32x128xf32> to vector<32x128xbf16>
    %c0_71 = arith.constant 0 : index
    %c0_72 = arith.constant 0 : index
    %86 = vector.load %arg23[%c0_71, %c0_72] : memref<128x1024xbf16, #tpu.memory_space<vmem>>, vector<128x1024xbf16>
    %cst_73 = arith.constant dense<0.000000e+00> : vector<32x1024xf32>
    %87 = tpu.matmul %85, %86, %cst_73 {dimension_numbers = #tpu.dot_dimension_numbers<[1], [0], [0], [1], [0, 0, 1, 1], [], []>} : vector<32x128xbf16>, vector<128x1024xbf16>, vector<32x1024xf32> -> vector<32x1024xf32>
    %c0_74 = arith.constant 0 : index
    %c0_75 = arith.constant 0 : index
    %88 = vector.load %arg24[%c0_74, %c0_75] : memref<1x1024xf32, #tpu.memory_space<vmem>>, vector<1x1024xf32>
    %89 = vector.broadcast %88 : vector<1x1024xf32> to vector<32x1024xf32>
    %90 = arith.addf %87, %89 : vector<32x1024xf32>
    %91 = arith.negf %90 : vector<32x1024xf32>
    %92 = math.exp %91 : vector<32x1024xf32>
    %cst_76 = arith.constant 1.000000e+00 : f32
    %93 = vector.broadcast %cst_76 : f32 to vector<32x1024xf32>
    %94 = arith.addf %93, %92 : vector<32x1024xf32>
    %95 = arith.divf %93, %94 : vector<32x1024xf32>
    %96 = arith.truncf %95 : vector<32x1024xf32> to vector<32x1024xbf16>
    %c0_77 = arith.constant 0 : index
    %c0_78 = arith.constant 0 : index
    %97 = vector.load %arg26[%c0_77, %c0_78] : memref<32x1024xbf16, #tpu.memory_space<vmem>>, vector<32x1024xbf16>
    tpu.vector_store %arg26[%c0_77, %c0_78], %96 {strides = array<i32>} : memref<32x1024xbf16, #tpu.memory_space<vmem>>, vector<32x1024xbf16>,
    return
  }
  func.func @transform_0(%arg0: i32) -> (i32, i32) {
    %c0_i32 = arith.constant 0 : i32
    %c0_i32_0 = arith.constant 0 : i32
    return %arg0, %c0_i32 : i32, i32
  }
  func.func @transform_1(%arg0: i32) -> (i32, i32) {
    %c0_i32 = arith.constant 0 : i32
    %c0_i32_0 = arith.constant 0 : i32
    return %arg0, %c0_i32 : i32, i32
  }
  func.func @transform_2(%arg0: i32) -> (i32, i32) {
    %c0_i32 = arith.constant 0 : i32
    %c0_i32_0 = arith.constant 0 : i32
    return %arg0, %c0_i32 : i32, i32
  }
  func.func @transform_3(%arg0: i32) -> (i32, i32) {
    %c0_i32 = arith.constant 0 : i32
    %c0_i32_0 = arith.constant 0 : i32
    return %arg0, %c0_i32 : i32, i32
  }
  func.func @transform_4(%arg0: i32) -> (i32, i32) {
    %c0_i32 = arith.constant 0 : i32
    %c0_i32_0 = arith.constant 0 : i32
    %c0_i32_1 = arith.constant 0 : i32
    return %c0_i32, %c0_i32_0 : i32, i32
  }
  func.func @transform_5(%arg0: i32) -> (i32, i32) {
    %c0_i32 = arith.constant 0 : i32
    %c0_i32_0 = arith.constant 0 : i32
    %c0_i32_1 = arith.constant 0 : i32
    return %c0_i32, %c0_i32_0 : i32, i32
  }
  func.func @transform_6(%arg0: i32) -> (i32, i32) {
    %c0_i32 = arith.constant 0 : i32
    %c0_i32_0 = arith.constant 0 : i32
    %c0_i32_1 = arith.constant 0 : i32
    return %c0_i32, %c0_i32_0 : i32, i32
  }
  func.func @transform_7(%arg0: i32) -> (i32, i32) {
    %c0_i32 = arith.constant 0 : i32
    %c0_i32_0 = arith.constant 0 : i32
    %c0_i32_1 = arith.constant 0 : i32
    return %c0_i32, %c0_i32_0 : i32, i32
  }
  func.func @transform_8(%arg0: i32) -> (i32, i32) {
    %c0_i32 = arith.constant 0 : i32
    %c0_i32_0 = arith.constant 0 : i32
    %c0_i32_1 = arith.constant 0 : i32
    return %c0_i32, %c0_i32_0 : i32, i32
  }
  func.func @transform_9(%arg0: i32) -> (i32, i32) {
    %c0_i32 = arith.constant 0 : i32
    %c0_i32_0 = arith.constant 0 : i32
    %c0_i32_1 = arith.constant 0 : i32
    return %c0_i32, %c0_i32_0 : i32, i32
  }
  func.func @transform_10(%arg0: i32) -> (i32, i32) {
    %c0_i32 = arith.constant 0 : i32
    %c0_i32_0 = arith.constant 0 : i32
    %c0_i32_1 = arith.constant 0 : i32
    return %c0_i32, %c0_i32_0 : i32, i32
  }
  func.func @transform_11(%arg0: i32) -> (i32, i32) {
    %c0_i32 = arith.constant 0 : i32
    %c0_i32_0 = arith.constant 0 : i32
    %c0_i32_1 = arith.constant 0 : i32
    return %c0_i32, %c0_i32_0 : i32, i32
  }
  func.func @transform_12(%arg0: i32) -> (i32, i32) {
    %c0_i32 = arith.constant 0 : i32
    %c0_i32_0 = arith.constant 0 : i32
    %c0_i32_1 = arith.constant 0 : i32
    return %c0_i32, %c0_i32_0 : i32, i32
  }
  func.func @transform_13(%arg0: i32) -> (i32, i32) {
    %c0_i32 = arith.constant 0 : i32
    %c0_i32_0 = arith.constant 0 : i32
    %c0_i32_1 = arith.constant 0 : i32
    return %c0_i32, %c0_i32_0 : i32, i32
  }
  func.func @transform_14(%arg0: i32) -> (i32, i32) {
    %c0_i32 = arith.constant 0 : i32
    %c0_i32_0 = arith.constant 0 : i32
    %c0_i32_1 = arith.constant 0 : i32
    return %c0_i32, %c0_i32_0 : i32, i32
  }
  func.func @transform_15(%arg0: i32) -> (i32, i32) {
    %c0_i32 = arith.constant 0 : i32
    %c0_i32_0 = arith.constant 0 : i32
    %c0_i32_1 = arith.constant 0 : i32
    return %c0_i32, %c0_i32_0 : i32, i32
  }
  func.func @transform_16(%arg0: i32) -> (i32, i32) {
    %c0_i32 = arith.constant 0 : i32
    %c0_i32_0 = arith.constant 0 : i32
    %c0_i32_1 = arith.constant 0 : i32
    return %c0_i32, %c0_i32_0 : i32, i32
  }
  func.func @transform_17(%arg0: i32) -> (i32, i32) {
    %c0_i32 = arith.constant 0 : i32
    %c0_i32_0 = arith.constant 0 : i32
    %c0_i32_1 = arith.constant 0 : i32
    return %c0_i32, %c0_i32_0 : i32, i32
  }
  func.func @transform_18(%arg0: i32) -> (i32, i32) {
    %c0_i32 = arith.constant 0 : i32
    %c0_i32_0 = arith.constant 0 : i32
    %c0_i32_1 = arith.constant 0 : i32
    return %c0_i32, %c0_i32_0 : i32, i32
  }
  func.func @transform_19(%arg0: i32) -> (i32, i32) {
    %c0_i32 = arith.constant 0 : i32
    %c0_i32_0 = arith.constant 0 : i32
    %c0_i32_1 = arith.constant 0 : i32
    return %c0_i32, %c0_i32_0 : i32, i32
  }
  func.func @transform_20(%arg0: i32) -> (i32, i32) {
    %c0_i32 = arith.constant 0 : i32
    %c0_i32_0 = arith.constant 0 : i32
    %c0_i32_1 = arith.constant 0 : i32
    return %c0_i32, %c0_i32_0 : i32, i32
  }
  func.func @transform_21(%arg0: i32) -> (i32, i32) {
    %c0_i32 = arith.constant 0 : i32
    %c0_i32_0 = arith.constant 0 : i32
    %c0_i32_1 = arith.constant 0 : i32
    return %c0_i32, %c0_i32_0 : i32, i32
  }
  func.func @transform_22(%arg0: i32) -> (i32, i32) {
    %c0_i32 = arith.constant 0 : i32
    %c0_i32_0 = arith.constant 0 : i32
    %c0_i32_1 = arith.constant 0 : i32
    return %c0_i32, %c0_i32_0 : i32, i32
  }
  func.func @transform_23(%arg0: i32) -> (i32, i32) {
    %c0_i32 = arith.constant 0 : i32
    %c0_i32_0 = arith.constant 0 : i32
    %c0_i32_1 = arith.constant 0 : i32
    return %c0_i32, %c0_i32_0 : i32, i32
  }
  func.func @transform_24(%arg0: i32) -> (i32, i32) {
    %c0_i32 = arith.constant 0 : i32
    %c0_i32_0 = arith.constant 0 : i32
    return %arg0, %c0_i32 : i32, i32
  }
  func.func @transform_25(%arg0: i32) -> (i32, i32) {
    %c0_i32 = arith.constant 0 : i32
    %c0_i32_0 = arith.constant 0 : i32
    return %arg0, %c0_i32 : i32, i32
  }
  func.func @transform_26(%arg0: i32) -> (i32, i32) {
    %c0_i32 = arith.constant 0 : i32
    %c0_i32_0 = arith.constant 0 : i32
    return %arg0, %c0_i32 : i32, i32
  }
  func.func @transform_27(%arg0: i32) -> (i32, i32) {
    %c0_i32 = arith.constant 0 : i32
    %c0_i32_0 = arith.constant 0 : i32
    return %arg0, %c0_i32 : i32, i32
  }
}

</mosaic_0001>

<llo_original>
// kernel: _pair_vae_forward.3
$region0: #{_pair_vae_forward.3}
  #allocation0 [shape = 'u32[]', space=smem, size = 0x4, offset = 0x4, fixed_abs, tag = 'smem constant byte address 0x4 - core index']
  #allocation1 [shape = 'u32[144,128]{1,0:T(1,128)}', space=vmem, size = 0x12000, scoped, tag = 'internal scratch']
  #allocation2 [shape = 'f32[32,32]{1,0:T(8,128)}', space=vmem, size = 0x4000, scoped, tag = 'scratch operand']
  %s0 = inlined_call_operand.vmem [shape: bf16[16,1024], index: 0, kind: input, shape index: {}]
  %s1 = inlined_call_operand.vmem [shape: bf16[16,1024], index: 1, kind: input, shape index: {}]
  %s2 = inlined_call_operand.vmem [shape: f32[16,32], index: 2, kind: input, shape index: {}]
  %s3 = inlined_call_operand.vmem [shape: f32[16,32], index: 3, kind: input, shape index: {}]
  %s4 = inlined_call_operand.vmem [shape: bf16[1024,128], index: 4, kind: input, shape index: {}]
  %s5 = inlined_call_operand.vmem [shape: f32[1,128], index: 5, kind: input, shape index: {}]
  %s6 = inlined_call_operand.vmem [shape: bf16[128,32], index: 6, kind: input, shape index: {}]
  %s7 = inlined_call_operand.hbm [shape: f32[1,32], index: 7, kind: input, shape index: {}]
  %s8 = inlined_call_operand.vmem [shape: bf16[128,32], index: 8, kind: input, shape index: {}]
  %s9 = inlined_call_operand.hbm [shape: f32[1,32], index: 9, kind: input, shape index: {}]
  %s10 = inlined_call_operand.vmem [shape: bf16[32,128], index: 10, kind: input, shape index: {}]
  %s11 = inlined_call_operand.hbm [shape: f32[1,128], index: 11, kind: input, shape index: {}]
  %s12 = inlined_call_operand.vmem [shape: bf16[128,1024], index: 12, kind: input, shape index: {}]
  %s13 = inlined_call_operand.hbm [shape: f32[1,1024], index: 13, kind: input, shape index: {}]
  %s14 = inlined_call_operand.hbm [shape: bf16[1024,128], index: 14, kind: input, shape index: {}]
  %s15 = inlined_call_operand.hbm [shape: f32[1,128], index: 15, kind: input, shape index: {}]
  %s16 = inlined_call_operand.vmem [shape: bf16[128,32], index: 16, kind: input, shape index: {}]
  %s17 = inlined_call_operand.hbm [shape: f32[1,32], index: 17, kind: input, shape index: {}]
  %s18 = inlined_call_operand.vmem [shape: bf16[128,32], index: 18, kind: input, shape index: {}]
  %s19 = inlined_call_operand.vmem [shape: f32[1,32], index: 19, kind: input, shape index: {}]
  %s20 = inlined_call_operand.vmem [shape: bf16[32,128], index: 20, kind: input, shape index: {}]
  %s21 = inlined_call_operand.vmem [shape: f32[1,128], index: 21, kind: input, shape index: {}]
  %s22 = inlined_call_operand.hbm [shape: bf16[128,1024], index: 22, kind: input, shape index: {}]
  %s23 = inlined_call_operand.vmem [shape: f32[1,1024], index: 23, kind: input, shape index: {}]
  %s24 = inlined_call_operand.vmem [shape: bf16[32,1024], index: 24, kind: output, shape index: {0}]
  %s25 = inlined_call_operand.vmem [shape: bf16[32,1024], index: 25, kind: output, shape index: {1}]
  %s26 = inlined_call_operand.vmem [shape: f32[16,32], index: 26, kind: output, shape index: {2}]
  %s27 = inlined_call_operand.vmem [shape: f32[16,32], index: 27, kind: output, shape index: {3}]
  %28 = xla_tuple %s24, %s25, %s26, %s27
  %s29 = sld [smem:[#allocation0]]
  $region162: #{_pair_vae_forward.3} parent=0
    _
  %s31 = ssub.s32 1, %s29
  %s32 = scalar_select 0, %s31, %s29
  $region1: #{_pair_vae_forward.3} parent=0
    #allocation3 [shape = 'u8[512]{0}', space=vmem, size = 0x400, scoped, tag = 'input window, operand 7, single buffered']
    #allocation4 [shape = 's32[1]{0}', space=sflag, size = 0x4, scoped, tag = 'scoped memory for _pair_vae_forward.3']
    #allocation5 [shape = 'u8[512]{0}', space=vmem, size = 0x400, scoped, tag = 'input window, operand 9, single buffered']
    #allocation6 [shape = 's32[1]{0}', space=sflag, size = 0x4, scoped, tag = 'scoped memory for _pair_vae_forward.3']
    #allocation7 [shape = 'u8[512]{0}', space=vmem, size = 0x400, scoped, tag = 'input window, operand 11, single buffered']
    #allocation8 [shape = 'u8[4096]{0}', space=vmem, size = 0x1000, scoped, tag = 'input window, operand 13, single buffered']
    #allocation9 [shape = 's32[1]{0}', space=sflag, size = 0x4, scoped, tag = 'scoped memory for _pair_vae_forward.3']
    #allocation10 [shape = 'u8[262144]{0}', space=vmem, size = 0x40000, scoped, tag = 'input window, operand 14, single buffered']
    #allocation11 [shape = 'u8[512]{0}', space=vmem, size = 0x400, scoped, tag = 'input window, operand 15, single buffered']
    #allocation12 [shape = 's32[1]{0}', space=sflag, size = 0x4, scoped, tag = 'scoped memory for _pair_vae_forward.3']
    #allocation13 [shape = 'u8[512]{0}', space=vmem, size = 0x400, scoped, tag = 'input window, operand 17, single buffered']
    #allocation14 [shape = 'u8[262144]{0}', space=vmem, size = 0x40000, scoped, tag = 'input window, operand 22, single buffered']
    #allocation15 [shape = 's32[1]{0}', space=sflag, size = 0x4, scoped, tag = 'scoped memory for _pair_vae_forward.3']
    %33 = vsyncpa [#allocation4], 0
    %34 = vsyncpa [#allocation6], 0
    %35 = vsyncpa [#allocation9], 0
    %36 = vsyncpa [#allocation12], 0
    %37 = vsyncpa [#allocation15], 0
    // Predicated region
    $region2: #{_pair_vae_forward.3} parent=1 // pred_check
      _
    $region3: #{_pair_vae_forward.3} parent=1 // pred_check_branch
      %39 = sbr.rel (0) target = $region5
    $region4: #{_pair_vae_forward.3} parent=1 // pred_region
      _
    $region5: #{_pair_vae_forward.3} parent=1 // pred_fallthru
      _
    // Predicated region
    $region6: #{_pair_vae_forward.3} parent=1 // pred_check
      _
    $region7: #{_pair_vae_forward.3} parent=1 // pred_check_branch
      %41 = sbr.rel (0) target = $region9
    $region8: #{_pair_vae_forward.3} parent=1 // pred_region
      _
    $region9: #{_pair_vae_forward.3} parent=1 // pred_fallthru
      _
    // Predicated region
    $region10: #{_pair_vae_forward.3} parent=1 // pred_check
      _
    $region11: #{_pair_vae_forward.3} parent=1 // pred_check_branch
      %43 = sbr.rel (0) target = $region13
    $region12: #{_pair_vae_forward.3} parent=1 // pred_region
      _
    $region13: #{_pair_vae_forward.3} parent=1 // pred_fallthru
      _
    // Predicated region
    $region14: #{_pair_vae_forward.3} parent=1 // pred_check
      _
    $region15: #{_pair_vae_forward.3} parent=1 // pred_check_branch
      %45 = sbr.rel (0) target = $region17
    $region16: #{_pair_vae_forward.3} parent=1 // pred_region
      _
    $region17: #{_pair_vae_forward.3} parent=1 // pred_fallthru
      _
    // Predicated region
    $region18: #{_pair_vae_forward.3} parent=1 // pred_check
      _
    $region19: #{_pair_vae_forward.3} parent=1 // pred_check_branch
      %47 = sbr.rel (0) target = $region21
    $region20: #{_pair_vae_forward.3} parent=1 // pred_region
      _
    $region21: #{_pair_vae_forward.3} parent=1 // pred_fallthru
      _
    // Predicated region
    $region22: #{_pair_vae_forward.3} parent=1 // pred_check
      _
    $region23: #{_pair_vae_forward.3} parent=1 // pred_check_branch
      %49 = sbr.rel (0) target = $region25
    $region24: #{_pair_vae_forward.3} parent=1 // pred_region
      _
    $region25: #{_pair_vae_forward.3} parent=1 // pred_fallthru
      _
    // Predicated region
    $region26: #{_pair_vae_forward.3} parent=1 // pred_check
      _
    $region27: #{_pair_vae_forward.3} parent=1 // pred_check_branch
      %51 = sbr.rel (0) target = $region29
    $region28: #{_pair_vae_forward.3} parent=1 // pred_region
      _
    $region29: #{_pair_vae_forward.3} parent=1 // pred_fallthru
      _
    // Predicated region
    $region30: #{_pair_vae_forward.3} parent=1 // pred_check
      _
    $region31: #{_pair_vae_forward.3} parent=1 // pred_check_branch
      %53 = sbr.rel (0) target = $region33
    $region32: #{_pair_vae_forward.3} parent=1 // pred_region
      %s55 = ssub.s32 16, 16
      %56 = vsyncadd [#allocation4], %s55
      %s58 = sshll.u32 [#allocation3], 4
      %s59 = int_to_ptr.vmem [resolvable:$true] %s58
      %61 = dma.hbm_to_vmem [thread:$0]  %s7, 16, %s59, [#allocation4]
    $region33: #{_pair_vae_forward.3} parent=1 // pred_fallthru
      _
    // Predicated region
    $region34: #{_pair_vae_forward.3} parent=1 // pred_check
      _
    $region35: #{_pair_vae_forward.3} parent=1 // pred_check_branch
      %63 = sbr.rel (0) target = $region37
    $region36: #{_pair_vae_forward.3} parent=1 // pred_region
      _
    $region37: #{_pair_vae_forward.3} parent=1 // pred_fallthru
      _
    // Predicated region
    $region38: #{_pair_vae_forward.3} parent=1 // pred_check
      _
    $region39: #{_pair_vae_forward.3} parent=1 // pred_check_branch
      %65 = sbr.rel (0) target = $region41
    $region40: #{_pair_vae_forward.3} parent=1 // pred_region
      %s67 = ssub.s32 16, 16
      %68 = vsyncadd [#allocation6], %s67
      %s70 = sshll.u32 [#allocation5], 4
      %s71 = int_to_ptr.vmem [resolvable:$true] %s70
      %73 = dma.hbm_to_vmem [thread:$0]  %s9, 16, %s71, [#allocation6]
    $region41: #{_pair_vae_forward.3} parent=1 // pred_fallthru
      _
    // Predicated region
    $region42: #{_pair_vae_forward.3} parent=1 // pred_check
      _
    $region43: #{_pair_vae_forward.3} parent=1 // pred_check_branch
      %75 = sbr.rel (0) target = $region45
    $region44: #{_pair_vae_forward.3} parent=1 // pred_region
      _
    $region45: #{_pair_vae_forward.3} parent=1 // pred_fallthru
      _
    // Predicated region
    $region46: #{_pair_vae_forward.3} parent=1 // pred_check
      _
    $region47: #{_pair_vae_forward.3} parent=1 // pred_check_branch
      %77 = sbr.rel (0) target = $region49
    $region48: #{_pair_vae_forward.3} parent=1 // pred_region
      %s79 = ssub.s32 16, 16
      %80 = vsyncadd [#allocation6], %s79
      %s82 = sshll.u32 [#allocation7], 4
      %s83 = int_to_ptr.vmem [resolvable:$true] %s82
      %85 = dma.hbm_to_vmem [thread:$0]  %s11, 16, %s83, [#allocation6]
    $region49: #{_pair_vae_forward.3} parent=1 // pred_fallthru
      _
    // Predicated region
    $region50: #{_pair_vae_forward.3} parent=1 // pred_check
      _
    $region51: #{_pair_vae_forward.3} parent=1 // pred_check_branch
      %87 = sbr.rel (0) target = $region53
    $region52: #{_pair_vae_forward.3} parent=1 // pred_region
      _
    $region53: #{_pair_vae_forward.3} parent=1 // pred_fallthru
      _
    // Predicated region
    $region54: #{_pair_vae_forward.3} parent=1 // pred_check
      _
    $region55: #{_pair_vae_forward.3} parent=1 // pred_check_branch
      %89 = sbr.rel (0) target = $region57
    $region56: #{_pair_vae_forward.3} parent=1 // pred_region
      %s91 = ssub.s32 128, 128
      %92 = vsyncadd [#allocation9], %s91
      %s94 = sshll.u32 [#allocation8], 4
      %s95 = int_to_ptr.vmem [resolvable:$true] %s94
      %97 = dma.hbm_to_vmem [thread:$0]  %s13, 128, %s95, [#allocation9]
    $region57: #{_pair_vae_forward.3} parent=1 // pred_fallthru
      _
    // Predicated region
    $region58: #{_pair_vae_forward.3} parent=1 // pred_check
      _
    $region59: #{_pair_vae_forward.3} parent=1 // pred_check_branch
      %99 = sbr.rel (0) target = $region61
    $region60: #{_pair_vae_forward.3} parent=1 // pred_region
      %s101 = ssub.s32 8192, 8192
      %102 = vsyncadd [#allocation9], %s101
      %s103 = sshll.u32 [#allocation10], 4
      %s104 = int_to_ptr.vmem [resolvable:$true] %s103
      %109 = dma.hbm_to_vmem [thread:$0]  %s14, 8192, %s104, [#allocation9], 64, 64, 4
    $region61: #{_pair_vae_forward.3} parent=1 // pred_fallthru
      _
    // Predicated region
    $region62: #{_pair_vae_forward.3} parent=1 // pred_check
      _
    $region63: #{_pair_vae_forward.3} parent=1 // pred_check_branch
      %111 = sbr.rel (0) target = $region65
    $region64: #{_pair_vae_forward.3} parent=1 // pred_region
      %s113 = ssub.s32 16, 16
      %114 = vsyncadd [#allocation12], %s113
      %s116 = sshll.u32 [#allocation11], 4
      %s117 = int_to_ptr.vmem [resolvable:$true] %s116
      %119 = dma.hbm_to_vmem [thread:$0]  %s15, 16, %s117, [#allocation12]
    $region65: #{_pair_vae_forward.3} parent=1 // pred_fallthru
      _
    // Predicated region
    $region66: #{_pair_vae_forward.3} parent=1 // pred_check
      _
    $region67: #{_pair_vae_forward.3} parent=1 // pred_check_branch
      %121 = sbr.rel (0) target = $region69
    $region68: #{_pair_vae_forward.3} parent=1 // pred_region
      _
    $region69: #{_pair_vae_forward.3} parent=1 // pred_fallthru
      _
    // Predicated region
    $region70: #{_pair_vae_forward.3} parent=1 // pred_check
      _
    $region71: #{_pair_vae_forward.3} parent=1 // pred_check_branch
      %123 = sbr.rel (0) target = $region73
    $region72: #{_pair_vae_forward.3} parent=1 // pred_region
      %s125 = ssub.s32 16, 16
      %126 = vsyncadd [#allocation12], %s125
      %s128 = sshll.u32 [#allocation13], 4
      %s129 = int_to_ptr.vmem [resolvable:$true] %s128
      %131 = dma.hbm_to_vmem [thread:$0]  %s17, 16, %s129, [#allocation12]
    $region73: #{_pair_vae_forward.3} parent=1 // pred_fallthru
      _
    // Predicated region
    $region74: #{_pair_vae_forward.3} parent=1 // pred_check
      _
    $region75: #{_pair_vae_forward.3} parent=1 // pred_check_branch
      %133 = sbr.rel (0) target = $region77
    $region76: #{_pair_vae_forward.3} parent=1 // pred_region
      _
    $region77: #{_pair_vae_forward.3} parent=1 // pred_fallthru
      _
    // Predicated region
    $region78: #{_pair_vae_forward.3} parent=1 // pred_check
      _
    $region79: #{_pair_vae_forward.3} parent=1 // pred_check_branch
      %135 = sbr.rel (0) target = $region81
    $region80: #{_pair_vae_forward.3} parent=1 // pred_region
      _
    $region81: #{_pair_vae_forward.3} parent=1 // pred_fallthru
      _
    // Predicated region
    $region82: #{_pair_vae_forward.3} parent=1 // pred_check
      _
    $region83: #{_pair_vae_forward.3} parent=1 // pred_check_branch
      %137 = sbr.rel (0) target = $region85
    $region84: #{_pair_vae_forward.3} parent=1 // pred_region
      _
    $region85: #{_pair_vae_forward.3} parent=1 // pred_fallthru
      _
    // Predicated region
    $region86: #{_pair_vae_forward.3} parent=1 // pred_check
      _
    $region87: #{_pair_vae_forward.3} parent=1 // pred_check_branch
      %139 = sbr.rel (0) target = $region89
    $region88: #{_pair_vae_forward.3} parent=1 // pred_region
      _
    $region89: #{_pair_vae_forward.3} parent=1 // pred_fallthru
      _
    // Predicated region
    $region90: #{_pair_vae_forward.3} parent=1 // pred_check
      _
    $region91: #{_pair_vae_forward.3} parent=1 // pred_check_branch
      %141 = sbr.rel (0) target = $region93
    $region92: #{_pair_vae_forward.3} parent=1 // pred_region
      %s143 = ssub.s32 8192, 8192
      %144 = vsyncadd [#allocation15], %s143
      %s145 = sshll.u32 [#allocation14], 4
      %s146 = int_to_ptr.vmem [resolvable:$true] %s145
      %151 = dma.hbm_to_vmem [thread:$0]  %s22, 8192, %s146, [#allocation15], 512, 512, 32
    $region93: #{_pair_vae_forward.3} parent=1 // pred_fallthru
      _
    // Predicated region
    $region94: #{_pair_vae_forward.3} parent=1 // pred_check
      _
    $region95: #{_pair_vae_forward.3} parent=1 // pred_check_branch
      %153 = sbr.rel (0) target = $region97
    $region96: #{_pair_vae_forward.3} parent=1 // pred_region
      _
    $region97: #{_pair_vae_forward.3} parent=1 // pred_fallthru
      _
    // Predicated region
    $region98: #{_pair_vae_forward.3} parent=1 // pred_check
      _
    $region99: #{_pair_vae_forward.3} parent=1 // pred_check_branch
      %155 = sbr.rel (0) target = $region101
    $region100: #{_pair_vae_forward.3} parent=1 // pred_region
      %156 = dma.done [#allocation4], 16
    $region101: #{_pair_vae_forward.3} parent=1 // pred_fallthru
      _
    // Predicated region
    $region102: #{_pair_vae_forward.3} parent=1 // pred_check
      _
    $region103: #{_pair_vae_forward.3} parent=1 // pred_check_branch
      %158 = sbr.rel (0) target = $region105
    $region104: #{_pair_vae_forward.3} parent=1 // pred_region
      %159 = dma.done [#allocation6], 16
    $region105: #{_pair_vae_forward.3} parent=1 // pred_fallthru
      _
    // Predicated region
    $region106: #{_pair_vae_forward.3} parent=1 // pred_check
      _
    $region107: #{_pair_vae_forward.3} parent=1 // pred_check_branch
      %161 = sbr.rel (0) target = $region109
    $region108: #{_pair_vae_forward.3} parent=1 // pred_region
      %162 = dma.done [#allocation6], 16
    $region109: #{_pair_vae_forward.3} parent=1 // pred_fallthru
      _
    // Predicated region
    $region110: #{_pair_vae_forward.3} parent=1 // pred_check
      _
    $region111: #{_pair_vae_forward.3} parent=1 // pred_check_branch
      %164 = sbr.rel (0) target = $region113
    $region112: #{_pair_vae_forward.3} parent=1 // pred_region
      %165 = dma.done [#allocation9], 128
    $region113: #{_pair_vae_forward.3} parent=1 // pred_fallthru
      _
    // Predicated region
    $region114: #{_pair_vae_forward.3} parent=1 // pred_check
      _
    $region115: #{_pair_vae_forward.3} parent=1 // pred_check_branch
      %167 = sbr.rel (0) target = $region117
    $region116: #{_pair_vae_forward.3} parent=1 // pred_region
      %168 = dma.done [#allocation9], 8192
    $region117: #{_pair_vae_forward.3} parent=1 // pred_fallthru
      _
    // Predicated region
    $region118: #{_pair_vae_forward.3} parent=1 // pred_check
      _
    $region119: #{_pair_vae_forward.3} parent=1 // pred_check_branch
      %170 = sbr.rel (0) target = $region121
    $region120: #{_pair_vae_forward.3} parent=1 // pred_region
      %171 = dma.done [#allocation12], 16
    $region121: #{_pair_vae_forward.3} parent=1 // pred_fallthru
      _
    // Predicated region
    $region122: #{_pair_vae_forward.3} parent=1 // pred_check
      _
    $region123: #{_pair_vae_forward.3} parent=1 // pred_check_branch
      %173 = sbr.rel (0) target = $region125
    $region124: #{_pair_vae_forward.3} parent=1 // pred_region
      %174 = dma.done [#allocation12], 16
    $region125: #{_pair_vae_forward.3} parent=1 // pred_fallthru
      _
    // Predicated region
    $region126: #{_pair_vae_forward.3} parent=1 // pred_check
      _
    $region127: #{_pair_vae_forward.3} parent=1 // pred_check_branch
      %176 = sbr.rel (0) target = $region129
    $region128: #{_pair_vae_forward.3} parent=1 // pred_region
      %177 = dma.done [#allocation15], 8192
    $region129: #{_pair_vae_forward.3} parent=1 // pred_fallthru
      _
    %v179 = vld [vmem:[%s0] sm:$0xff]
    %v180 = vld [vmem:[%s0 + $0x8] sm:$0xff]
    %v181 = vld [vmem:[%s0 + $0x10] sm:$0xff]
    %v182 = vld [vmem:[%s0 + $0x18] sm:$0xff]
    %v183 = vld [vmem:[%s0 + $0x20] sm:$0xff]
    %v184 = vld [vmem:[%s0 + $0x28] sm:$0xff]
    %v185 = vld [vmem:[%s0 + $0x30] sm:$0xff]
    %v186 = vld [vmem:[%s0 + $0x38] sm:$0xff]
    %v187 = vld [vmem:[%s4] sm:$0xf]
    %v188 = vld [vmem:[%s4 + $0x4] sm:$0xf]
    %v189 = vld [vmem:[%s4 + $0x8] sm:$0xf]
    %v190 = vld [vmem:[%s4 + $0xc] sm:$0xf]
    %v191 = vld [vmem:[%s4 + $0x10] sm:$0xf]
    %v192 = vld [vmem:[%s4 + $0x14] sm:$0xf]
    %v193 = vld [vmem:[%s4 + $0x18] sm:$0xf]
    %v194 = vld [vmem:[%s4 + $0x1c] sm:$0xf]
    %v195 = vld [vmem:[%s4 + $0x20] sm:$0xf]
    %v196 = vld [vmem:[%s4 + $0x24] sm:$0xf]
    %v197 = vld [vmem:[%s4 + $0x28] sm:$0xf]
    %v198 = vld [vmem:[%s4 + $0x2c] sm:$0xf]
    %v199 = vld [vmem:[%s4 + $0x30] sm:$0xf]
    %v200 = vld [vmem:[%s4 + $0x34] sm:$0xf]
    %v201 = vld [vmem:[%s4 + $0x38] sm:$0xf]
    %v202 = vld [vmem:[%s4 + $0x3c] sm:$0xf]
    %v203 = vld [vmem:[%s4 + $0x40] sm:$0xf]
    %v204 = vld [vmem:[%s4 + $0x44] sm:$0xf]
    %v205 = vld [vmem:[%s4 + $0x48] sm:$0xf]
    %v206 = vld [vmem:[%s4 + $0x4c] sm:$0xf]
    %v207 = vld [vmem:[%s4 + $0x50] sm:$0xf]
    %v208 = vld [vmem:[%s4 + $0x54] sm:$0xf]
    %v209 = vld [vmem:[%s4 + $0x58] sm:$0xf]
    %v210 = vld [vmem:[%s4 + $0x5c] sm:$0xf]
    %v211 = vld [vmem:[%s4 + $0x60] sm:$0xf]
    %v212 = vld [vmem:[%s4 + $0x64] sm:$0xf]
    %v213 = vld [vmem:[%s4 + $0x68] sm:$0xf]
    %v214 = vld [vmem:[%s4 + $0x6c] sm:$0xf]
    %v215 = vld [vmem:[%s4 + $0x70] sm:$0xf]
    %v216 = vld [vmem:[%s4 + $0x74] sm:$0xf]
    %v217 = vld [vmem:[%s4 + $0x78] sm:$0xf]
    %v218 = vld [vmem:[%s4 + $0x7c] sm:$0xf]
    %v219 = vld [vmem:[%s4 + $0x80] sm:$0xf]
    %v220 = vld [vmem:[%s4 + $0x84] sm:$0xf]
    %v221 = vld [vmem:[%s4 + $0x88] sm:$0xf]
    %v222 = vld [vmem:[%s4 + $0x8c] sm:$0xf]
    %v223 = vld [vmem:[%s4 + $0x90] sm:$0xf]
    %v224 = vld [vmem:[%s4 + $0x94] sm:$0xf]
    %v225 = vld [vmem:[%s4 + $0x98] sm:$0xf]
    %v226 = vld [vmem:[%s4 + $0x9c] sm:$0xf]
    %v227 = vld [vmem:[%s4 + $0xa0] sm:$0xf]
    %v228 = vld [vmem:[%s4 + $0xa4] sm:$0xf]
    %v229 = vld [vmem:[%s4 + $0xa8] sm:$0xf]
    %v230 = vld [vmem:[%s4 + $0xac] sm:$0xf]
    %v231 = vld [vmem:[%s4 + $0xb0] sm:$0xf]
    %v232 = vld [vmem:[%s4 + $0xb4] sm:$0xf]
    %v233 = vld [vmem:[%s4 + $0xb8] sm:$0xf]
    %v234 = vld [vmem:[%s4 + $0xbc] sm:$0xf]
    %v235 = vld [vmem:[%s4 + $0xc0] sm:$0xf]
    %v236 = vld [vmem:[%s4 + $0xc4] sm:$0xf]
    %v237 = vld [vmem:[%s4 + $0xc8] sm:$0xf]
    %v238 = vld [vmem:[%s4 + $0xcc] sm:$0xf]
    %v239 = vld [vmem:[%s4 + $0xd0] sm:$0xf]
    %v240 = vld [vmem:[%s4 + $0xd4] sm:$0xf]
    %v241 = vld [vmem:[%s4 + $0xd8] sm:$0xf]
    %v242 = vld [vmem:[%s4 + $0xdc] sm:$0xf]
    %v243 = vld [vmem:[%s4 + $0xe0] sm:$0xf]
    %v244 = vld [vmem:[%s4 + $0xe4] sm:$0xf]
    %v245 = vld [vmem:[%s4 + $0xe8] sm:$0xf]
    %v246 = vld [vmem:[%s4 + $0xec] sm:$0xf]
    %v247 = vld [vmem:[%s4 + $0xf0] sm:$0xf]
    %v248 = vld [vmem:[%s4 + $0xf4] sm:$0xf]
    %v249 = vld [vmem:[%s4 + $0xf8] sm:$0xf]
    %v250 = vld [vmem:[%s4 + $0xfc] sm:$0xf]
    %v251 = vld [vmem:[%s4 + $0x100] sm:$0xf]
    %v252 = vld [vmem:[%s4 + $0x104] sm:$0xf]
    %v253 = vld [vmem:[%s4 + $0x108] sm:$0xf]
    %v254 = vld [vmem:[%s4 + $0x10c] sm:$0xf]
    %v255 = vld [vmem:[%s4 + $0x110] sm:$0xf]
    %v256 = vld [vmem:[%s4 + $0x114] sm:$0xf]
    %v257 = vld [vmem:[%s4 + $0x118] sm:$0xf]
    %v258 = vld [vmem:[%s4 + $0x11c] sm:$0xf]
    %v259 = vld [vmem:[%s4 + $0x120] sm:$0xf]
    %v260 = vld [vmem:[%s4 + $0x124] sm:$0xf]
    %v261 = vld [vmem:[%s4 + $0x128] sm:$0xf]
    %v262 = vld [vmem:[%s4 + $0x12c] sm:$0xf]
    %v263 = vld [vmem:[%s4 + $0x130] sm:$0xf]
    %v264 = vld [vmem:[%s4 + $0x134] sm:$0xf]
    %v265 = vld [vmem:[%s4 + $0x138] sm:$0xf]
    %v266 = vld [vmem:[%s4 + $0x13c] sm:$0xf]
    %v267 = vld [vmem:[%s4 + $0x140] sm:$0xf]
    %v268 = vld [vmem:[%s4 + $0x144] sm:$0xf]
    %v269 = vld [vmem:[%s4 + $0x148] sm:$0xf]
    %v270 = vld [vmem:[%s4 + $0x14c] sm:$0xf]
    %v271 = vld [vmem:[%s4 + $0x150] sm:$0xf]
    %v272 = vld [vmem:[%s4 + $0x154] sm:$0xf]
    %v273 = vld [vmem:[%s4 + $0x158] sm:$0xf]
    %v274 = vld [vmem:[%s4 + $0x15c] sm:$0xf]
    %v275 = vld [vmem:[%s4 + $0x160] sm:$0xf]
    %v276 = vld [vmem:[%s4 + $0x164] sm:$0xf]
    %v277 = vld [vmem:[%s4 + $0x168] sm:$0xf]
    %v278 = vld [vmem:[%s4 + $0x16c] sm:$0xf]
    %v279 = vld [vmem:[%s4 + $0x170] sm:$0xf]
    %v280 = vld [vmem:[%s4 + $0x174] sm:$0xf]
    %v281 = vld [vmem:[%s4 + $0x178] sm:$0xf]
    %v282 = vld [vmem:[%s4 + $0x17c] sm:$0xf]
    %v283 = vld [vmem:[%s4 + $0x180] sm:$0xf]
    %v284 = vld [vmem:[%s4 + $0x184] sm:$0xf]
    %v285 = vld [vmem:[%s4 + $0x188] sm:$0xf]
    %v286 = vld [vmem:[%s4 + $0x18c] sm:$0xf]
    %v287 = vld [vmem:[%s4 + $0x190] sm:$0xf]
    %v288 = vld [vmem:[%s4 + $0x194] sm:$0xf]
    %v289 = vld [vmem:[%s4 + $0x198] sm:$0xf]
    %v290 = vld [vmem:[%s4 + $0x19c] sm:$0xf]
    %v291 = vld [vmem:[%s4 + $0x1a0] sm:$0xf]
    %v292 = vld [vmem:[%s4 + $0x1a4] sm:$0xf]
    %v293 = vld [vmem:[%s4 + $0x1a8] sm:$0xf]
    %v294 = vld [vmem:[%s4 + $0x1ac] sm:$0xf]
    %v295 = vld [vmem:[%s4 + $0x1b0] sm:$0xf]
    %v296 = vld [vmem:[%s4 + $0x1b4] sm:$0xf]
    %v297 = vld [vmem:[%s4 + $0x1b8] sm:$0xf]
    %v298 = vld [vmem:[%s4 + $0x1bc] sm:$0xf]
    %v299 = vld [vmem:[%s4 + $0x1c0] sm:$0xf]
    %v300 = vld [vmem:[%s4 + $0x1c4] sm:$0xf]
    %v301 = vld [vmem:[%s4 + $0x1c8] sm:$0xf]
    %v302 = vld [vmem:[%s4 + $0x1cc] sm:$0xf]
    %v303 = vld [vmem:[%s4 + $0x1d0] sm:$0xf]
    %v304 = vld [vmem:[%s4 + $0x1d4] sm:$0xf]
    %v305 = vld [vmem:[%s4 + $0x1d8] sm:$0xf]
    %v306 = vld [vmem:[%s4 + $0x1dc] sm:$0xf]
    %v307 = vld [vmem:[%s4 + $0x1e0] sm:$0xf]
    %v308 = vld [vmem:[%s4 + $0x1e4] sm:$0xf]
    %v309 = vld [vmem:[%s4 + $0x1e8] sm:$0xf]
    %v310 = vld [vmem:[%s4 + $0x1ec] sm:$0xf]
    %v311 = vld [vmem:[%s4 + $0x1f0] sm:$0xf]
    %v312 = vld [vmem:[%s4 + $0x1f4] sm:$0xf]
    %v313 = vld [vmem:[%s4 + $0x1f8] sm:$0xf]
    %v314 = vld [vmem:[%s4 + $0x1fc] sm:$0xf]
    %v315 = vld [vmem:[%s5] sm:$0x1]
    %v317 = vlaneseq
    %v318 = vshrl.u32 %v317, 7
    %v319 = vsub.s32 0, %v318
    %v320 = vrot.slane %v315, %v319
    %v330 = vunpack.c.l.b16 %v179
    %v331 = vunpack.c.h.b16 %v179
    %v332 = vunpack.c.l.b16 %v180
    %v333 = vunpack.c.h.b16 %v180
    %v334 = vunpack.c.l.b16 %v181
    %v335 = vunpack.c.h.b16 %v181
    %v336 = vunpack.c.l.b16 %v182
    %v337 = vunpack.c.h.b16 %v182
    %v338 = vunpack.c.l.b16 %v183
    %v339 = vunpack.c.h.b16 %v183
    %v340 = vunpack.c.l.b16 %v184
    %v341 = vunpack.c.h.b16 %v184
    %v342 = vunpack.c.l.b16 %v185
    %v343 = vunpack.c.h.b16 %v185
    %v344 = vunpack.c.l.b16 %v186
    %v345 = vunpack.c.h.b16 %v186
    %v346 = vpack.c.b16 %v338, %v330
    %v347 = vpack.c.b16 %v339, %v331
    %v348 = vpack.c.b16 %v340, %v332
    %v349 = vpack.c.b16 %v341, %v333
    %v350 = vpack.c.b16 %v342, %v334
    %v351 = vpack.c.b16 %v343, %v335
    %v352 = vpack.c.b16 %v344, %v336
    %v353 = vpack.c.b16 %v345, %v337
    %v490 = vunpack.c.l.b16 %v187
    %v491 = vunpack.c.l.b16 %v188
    %v492 = vunpack.c.l.b16 %v189
    %v493 = vunpack.c.l.b16 %v190
    %v494 = vunpack.c.l.b16 %v191
    %v495 = vunpack.c.l.b16 %v192
    %v496 = vunpack.c.l.b16 %v193
    %v497 = vunpack.c.l.b16 %v194
    %v498 = vunpack.c.l.b16 %v195
    %v499 = vunpack.c.l.b16 %v196
    %v500 = vunpack.c.l.b16 %v197
    %v501 = vunpack.c.l.b16 %v198
    %v502 = vunpack.c.l.b16 %v199
    %v503 = vunpack.c.l.b16 %v200
    %v504 = vunpack.c.l.b16 %v201
    %v505 = vunpack.c.l.b16 %v202
    %v506 = vunpack.c.l.b16 %v203
    %v507 = vunpack.c.l.b16 %v204
    %v508 = vunpack.c.l.b16 %v205
    %v509 = vunpack.c.l.b16 %v206
    %v510 = vunpack.c.l.b16 %v207
    %v511 = vunpack.c.l.b16 %v208
    %v512 = vunpack.c.l.b16 %v209
    %v513 = vunpack.c.l.b16 %v210
    %v514 = vunpack.c.l.b16 %v211
    %v515 = vunpack.c.l.b16 %v212
    %v516 = vunpack.c.l.b16 %v213
    %v517 = vunpack.c.l.b16 %v214
    %v518 = vunpack.c.l.b16 %v215
    %v519 = vunpack.c.l.b16 %v216
    %v520 = vunpack.c.l.b16 %v217
    %v521 = vunpack.c.l.b16 %v218
    %v522 = vunpack.c.l.b16 %v219
    %v523 = vunpack.c.l.b16 %v220
    %v524 = vunpack.c.l.b16 %v221
    %v525 = vunpack.c.l.b16 %v222
    %v526 = vunpack.c.l.b16 %v223
    %v527 = vunpack.c.l.b16 %v224
    %v528 = vunpack.c.l.b16 %v225
    %v529 = vunpack.c.l.b16 %v226
    %v530 = vunpack.c.l.b16 %v227
    %v531 = vunpack.c.l.b16 %v228
    %v532 = vunpack.c.l.b16 %v229
    %v533 = vunpack.c.l.b16 %v230
    %v534 = vunpack.c.l.b16 %v231
    %v535 = vunpack.c.l.b16 %v232
    %v536 = vunpack.c.l.b16 %v233
    %v537 = vunpack.c.l.b16 %v234
    %v538 = vunpack.c.l.b16 %v235
    %v539 = vunpack.c.l.b16 %v236
    %v540 = vunpack.c.l.b16 %v237
    %v541 = vunpack.c.l.b16 %v238
    %v542 = vunpack.c.l.b16 %v239
    %v543 = vunpack.c.l.b16 %v240
    %v544 = vunpack.c.l.b16 %v241
    %v545 = vunpack.c.l.b16 %v242
    %v546 = vunpack.c.l.b16 %v243
    %v547 = vunpack.c.l.b16 %v244
    %v548 = vunpack.c.l.b16 %v245
    %v549 = vunpack.c.l.b16 %v246
    %v550 = vunpack.c.l.b16 %v247
    %v551 = vunpack.c.l.b16 %v248
    %v552 = vunpack.c.l.b16 %v249
    %v553 = vunpack.c.l.b16 %v250
    %v554 = vunpack.c.l.b16 %v251
    %v555 = vunpack.c.l.b16 %v252
    %v556 = vunpack.c.l.b16 %v253
    %v557 = vunpack.c.l.b16 %v254
    %v558 = vunpack.c.l.b16 %v255
    %v559 = vunpack.c.l.b16 %v256
    %v560 = vunpack.c.l.b16 %v257
    %v561 = vunpack.c.l.b16 %v258
    %v562 = vunpack.c.l.b16 %v259
    %v563 = vunpack.c.l.b16 %v260
    %v564 = vunpack.c.l.b16 %v261
    %v565 = vunpack.c.l.b16 %v262
    %v566 = vunpack.c.l.b16 %v263
    %v567 = vunpack.c.l.b16 %v264
    %v568 = vunpack.c.l.b16 %v265
    %v569 = vunpack.c.l.b16 %v266
    %v570 = vunpack.c.l.b16 %v267
    %v571 = vunpack.c.l.b16 %v268
    %v572 = vunpack.c.l.b16 %v269
    %v573 = vunpack.c.l.b16 %v270
    %v574 = vunpack.c.l.b16 %v271
    %v575 = vunpack.c.l.b16 %v272
    %v576 = vunpack.c.l.b16 %v273
    %v577 = vunpack.c.l.b16 %v274
    %v578 = vunpack.c.l.b16 %v275
    %v579 = vunpack.c.l.b16 %v276
    %v580 = vunpack.c.l.b16 %v277
    %v581 = vunpack.c.l.b16 %v278
    %v582 = vunpack.c.l.b16 %v279
    %v583 = vunpack.c.l.b16 %v280
    %v584 = vunpack.c.l.b16 %v281
    %v585 = vunpack.c.l.b16 %v282
    %v586 = vunpack.c.l.b16 %v283
    %v587 = vunpack.c.l.b16 %v284
    %v588 = vunpack.c.l.b16 %v285
    %v589 = vunpack.c.l.b16 %v286
    %v590 = vunpack.c.l.b16 %v287
    %v591 = vunpack.c.l.b16 %v288
    %v592 = vunpack.c.l.b16 %v289
    %v593 = vunpack.c.l.b16 %v290
    %v594 = vunpack.c.l.b16 %v291
    %v595 = vunpack.c.l.b16 %v292
    %v596 = vunpack.c.l.b16 %v293
    %v597 = vunpack.c.l.b16 %v294
    %v598 = vunpack.c.l.b16 %v295
    %v599 = vunpack.c.l.b16 %v296
    %v600 = vunpack.c.l.b16 %v297
    %v601 = vunpack.c.l.b16 %v298
    %v602 = vunpack.c.l.b16 %v299
    %v603 = vunpack.c.l.b16 %v300
    %v604 = vunpack.c.l.b16 %v301
    %v605 = vunpack.c.l.b16 %v302
    %v606 = vunpack.c.l.b16 %v303
    %v607 = vunpack.c.l.b16 %v304
    %v608 = vunpack.c.l.b16 %v305
    %v609 = vunpack.c.l.b16 %v306
    %v610 = vunpack.c.l.b16 %v307
    %v611 = vunpack.c.l.b16 %v308
    %v612 = vunpack.c.l.b16 %v309
    %v613 = vunpack.c.l.b16 %v310
    %v614 = vunpack.c.l.b16 %v311
    %v615 = vunpack.c.l.b16 %v312
    %v616 = vunpack.c.l.b16 %v313
    %v617 = vunpack.c.l.b16 %v314
    %v618 = vpack.c.b16 %v491, %v490
    %v619 = vpack.c.b16 %v493, %v492
    %v620 = vpack.c.b16 %v495, %v494
    %v621 = vpack.c.b16 %v497, %v496
    %v622 = vpack.c.b16 %v499, %v498
    %v623 = vpack.c.b16 %v501, %v500
    %v624 = vpack.c.b16 %v503, %v502
    %v625 = vpack.c.b16 %v505, %v504
    %v626 = vpack.c.b16 %v507, %v506
    %v627 = vpack.c.b16 %v509, %v508
    %v628 = vpack.c.b16 %v511, %v510
    %v629 = vpack.c.b16 %v513, %v512
    %v630 = vpack.c.b16 %v515, %v514
    %v631 = vpack.c.b16 %v517, %v516
    %v632 = vpack.c.b16 %v519, %v518
    %v633 = vpack.c.b16 %v521, %v520
    %v634 = vpack.c.b16 %v523, %v522
    %v635 = vpack.c.b16 %v525, %v524
    %v636 = vpack.c.b16 %v527, %v526
    %v637 = vpack.c.b16 %v529, %v528
    %v638 = vpack.c.b16 %v531, %v530
    %v639 = vpack.c.b16 %v533, %v532
    %v640 = vpack.c.b16 %v535, %v534
    %v641 = vpack.c.b16 %v537, %v536
    %v642 = vpack.c.b16 %v539, %v538
    %v643 = vpack.c.b16 %v541, %v540
    %v644 = vpack.c.b16 %v543, %v542
    %v645 = vpack.c.b16 %v545, %v544
    %v646 = vpack.c.b16 %v547, %v546
    %v647 = vpack.c.b16 %v549, %v548
    %v648 = vpack.c.b16 %v551, %v550
    %v649 = vpack.c.b16 %v553, %v552
    %v650 = vpack.c.b16 %v555, %v554
    %v651 = vpack.c.b16 %v557, %v556
    %v652 = vpack.c.b16 %v559, %v558
    %v653 = vpack.c.b16 %v561, %v560
    %v654 = vpack.c.b16 %v563, %v562
    %v655 = vpack.c.b16 %v565, %v564
    %v656 = vpack.c.b16 %v567, %v566
    %v657 = vpack.c.b16 %v569, %v568
    %v658 = vpack.c.b16 %v571, %v570
    %v659 = vpack.c.b16 %v573, %v572
    %v660 = vpack.c.b16 %v575, %v574
    %v661 = vpack.c.b16 %v577, %v576
    %v662 = vpack.c.b16 %v579, %v578
    %v663 = vpack.c.b16 %v581, %v580
    %v664 = vpack.c.b16 %v583, %v582
    %v665 = vpack.c.b16 %v585, %v584
    %v666 = vpack.c.b16 %v587, %v586
    %v667 = vpack.c.b16 %v589, %v588
    %v668 = vpack.c.b16 %v591, %v590
    %v669 = vpack.c.b16 %v593, %v592
    %v670 = vpack.c.b16 %v595, %v594
    %v671 = vpack.c.b16 %v597, %v596
    %v672 = vpack.c.b16 %v599, %v598
    %v673 = vpack.c.b16 %v601, %v600
    %v674 = vpack.c.b16 %v603, %v602
    %v675 = vpack.c.b16 %v605, %v604
    %v676 = vpack.c.b16 %v607, %v606
    %v677 = vpack.c.b16 %v609, %v608
    %v678 = vpack.c.b16 %v611, %v610
    %v679 = vpack.c.b16 %v613, %v612
    %v680 = vpack.c.b16 %v615, %v614
    %v681 = vpack.c.b16 %v617, %v616
    %746 = vmatprep.subr.bf16.mxu0 0
    %747 = vmatpush1.bf16.msra.mxu0 %v618
    %748 = vmatprep.subr.bf16.mxu0 0
    %749 = vmatpush1.bf16.msra.mxu0 %v619
    %750 = vmatprep.subr.bf16.mxu0 0
    %751 = vmatpush1.bf16.msra.mxu0 %v620
    %752 = vmatprep.subr.bf16.mxu0 0
    %753 = vmatpush1.bf16.msra.mxu0 %v621
    %754 = vmatprep.subr.bf16.mxu0 0
    %755 = vmatpush1.bf16.msra.mxu0 %v622
    %756 = vmatprep.subr.bf16.mxu0 0
    %757 = vmatpush1.bf16.msra.mxu0 %v623
    %758 = vmatprep.subr.bf16.mxu0 0
    %759 = vmatpush1.bf16.msra.mxu0 %v624
    %760 = vmatprep.subr.bf16.mxu0 0
    %761 = vmatpush1.bf16.msra.mxu0 %v625
    %762 = vmatprep.subr.bf16.mxu0 0
    %763 = vmatpush1.bf16.msra.mxu0 %v626
    %764 = vmatprep.subr.bf16.mxu0 0
    %765 = vmatpush1.bf16.msra.mxu0 %v627
    %766 = vmatprep.subr.bf16.mxu0 0
    %767 = vmatpush1.bf16.msra.mxu0 %v628
    %768 = vmatprep.subr.bf16.mxu0 0
    %769 = vmatpush1.bf16.msra.mxu0 %v629
    %770 = vmatprep.subr.bf16.mxu0 0
    %771 = vmatpush1.bf16.msra.mxu0 %v630
    %772 = vmatprep.subr.bf16.mxu0 0
    %773 = vmatpush1.bf16.msra.mxu0 %v631
    %774 = vmatprep.subr.bf16.mxu0 0
    %775 = vmatpush1.bf16.msra.mxu0 %v632
    %776 = vmatprep.subr.bf16.mxu0 0
    %777 = vmatpush1.bf16.msra.mxu0 %v633
    %778 = vmatprep.mubr.bf16.mxu0 %v347
    %779 = vmatmul.mubr.bf16.gmra.mrb[0].mxu0 %v346
    %v780 = vpop.f32.mrb[0].mxu0
    %v781 = vadd.f32 %v320, %v780
    %v782 = vpop.f32.mrb[0].mxu0
    %v783 = vpop.f32.mrb[0].mxu0
    %v784 = vadd.f32 %v320, %v783
    %v785 = vpop.f32.mrb[0].mxu0
    %786 = vdwg.mxu0
    %787 = vmatprep.subr.bf16.mxu0 0
    %788 = vmatpush1.bf16.msra.mxu0 %v634
    %789 = vmatprep.subr.bf16.mxu0 0
    %790 = vmatpush1.bf16.msra.mxu0 %v635
    %791 = vmatprep.subr.bf16.mxu0 0
    %792 = vmatpush1.bf16.msra.mxu0 %v636
    %793 = vmatprep.subr.bf16.mxu0 0
    %794 = vmatpush1.bf16.msra.mxu0 %v637
    %795 = vmatprep.subr.bf16.mxu0 0
    %796 = vmatpush1.bf16.msra.mxu0 %v638
    %797 = vmatprep.subr.bf16.mxu0 0
    %798 = vmatpush1.bf16.msra.mxu0 %v639
    %799 = vmatprep.subr.bf16.mxu0 0
    %800 = vmatpush1.bf16.msra.mxu0 %v640
    %801 = vmatprep.subr.bf16.mxu0 0
    %802 = vmatpush1.bf16.msra.mxu0 %v641
    %803 = vmatprep.subr.bf16.mxu0 0
    %804 = vmatpush1.bf16.msra.mxu0 %v642
    %805 = vmatprep.subr.bf16.mxu0 0
    %806 = vmatpush1.bf16.msra.mxu0 %v643
    %807 = vmatprep.subr.bf16.mxu0 0
    %808 = vmatpush1.bf16.msra.mxu0 %v644
    %809 = vmatprep.subr.bf16.mxu0 0
    %810 = vmatpush1.bf16.msra.mxu0 %v645
    %811 = vmatprep.subr.bf16.mxu0 0
    %812 = vmatpush1.bf16.msra.mxu0 %v646
    %813 = vmatprep.subr.bf16.mxu0 0
    %814 = vmatpush1.bf16.msra.mxu0 %v647
    %815 = vmatprep.subr.bf16.mxu0 0
    %816 = vmatpush1.bf16.msra.mxu0 %v648
    %817 = vmatprep.subr.bf16.mxu0 0
    %818 = vmatpush1.bf16.msra.mxu0 %v649
    %819 = vmatprep.mubr.bf16.mxu0 %v349
    %820 = vmatmul.mubr.bf16.gmra.mrb[0].mxu0 %v348
    %v821 = vpop.f32.mrb[0].mxu0
    %v822 = vadd.f32 %v781, %v821
    %v823 = vpop.f32.mrb[0].mxu0
    %v824 = vpop.f32.mrb[0].mxu0
    %v825 = vadd.f32 %v784, %v824
    %v826 = vpop.f32.mrb[0].mxu0
    %827 = vdwg.mxu0
    %828 = vmatprep.subr.bf16.mxu0 0
    %829 = vmatpush1.bf16.msra.mxu0 %v650
    %830 = vmatprep.subr.bf16.mxu0 0
    %831 = vmatpush1.bf16.msra.mxu0 %v651
    %832 = vmatprep.subr.bf16.mxu0 0
    %833 = vmatpush1.bf16.msra.mxu0 %v652
    %834 = vmatprep.subr.bf16.mxu0 0
    %835 = vmatpush1.bf16.msra.mxu0 %v653
    %836 = vmatprep.subr.bf16.mxu0 0
    %837 = vmatpush1.bf16.msra.mxu0 %v654
    %838 = vmatprep.subr.bf16.mxu0 0
    %839 = vmatpush1.bf16.msra.mxu0 %v655
    %840 = vmatprep.subr.bf16.mxu0 0
    %841 = vmatpush1.bf16.msra.mxu0 %v656
    %842 = vmatprep.subr.bf16.mxu0 0
    %843 = vmatpush1.bf16.msra.mxu0 %v657
    %844 = vmatprep.subr.bf16.mxu0 0
    %845 = vmatpush1.bf16.msra.mxu0 %v658
    %846 = vmatprep.subr.bf16.mxu0 0
    %847 = vmatpush1.bf16.msra.mxu0 %v659
    %848 = vmatprep.subr.bf16.mxu0 0
    %849 = vmatpush1.bf16.msra.mxu0 %v660
    %850 = vmatprep.subr.bf16.mxu0 0
    %851 = vmatpush1.bf16.msra.mxu0 %v661
    %852 = vmatprep.subr.bf16.mxu0 0
    %853 = vmatpush1.bf16.msra.mxu0 %v662
    %854 = vmatprep.subr.bf16.mxu0 0
    %855 = vmatpush1.bf16.msra.mxu0 %v663
    %856 = vmatprep.subr.bf16.mxu0 0
    %857 = vmatpush1.bf16.msra.mxu0 %v664
    %858 = vmatprep.subr.bf16.mxu0 0
    %859 = vmatpush1.bf16.msra.mxu0 %v665
    %860 = vmatprep.mubr.bf16.mxu0 %v351
    %861 = vmatmul.mubr.bf16.gmra.mrb[0].mxu0 %v350
    %v862 = vpop.f32.mrb[0].mxu0
    %v863 = vadd.f32 %v822, %v862
    %v864 = vpop.f32.mrb[0].mxu0
    %v865 = vpop.f32.mrb[0].mxu0
    %v866 = vadd.f32 %v825, %v865
    %v867 = vpop.f32.mrb[0].mxu0
    %868 = vdwg.mxu0
    %869 = vmatprep.subr.bf16.mxu0 0
    %870 = vmatpush1.bf16.msra.mxu0 %v666
    %871 = vmatprep.subr.bf16.mxu0 0
    %872 = vmatpush1.bf16.msra.mxu0 %v667
    %873 = vmatprep.subr.bf16.mxu0 0
    %874 = vmatpush1.bf16.msra.mxu0 %v668
    %875 = vmatprep.subr.bf16.mxu0 0
    %876 = vmatpush1.bf16.msra.mxu0 %v669
    %877 = vmatprep.subr.bf16.mxu0 0
    %878 = vmatpush1.bf16.msra.mxu0 %v670
    %879 = vmatprep.subr.bf16.mxu0 0
    %880 = vmatpush1.bf16.msra.mxu0 %v671
    %881 = vmatprep.subr.bf16.mxu0 0
    %882 = vmatpush1.bf16.msra.mxu0 %v672
    %883 = vmatprep.subr.bf16.mxu0 0
    %884 = vmatpush1.bf16.msra.mxu0 %v673
    %885 = vmatprep.subr.bf16.mxu0 0
    %886 = vmatpush1.bf16.msra.mxu0 %v674
    %887 = vmatprep.subr.bf16.mxu0 0
    %888 = vmatpush1.bf16.msra.mxu0 %v675
    %889 = vmatprep.subr.bf16.mxu0 0
    %890 = vmatpush1.bf16.msra.mxu0 %v676
    %891 = vmatprep.subr.bf16.mxu0 0
    %892 = vmatpush1.bf16.msra.mxu0 %v677
    %893 = vmatprep.subr.bf16.mxu0 0
    %894 = vmatpush1.bf16.msra.mxu0 %v678
    %895 = vmatprep.subr.bf16.mxu0 0
    %896 = vmatpush1.bf16.msra.mxu0 %v679
    %897 = vmatprep.subr.bf16.mxu0 0
    %898 = vmatpush1.bf16.msra.mxu0 %v680
    %899 = vmatprep.subr.bf16.mxu0 0
    %900 = vmatpush1.bf16.msra.mxu0 %v681
    %901 = vmatprep.mubr.bf16.mxu0 %v353
    %902 = vmatmul.mubr.bf16.gmra.mrb[0].mxu0 %v352
    %v903 = vpop.f32.mrb[0].mxu0
    %v904 = vadd.f32 %v863, %v903
    %v905 = vpop.f32.mrb[0].mxu0
    %v906 = vpop.f32.mrb[0].mxu0
    %v907 = vadd.f32 %v866, %v906
    %v908 = vpop.f32.mrb[0].mxu0
    %909 = vdwg.mxu0
    %v910 = vmax.f32 %v904, 0.0
    %v911 = vmax.f32 %v907, 0.0
    %v912 = vpack.c.bf16 %v911, %v910
    %v913 = vld [vmem:[%s6] sm:$0xf]
    %v914 = vld [vmem:[%s6 + $0x4] sm:$0xf]
    %v915 = vld [vmem:[%s6 + $0x8] sm:$0xf]
    %v916 = vld [vmem:[%s6 + $0xc] sm:$0xf]
    %v917 = vld [vmem:[%s6 + $0x10] sm:$0xf]
    %v918 = vld [vmem:[%s6 + $0x14] sm:$0xf]
    %v919 = vld [vmem:[%s6 + $0x18] sm:$0xf]
    %v920 = vld [vmem:[%s6 + $0x1c] sm:$0xf]
    %v921 = vld [vmem:[%s6 + $0x20] sm:$0xf]
    %v922 = vld [vmem:[%s6 + $0x24] sm:$0xf]
    %v923 = vld [vmem:[%s6 + $0x28] sm:$0xf]
    %v924 = vld [vmem:[%s6 + $0x2c] sm:$0xf]
    %v925 = vld [vmem:[%s6 + $0x30] sm:$0xf]
    %v926 = vld [vmem:[%s6 + $0x34] sm:$0xf]
    %v927 = vld [vmem:[%s6 + $0x38] sm:$0xf]
    %v928 = vld [vmem:[%s6 + $0x3c] sm:$0xf]
    %v929 = vld [vmem:[#allocation3] sm:$0x1]
    %v931 = vlaneseq
    %v932 = vshrl.u32 %v931, 7
    %v933 = vsub.s32 0, %v932
    %v934 = vrot.slane %v929, %v933
    %v952 = vunpack.c.l.b16 %v913
    %v953 = vunpack.c.l.b16 %v914
    %v954 = vunpack.c.l.b16 %v915
    %v955 = vunpack.c.l.b16 %v916
    %v956 = vunpack.c.l.b16 %v917
    %v957 = vunpack.c.l.b16 %v918
    %v958 = vunpack.c.l.b16 %v919
    %v959 = vunpack.c.l.b16 %v920
    %v960 = vunpack.c.l.b16 %v921
    %v961 = vunpack.c.l.b16 %v922
    %v962 = vunpack.c.l.b16 %v923
    %v963 = vunpack.c.l.b16 %v924
    %v964 = vunpack.c.l.b16 %v925
    %v965 = vunpack.c.l.b16 %v926
    %v966 = vunpack.c.l.b16 %v927
    %v967 = vunpack.c.l.b16 %v928
    %v968 = vpack.c.b16 %v953, %v952
    %v969 = vpack.c.b16 %v955, %v954
    %v970 = vpack.c.b16 %v957, %v956
    %v971 = vpack.c.b16 %v959, %v958
    %v972 = vpack.c.b16 %v961, %v960
    %v973 = vpack.c.b16 %v963, %v962
    %v974 = vpack.c.b16 %v965, %v964
    %v975 = vpack.c.b16 %v967, %v966
    %984 = vmatprep.subr.bf16.mxu0 0
    %985 = vmatpush1.bf16.msra.mxu0 %v968
    %986 = vmatprep.subr.bf16.mxu0 0
    %987 = vmatpush1.bf16.msra.mxu0 %v969
    %988 = vmatprep.subr.bf16.mxu0 0
    %989 = vmatpush1.bf16.msra.mxu0 %v970
    %990 = vmatprep.subr.bf16.mxu0 0
    %991 = vmatpush1.bf16.msra.mxu0 %v971
    %992 = vmatprep.subr.bf16.mxu0 0
    %993 = vmatpush1.bf16.msra.mxu0 %v972
    %994 = vmatprep.subr.bf16.mxu0 0
    %995 = vmatpush1.bf16.msra.mxu0 %v973
    %996 = vmatprep.subr.bf16.mxu0 0
    %997 = vmatpush1.bf16.msra.mxu0 %v974
    %998 = vmatprep.subr.bf16.mxu0 0
    %999 = vmatpush1.bf16.msra.mxu0 %v975
    %1000 = vmatprep.subr.bf16.mxu0 0
    %1001 = vmatpush1.bf16.msra.mxu0 0
    %1002 = vmatprep.subr.bf16.mxu0 0
    %1003 = vmatpush1.bf16.msra.mxu0 0
    %1004 = vmatprep.subr.bf16.mxu0 0
    %1005 = vmatpush1.bf16.msra.mxu0 0
    %1006 = vmatprep.subr.bf16.mxu0 0
    %1007 = vmatpush1.bf16.msra.mxu0 0
    %1008 = vmatprep.subr.bf16.mxu0 0
    %1009 = vmatpush1.bf16.msra.mxu0 0
    %1010 = vmatprep.subr.bf16.mxu0 0
    %1011 = vmatpush1.bf16.msra.mxu0 0
    %1012 = vmatprep.subr.bf16.mxu0 0
    %1013 = vmatpush1.bf16.msra.mxu0 0
    %1014 = vmatprep.subr.bf16.mxu0 0
    %1015 = vmatpush1.bf16.msra.mxu0 0
    %1016 = vmatprep.mubr.bf16.mxu0 0
    %1017 = vmatmul.mubr.bf16.gmra.mrb[0].mxu0 %v912
    %v1018 = vpop.f32.mrb[0].mxu0
    %v1019 = vadd.f32 %v934, %v1018
    %v1020 = vpop.f32.mrb[0].mxu0
    %v1021 = vpop.f32.mrb[0].mxu0
    %v1022 = vadd.f32 %v934, %v1021
    %v1023 = vpop.f32.mrb[0].mxu0
    %1024 = vdwg.mxu0
    %v1025 = vld [vmem:[%s8] sm:$0xf]
    %v1026 = vld [vmem:[%s8 + $0x4] sm:$0xf]
    %v1027 = vld [vmem:[%s8 + $0x8] sm:$0xf]
    %v1028 = vld [vmem:[%s8 + $0xc] sm:$0xf]
    %v1029 = vld [vmem:[%s8 + $0x10] sm:$0xf]
    %v1030 = vld [vmem:[%s8 + $0x14] sm:$0xf]
    %v1031 = vld [vmem:[%s8 + $0x18] sm:$0xf]
    %v1032 = vld [vmem:[%s8 + $0x1c] sm:$0xf]
    %v1033 = vld [vmem:[%s8 + $0x20] sm:$0xf]
    %v1034 = vld [vmem:[%s8 + $0x24] sm:$0xf]
    %v1035 = vld [vmem:[%s8 + $0x28] sm:$0xf]
    %v1036 = vld [vmem:[%s8 + $0x2c] sm:$0xf]
    %v1037 = vld [vmem:[%s8 + $0x30] sm:$0xf]
    %v1038 = vld [vmem:[%s8 + $0x34] sm:$0xf]
    %v1039 = vld [vmem:[%s8 + $0x38] sm:$0xf]
    %v1040 = vld [vmem:[%s8 + $0x3c] sm:$0xf]
    %v1041 = vld [vmem:[#allocation5] sm:$0x1]
    %v1043 = vlaneseq
    %v1044 = vshrl.u32 %v1043, 7
    %v1045 = vsub.s32 0, %v1044
    %v1046 = vrot.slane %v1041, %v1045
    %v1064 = vunpack.c.l.b16 %v1025
    %v1065 = vunpack.c.l.b16 %v1026
    %v1066 = vunpack.c.l.b16 %v1027
    %v1067 = vunpack.c.l.b16 %v1028
    %v1068 = vunpack.c.l.b16 %v1029
    %v1069 = vunpack.c.l.b16 %v1030
    %v1070 = vunpack.c.l.b16 %v1031
    %v1071 = vunpack.c.l.b16 %v1032
    %v1072 = vunpack.c.l.b16 %v1033
    %v1073 = vunpack.c.l.b16 %v1034
    %v1074 = vunpack.c.l.b16 %v1035
    %v1075 = vunpack.c.l.b16 %v1036
    %v1076 = vunpack.c.l.b16 %v1037
    %v1077 = vunpack.c.l.b16 %v1038
    %v1078 = vunpack.c.l.b16 %v1039
    %v1079 = vunpack.c.l.b16 %v1040
    %v1080 = vpack.c.b16 %v1065, %v1064
    %v1081 = vpack.c.b16 %v1067, %v1066
    %v1082 = vpack.c.b16 %v1069, %v1068
    %v1083 = vpack.c.b16 %v1071, %v1070
    %v1084 = vpack.c.b16 %v1073, %v1072
    %v1085 = vpack.c.b16 %v1075, %v1074
    %v1086 = vpack.c.b16 %v1077, %v1076
    %v1087 = vpack.c.b16 %v1079, %v1078
    %1096 = vmatprep.subr.bf16.mxu0 0
    %1097 = vmatpush1.bf16.msra.mxu0 %v1080
    %1098 = vmatprep.subr.bf16.mxu0 0
    %1099 = vmatpush1.bf16.msra.mxu0 %v1081
    %1100 = vmatprep.subr.bf16.mxu0 0
    %1101 = vmatpush1.bf16.msra.mxu0 %v1082
    %1102 = vmatprep.subr.bf16.mxu0 0
    %1103 = vmatpush1.bf16.msra.mxu0 %v1083
    %1104 = vmatprep.subr.bf16.mxu0 0
    %1105 = vmatpush1.bf16.msra.mxu0 %v1084
    %1106 = vmatprep.subr.bf16.mxu0 0
    %1107 = vmatpush1.bf16.msra.mxu0 %v1085
    %1108 = vmatprep.subr.bf16.mxu0 0
    %1109 = vmatpush1.bf16.msra.mxu0 %v1086
    %1110 = vmatprep.subr.bf16.mxu0 0
    %1111 = vmatpush1.bf16.msra.mxu0 %v1087
    %1112 = vmatprep.subr.bf16.mxu0 0
    %1113 = vmatpush1.bf16.msra.mxu0 0
    %1114 = vmatprep.subr.bf16.mxu0 0
    %1115 = vmatpush1.bf16.msra.mxu0 0
    %1116 = vmatprep.subr.bf16.mxu0 0
    %1117 = vmatpush1.bf16.msra.mxu0 0
    %1118 = vmatprep.subr.bf16.mxu0 0
    %1119 = vmatpush1.bf16.msra.mxu0 0
    %1120 = vmatprep.subr.bf16.mxu0 0
    %1121 = vmatpush1.bf16.msra.mxu0 0
    %1122 = vmatprep.subr.bf16.mxu0 0
    %1123 = vmatpush1.bf16.msra.mxu0 0
    %1124 = vmatprep.subr.bf16.mxu0 0
    %1125 = vmatpush1.bf16.msra.mxu0 0
    %1126 = vmatprep.subr.bf16.mxu0 0
    %1127 = vmatpush1.bf16.msra.mxu0 0
    %1128 = vmatprep.mubr.bf16.mxu0 0
    %1129 = vmatmul.mubr.bf16.gmra.mrb[0].mxu0 %v912
    %v1130 = vpop.f32.mrb[0].mxu0
    %v1131 = vadd.f32 %v1046, %v1130
    %v1132 = vpop.f32.mrb[0].mxu0
    %v1133 = vpop.f32.mrb[0].mxu0
    %v1134 = vadd.f32 %v1046, %v1133
    %v1135 = vpop.f32.mrb[0].mxu0
    %1136 = vdwg.mxu0
    %v1137 = vmul.f32 %v1131, 0.5
    %v1138 = vmul.f32 %v1134, 0.5
    %v1139 = vmul.f32 %v1137, 1.442695
    %v1140 = vpow.pop %v1139
    %v1141 = vmul.f32 %v1138, 1.442695
    %v1142 = vpow.pop %v1141
    %v1143 = vld [vmem:[%s2] sm:$0xff]
    %v1144 = vld [vmem:[%s2 + $0x8] sm:$0xff]
    %v1145 = vmul.f32 %v1140, %v1143
    %v1146 = vmul.f32 %v1142, %v1144
    %v1147 = vadd.f32 %v1019, %v1145
    %v1148 = vadd.f32 %v1022, %v1146
    %v1149 = vld [vmem:[%s1] sm:$0xff]
    %v1150 = vld [vmem:[%s1 + $0x8] sm:$0xff]
    %v1151 = vld [vmem:[%s1 + $0x10] sm:$0xff]
    %v1152 = vld [vmem:[%s1 + $0x18] sm:$0xff]
    %v1153 = vld [vmem:[%s1 + $0x20] sm:$0xff]
    %v1154 = vld [vmem:[%s1 + $0x28] sm:$0xff]
    %v1155 = vld [vmem:[%s1 + $0x30] sm:$0xff]
    %v1156 = vld [vmem:[%s1 + $0x38] sm:$0xff]
    %v1157 = vld [vmem:[#allocation10] sm:$0xf]
    %v1158 = vld [vmem:[#allocation10 + $0x4] sm:$0xf]
    %v1159 = vld [vmem:[#allocation10 + $0x8] sm:$0xf]
    %v1160 = vld [vmem:[#allocation10 + $0xc] sm:$0xf]
    %v1161 = vld [vmem:[#allocation10 + $0x10] sm:$0xf]
    %v1162 = vld [vmem:[#allocation10 + $0x14] sm:$0xf]
    %v1163 = vld [vmem:[#allocation10 + $0x18] sm:$0xf]
    %v1164 = vld [vmem:[#allocation10 + $0x1c] sm:$0xf]
    %v1165 = vld [vmem:[#allocation10 + $0x20] sm:$0xf]
    %v1166 = vld [vmem:[#allocation10 + $0x24] sm:$0xf]
    %v1167 = vld [vmem:[#allocation10 + $0x28] sm:$0xf]
    %v1168 = vld [vmem:[#allocation10 + $0x2c] sm:$0xf]
    %v1169 = vld [vmem:[#allocation10 + $0x30] sm:$0xf]
    %v1170 = vld [vmem:[#allocation10 + $0x34] sm:$0xf]
    %v1171 = vld [vmem:[#allocation10 + $0x38] sm:$0xf]
    %v1172 = vld [vmem:[#allocation10 + $0x3c] sm:$0xf]
    %v1173 = vld [vmem:[#allocation10 + $0x40] sm:$0xf]
    %v1174 = vld [vmem:[#allocation10 + $0x44] sm:$0xf]
    %v1175 = vld [vmem:[#allocation10 + $0x48] sm:$0xf]
    %v1176 = vld [vmem:[#allocation10 + $0x4c] sm:$0xf]
    %v1177 = vld [vmem:[#allocation10 + $0x50] sm:$0xf]
    %v1178 = vld [vmem:[#allocation10 + $0x54] sm:$0xf]
    %v1179 = vld [vmem:[#allocation10 + $0x58] sm:$0xf]
    %v1180 = vld [vmem:[#allocation10 + $0x5c] sm:$0xf]
    %v1181 = vld [vmem:[#allocation10 + $0x60] sm:$0xf]
    %v1182 = vld [vmem:[#allocation10 + $0x64] sm:$0xf]
    %v1183 = vld [vmem:[#allocation10 + $0x68] sm:$0xf]
    %v1184 = vld [vmem:[#allocation10 + $0x6c] sm:$0xf]
    %v1185 = vld [vmem:[#allocation10 + $0x70] sm:$0xf]
    %v1186 = vld [vmem:[#allocation10 + $0x74] sm:$0xf]
    %v1187 = vld [vmem:[#allocation10 + $0x78] sm:$0xf]
    %v1188 = vld [vmem:[#allocation10 + $0x7c] sm:$0xf]
    %v1189 = vld [vmem:[#allocation10 + $0x80] sm:$0xf]
    %v1190 = vld [vmem:[#allocation10 + $0x84] sm:$0xf]
    %v1191 = vld [vmem:[#allocation10 + $0x88] sm:$0xf]
    %v1192 = vld [vmem:[#allocation10 + $0x8c] sm:$0xf]
    %v1193 = vld [vmem:[#allocation10 + $0x90] sm:$0xf]
    %v1194 = vld [vmem:[#allocation10 + $0x94] sm:$0xf]
    %v1195 = vld [vmem:[#allocation10 + $0x98] sm:$0xf]
    %v1196 = vld [vmem:[#allocation10 + $0x9c] sm:$0xf]
    %v1197 = vld [vmem:[#allocation10 + $0xa0] sm:$0xf]
    %v1198 = vld [vmem:[#allocation10 + $0xa4] sm:$0xf]
    %v1199 = vld [vmem:[#allocation10 + $0xa8] sm:$0xf]
    %v1200 = vld [vmem:[#allocation10 + $0xac] sm:$0xf]
    %v1201 = vld [vmem:[#allocation10 + $0xb0] sm:$0xf]
    %v1202 = vld [vmem:[#allocation10 + $0xb4] sm:$0xf]
    %v1203 = vld [vmem:[#allocation10 + $0xb8] sm:$0xf]
    %v1204 = vld [vmem:[#allocation10 + $0xbc] sm:$0xf]
    %v1205 = vld [vmem:[#allocation10 + $0xc0] sm:$0xf]
    %v1206 = vld [vmem:[#allocation10 + $0xc4] sm:$0xf]
    %v1207 = vld [vmem:[#allocation10 + $0xc8] sm:$0xf]
    %v1208 = vld [vmem:[#allocation10 + $0xcc] sm:$0xf]
    %v1209 = vld [vmem:[#allocation10 + $0xd0] sm:$0xf]
    %v1210 = vld [vmem:[#allocation10 + $0xd4] sm:$0xf]
    %v1211 = vld [vmem:[#allocation10 + $0xd8] sm:$0xf]
    %v1212 = vld [vmem:[#allocation10 + $0xdc] sm:$0xf]
    %v1213 = vld [vmem:[#allocation10 + $0xe0] sm:$0xf]
    %v1214 = vld [vmem:[#allocation10 + $0xe4] sm:$0xf]
    %v1215 = vld [vmem:[#allocation10 + $0xe8] sm:$0xf]
    %v1216 = vld [vmem:[#allocation10 + $0xec] sm:$0xf]
    %v1217 = vld [vmem:[#allocation10 + $0xf0] sm:$0xf]
    %v1218 = vld [vmem:[#allocation10 + $0xf4] sm:$0xf]
    %v1219 = vld [vmem:[#allocation10 + $0xf8] sm:$0xf]
    %v1220 = vld [vmem:[#allocation10 + $0xfc] sm:$0xf]
    %v1221 = vld [vmem:[#allocation10 + $0x100] sm:$0xf]
    %v1222 = vld [vmem:[#allocation10 + $0x104] sm:$0xf]
    %v1223 = vld [vmem:[#allocation10 + $0x108] sm:$0xf]
    %v1224 = vld [vmem:[#allocation10 + $0x10c] sm:$0xf]
    %v1225 = vld [vmem:[#allocation10 + $0x110] sm:$0xf]
    %v1226 = vld [vmem:[#allocation10 + $0x114] sm:$0xf]
    %v1227 = vld [vmem:[#allocation10 + $0x118] sm:$0xf]
    %v1228 = vld [vmem:[#allocation10 + $0x11c] sm:$0xf]
    %v1229 = vld [vmem:[#allocation10 + $0x120] sm:$0xf]
    %v1230 = vld [vmem:[#allocation10 + $0x124] sm:$0xf]
    %v1231 = vld [vmem:[#allocation10 + $0x128] sm:$0xf]
    %v1232 = vld [vmem:[#allocation10 + $0x12c] sm:$0xf]
    %v1233 = vld [vmem:[#allocation10 + $0x130] sm:$0xf]
    %v1234 = vld [vmem:[#allocation10 + $0x134] sm:$0xf]
    %v1235 = vld [vmem:[#allocation10 + $0x138] sm:$0xf]
    %v1236 = vld [vmem:[#allocation10 + $0x13c] sm:$0xf]
    %v1237 = vld [vmem:[#allocation10 + $0x140] sm:$0xf]
    %v1238 = vld [vmem:[#allocation10 + $0x144] sm:$0xf]
    %v1239 = vld [vmem:[#allocation10 + $0x148] sm:$0xf]
    %v1240 = vld [vmem:[#allocation10 + $0x14c] sm:$0xf]
    %v1241 = vld [vmem:[#allocation10 + $0x150] sm:$0xf]
    %v1242 = vld [vmem:[#allocation10 + $0x154] sm:$0xf]
    %v1243 = vld [vmem:[#allocation10 + $0x158] sm:$0xf]
    %v1244 = vld [vmem:[#allocation10 + $0x15c] sm:$0xf]
    %v1245 = vld [vmem:[#allocation10 + $0x160] sm:$0xf]
    %v1246 = vld [vmem:[#allocation10 + $0x164] sm:$0xf]
    %v1247 = vld [vmem:[#allocation10 + $0x168] sm:$0xf]
    %v1248 = vld [vmem:[#allocation10 + $0x16c] sm:$0xf]
    %v1249 = vld [vmem:[#allocation10 + $0x170] sm:$0xf]
    %v1250 = vld [vmem:[#allocation10 + $0x174] sm:$0xf]
    %v1251 = vld [vmem:[#allocation10 + $0x178] sm:$0xf]
    %v1252 = vld [vmem:[#allocation10 + $0x17c] sm:$0xf]
    %v1253 = vld [vmem:[#allocation10 + $0x180] sm:$0xf]
    %v1254 = vld [vmem:[#allocation10 + $0x184] sm:$0xf]
    %v1255 = vld [vmem:[#allocation10 + $0x188] sm:$0xf]
    %v1256 = vld [vmem:[#allocation10 + $0x18c] sm:$0xf]
    %v1257 = vld [vmem:[#allocation10 + $0x190] sm:$0xf]
    %v1258 = vld [vmem:[#allocation10 + $0x194] sm:$0xf]
    %v1259 = vld [vmem:[#allocation10 + $0x198] sm:$0xf]
    %v1260 = vld [vmem:[#allocation10 + $0x19c] sm:$0xf]
    %v1261 = vld [vmem:[#allocation10 + $0x1a0] sm:$0xf]
    %v1262 = vld [vmem:[#allocation10 + $0x1a4] sm:$0xf]
    %v1263 = vld [vmem:[#allocation10 + $0x1a8] sm:$0xf]
    %v1264 = vld [vmem:[#allocation10 + $0x1ac] sm:$0xf]
    %v1265 = vld [vmem:[#allocation10 + $0x1b0] sm:$0xf]
    %v1266 = vld [vmem:[#allocation10 + $0x1b4] sm:$0xf]
    %v1267 = vld [vmem:[#allocation10 + $0x1b8] sm:$0xf]
    %v1268 = vld [vmem:[#allocation10 + $0x1bc] sm:$0xf]
    %v1269 = vld [vmem:[#allocation10 + $0x1c0] sm:$0xf]
    %v1270 = vld [vmem:[#allocation10 + $0x1c4] sm:$0xf]
    %v1271 = vld [vmem:[#allocation10 + $0x1c8] sm:$0xf]
    %v1272 = vld [vmem:[#allocation10 + $0x1cc] sm:$0xf]
    %v1273 = vld [vmem:[#allocation10 + $0x1d0] sm:$0xf]
    %v1274 = vld [vmem:[#allocation10 + $0x1d4] sm:$0xf]
    %v1275 = vld [vmem:[#allocation10 + $0x1d8] sm:$0xf]
    %v1276 = vld [vmem:[#allocation10 + $0x1dc] sm:$0xf]
    %v1277 = vld [vmem:[#allocation10 + $0x1e0] sm:$0xf]
    %v1278 = vld [vmem:[#allocation10 + $0x1e4] sm:$0xf]
    %v1279 = vld [vmem:[#allocation10 + $0x1e8] sm:$0xf]
    %v1280 = vld [vmem:[#allocation10 + $0x1ec] sm:$0xf]
    %v1281 = vld [vmem:[#allocation10 + $0x1f0] sm:$0xf]
    %v1282 = vld [vmem:[#allocation10 + $0x1f4] sm:$0xf]
    %v1283 = vld [vmem:[#allocation10 + $0x1f8] sm:$0xf]
    %v1284 = vld [vmem:[#allocation10 + $0x1fc] sm:$0xf]
    %v1285 = vld [vmem:[#allocation11] sm:$0x1]
    %v1287 = vlaneseq
    %v1288 = vshrl.u32 %v1287, 7
    %v1289 = vsub.s32 0, %v1288
    %v1290 = vrot.slane %v1285, %v1289
    %v1300 = vunpack.c.l.b16 %v1149
    %v1301 = vunpack.c.h.b16 %v1149
    %v1302 = vunpack.c.l.b16 %v1150
    %v1303 = vunpack.c.h.b16 %v1150
    %v1304 = vunpack.c.l.b16 %v1151
    %v1305 = vunpack.c.h.b16 %v1151
    %v1306 = vunpack.c.l.b16 %v1152
    %v1307 = vunpack.c.h.b16 %v1152
    %v1308 = vunpack.c.l.b16 %v1153
    %v1309 = vunpack.c.h.b16 %v1153
    %v1310 = vunpack.c.l.b16 %v1154
    %v1311 = vunpack.c.h.b16 %v1154
    %v1312 = vunpack.c.l.b16 %v1155
    %v1313 = vunpack.c.h.b16 %v1155
    %v1314 = vunpack.c.l.b16 %v1156
    %v1315 = vunpack.c.h.b16 %v1156
    %v1316 = vpack.c.b16 %v1308, %v1300
    %v1317 = vpack.c.b16 %v1309, %v1301
    %v1318 = vpack.c.b16 %v1310, %v1302
    %v1319 = vpack.c.b16 %v1311, %v1303
    %v1320 = vpack.c.b16 %v1312, %v1304
    %v1321 = vpack.c.b16 %v1313, %v1305
    %v1322 = vpack.c.b16 %v1314, %v1306
    %v1323 = vpack.c.b16 %v1315, %v1307
    %v1460 = vunpack.c.l.b16 %v1157
    %v1461 = vunpack.c.l.b16 %v1158
    %v1462 = vunpack.c.l.b16 %v1159
    %v1463 = vunpack.c.l.b16 %v1160
    %v1464 = vunpack.c.l.b16 %v1161
    %v1465 = vunpack.c.l.b16 %v1162
    %v1466 = vunpack.c.l.b16 %v1163
    %v1467 = vunpack.c.l.b16 %v1164
    %v1468 = vunpack.c.l.b16 %v1165
    %v1469 = vunpack.c.l.b16 %v1166
    %v1470 = vunpack.c.l.b16 %v1167
    %v1471 = vunpack.c.l.b16 %v1168
    %v1472 = vunpack.c.l.b16 %v1169
    %v1473 = vunpack.c.l.b16 %v1170
    %v1474 = vunpack.c.l.b16 %v1171
    %v1475 = vunpack.c.l.b16 %v1172
    %v1476 = vunpack.c.l.b16 %v1173
    %v1477 = vunpack.c.l.b16 %v1174
    %v1478 = vunpack.c.l.b16 %v1175
    %v1479 = vunpack.c.l.b16 %v1176
    %v1480 = vunpack.c.l.b16 %v1177
    %v1481 = vunpack.c.l.b16 %v1178
    %v1482 = vunpack.c.l.b16 %v1179
    %v1483 = vunpack.c.l.b16 %v1180
    %v1484 = vunpack.c.l.b16 %v1181
    %v1485 = vunpack.c.l.b16 %v1182
    %v1486 = vunpack.c.l.b16 %v1183
    %v1487 = vunpack.c.l.b16 %v1184
    %v1488 = vunpack.c.l.b16 %v1185
    %v1489 = vunpack.c.l.b16 %v1186
    %v1490 = vunpack.c.l.b16 %v1187
    %v1491 = vunpack.c.l.b16 %v1188
    %v1492 = vunpack.c.l.b16 %v1189
    %v1493 = vunpack.c.l.b16 %v1190
    %v1494 = vunpack.c.l.b16 %v1191
    %v1495 = vunpack.c.l.b16 %v1192
    %v1496 = vunpack.c.l.b16 %v1193
    %v1497 = vunpack.c.l.b16 %v1194
    %v1498 = vunpack.c.l.b16 %v1195
    %v1499 = vunpack.c.l.b16 %v1196
    %v1500 = vunpack.c.l.b16 %v1197
    %v1501 = vunpack.c.l.b16 %v1198
    %v1502 = vunpack.c.l.b16 %v1199
    %v1503 = vunpack.c.l.b16 %v1200
    %v1504 = vunpack.c.l.b16 %v1201
    %v1505 = vunpack.c.l.b16 %v1202
    %v1506 = vunpack.c.l.b16 %v1203
    %v1507 = vunpack.c.l.b16 %v1204
    %v1508 = vunpack.c.l.b16 %v1205
    %v1509 = vunpack.c.l.b16 %v1206
    %v1510 = vunpack.c.l.b16 %v1207
    %v1511 = vunpack.c.l.b16 %v1208
    %v1512 = vunpack.c.l.b16 %v1209
    %v1513 = vunpack.c.l.b16 %v1210
    %v1514 = vunpack.c.l.b16 %v1211
    %v1515 = vunpack.c.l.b16 %v1212
    %v1516 = vunpack.c.l.b16 %v1213
    %v1517 = vunpack.c.l.b16 %v1214
    %v1518 = vunpack.c.l.b16 %v1215
    %v1519 = vunpack.c.l.b16 %v1216
    %v1520 = vunpack.c.l.b16 %v1217
    %v1521 = vunpack.c.l.b16 %v1218
    %v1522 = vunpack.c.l.b16 %v1219
    %v1523 = vunpack.c.l.b16 %v1220
    %v1524 = vunpack.c.l.b16 %v1221
    %v1525 = vunpack.c.l.b16 %v1222
    %v1526 = vunpack.c.l.b16 %v1223
    %v1527 = vunpack.c.l.b16 %v1224
    %v1528 = vunpack.c.l.b16 %v1225
    %v1529 = vunpack.c.l.b16 %v1226
    %v1530 = vunpack.c.l.b16 %v1227
    %v1531 = vunpack.c.l.b16 %v1228
    %v1532 = vunpack.c.l.b16 %v1229
    %v1533 = vunpack.c.l.b16 %v1230
    %v1534 = vunpack.c.l.b16 %v1231
    %v1535 = vunpack.c.l.b16 %v1232
    %v1536 = vunpack.c.l.b16 %v1233
    %v1537 = vunpack.c.l.b16 %v1234
    %v1538 = vunpack.c.l.b16 %v1235
    %v1539 = vunpack.c.l.b16 %v1236
    %v1540 = vunpack.c.l.b16 %v1237
    %v1541 = vunpack.c.l.b16 %v1238
    %v1542 = vunpack.c.l.b16 %v1239
    %v1543 = vunpack.c.l.b16 %v1240
    %v1544 = vunpack.c.l.b16 %v1241
    %v1545 = vunpack.c.l.b16 %v1242
    %v1546 = vunpack.c.l.b16 %v1243
    %v1547 = vunpack.c.l.b16 %v1244
    %v1548 = vunpack.c.l.b16 %v1245
    %v1549 = vunpack.c.l.b16 %v1246
    %v1550 = vunpack.c.l.b16 %v1247
    %v1551 = vunpack.c.l.b16 %v1248
    %v1552 = vunpack.c.l.b16 %v1249
    %v1553 = vunpack.c.l.b16 %v1250
    %v1554 = vunpack.c.l.b16 %v1251
    %v1555 = vunpack.c.l.b16 %v1252
    %v1556 = vunpack.c.l.b16 %v1253
    %v1557 = vunpack.c.l.b16 %v1254
    %v1558 = vunpack.c.l.b16 %v1255
    %v1559 = vunpack.c.l.b16 %v1256
    %v1560 = vunpack.c.l.b16 %v1257
    %v1561 = vunpack.c.l.b16 %v1258
    %v1562 = vunpack.c.l.b16 %v1259
    %v1563 = vunpack.c.l.b16 %v1260
    %v1564 = vunpack.c.l.b16 %v1261
    %v1565 = vunpack.c.l.b16 %v1262
    %v1566 = vunpack.c.l.b16 %v1263
    %v1567 = vunpack.c.l.b16 %v1264
    %v1568 = vunpack.c.l.b16 %v1265
    %v1569 = vunpack.c.l.b16 %v1266
    %v1570 = vunpack.c.l.b16 %v1267
    %v1571 = vunpack.c.l.b16 %v1268
    %v1572 = vunpack.c.l.b16 %v1269
    %v1573 = vunpack.c.l.b16 %v1270
    %v1574 = vunpack.c.l.b16 %v1271
    %v1575 = vunpack.c.l.b16 %v1272
    %v1576 = vunpack.c.l.b16 %v1273
    %v1577 = vunpack.c.l.b16 %v1274
    %v1578 = vunpack.c.l.b16 %v1275
    %v1579 = vunpack.c.l.b16 %v1276
    %v1580 = vunpack.c.l.b16 %v1277
    %v1581 = vunpack.c.l.b16 %v1278
    %v1582 = vunpack.c.l.b16 %v1279
    %v1583 = vunpack.c.l.b16 %v1280
    %v1584 = vunpack.c.l.b16 %v1281
    %v1585 = vunpack.c.l.b16 %v1282
    %v1586 = vunpack.c.l.b16 %v1283
    %v1587 = vunpack.c.l.b16 %v1284
    %v1588 = vpack.c.b16 %v1461, %v1460
    %v1589 = vpack.c.b16 %v1463, %v1462
    %v1590 = vpack.c.b16 %v1465, %v1464
    %v1591 = vpack.c.b16 %v1467, %v1466
    %v1592 = vpack.c.b16 %v1469, %v1468
    %v1593 = vpack.c.b16 %v1471, %v1470
    %v1594 = vpack.c.b16 %v1473, %v1472
    %v1595 = vpack.c.b16 %v1475, %v1474
    %v1596 = vpack.c.b16 %v1477, %v1476
    %v1597 = vpack.c.b16 %v1479, %v1478
    %v1598 = vpack.c.b16 %v1481, %v1480
    %v1599 = vpack.c.b16 %v1483, %v1482
    %v1600 = vpack.c.b16 %v1485, %v1484
    %v1601 = vpack.c.b16 %v1487, %v1486
    %v1602 = vpack.c.b16 %v1489, %v1488
    %v1603 = vpack.c.b16 %v1491, %v1490
    %v1604 = vpack.c.b16 %v1493, %v1492
    %v1605 = vpack.c.b16 %v1495, %v1494
    %v1606 = vpack.c.b16 %v1497, %v1496
    %v1607 = vpack.c.b16 %v1499, %v1498
    %v1608 = vpack.c.b16 %v1501, %v1500
    %v1609 = vpack.c.b16 %v1503, %v1502
    %v1610 = vpack.c.b16 %v1505, %v1504
    %v1611 = vpack.c.b16 %v1507, %v1506
    %v1612 = vpack.c.b16 %v1509, %v1508
    %v1613 = vpack.c.b16 %v1511, %v1510
    %v1614 = vpack.c.b16 %v1513, %v1512
    %v1615 = vpack.c.b16 %v1515, %v1514
    %v1616 = vpack.c.b16 %v1517, %v1516
    %v1617 = vpack.c.b16 %v1519, %v1518
    %v1618 = vpack.c.b16 %v1521, %v1520
    %v1619 = vpack.c.b16 %v1523, %v1522
    %v1620 = vpack.c.b16 %v1525, %v1524
    %v1621 = vpack.c.b16 %v1527, %v1526
    %v1622 = vpack.c.b16 %v1529, %v1528
    %v1623 = vpack.c.b16 %v1531, %v1530
    %v1624 = vpack.c.b16 %v1533, %v1532
    %v1625 = vpack.c.b16 %v1535, %v1534
    %v1626 = vpack.c.b16 %v1537, %v1536
    %v1627 = vpack.c.b16 %v1539, %v1538
    %v1628 = vpack.c.b16 %v1541, %v1540
    %v1629 = vpack.c.b16 %v1543, %v1542
    %v1630 = vpack.c.b16 %v1545, %v1544
    %v1631 = vpack.c.b16 %v1547, %v1546
    %v1632 = vpack.c.b16 %v1549, %v1548
    %v1633 = vpack.c.b16 %v1551, %v1550
    %v1634 = vpack.c.b16 %v1553, %v1552
    %v1635 = vpack.c.b16 %v1555, %v1554
    %v1636 = vpack.c.b16 %v1557, %v1556
    %v1637 = vpack.c.b16 %v1559, %v1558
    %v1638 = vpack.c.b16 %v1561, %v1560
    %v1639 = vpack.c.b16 %v1563, %v1562
    %v1640 = vpack.c.b16 %v1565, %v1564
    %v1641 = vpack.c.b16 %v1567, %v1566
    %v1642 = vpack.c.b16 %v1569, %v1568
    %v1643 = vpack.c.b16 %v1571, %v1570
    %v1644 = vpack.c.b16 %v1573, %v1572
    %v1645 = vpack.c.b16 %v1575, %v1574
    %v1646 = vpack.c.b16 %v1577, %v1576
    %v1647 = vpack.c.b16 %v1579, %v1578
    %v1648 = vpack.c.b16 %v1581, %v1580
    %v1649 = vpack.c.b16 %v1583, %v1582
    %v1650 = vpack.c.b16 %v1585, %v1584
    %v1651 = vpack.c.b16 %v1587, %v1586
    %1716 = vmatprep.subr.bf16.mxu0 0
    %1717 = vmatpush1.bf16.msra.mxu0 %v1588
    %1718 = vmatprep.subr.bf16.mxu0 0
    %1719 = vmatpush1.bf16.msra.mxu0 %v1589
    %1720 = vmatprep.subr.bf16.mxu0 0
    %1721 = vmatpush1.bf16.msra.mxu0 %v1590
    %1722 = vmatprep.subr.bf16.mxu0 0
    %1723 = vmatpush1.bf16.msra.mxu0 %v1591
    %1724 = vmatprep.subr.bf16.mxu0 0
    %1725 = vmatpush1.bf16.msra.mxu0 %v1592
    %1726 = vmatprep.subr.bf16.mxu0 0
    %1727 = vmatpush1.bf16.msra.mxu0 %v1593
    %1728 = vmatprep.subr.bf16.mxu0 0
    %1729 = vmatpush1.bf16.msra.mxu0 %v1594
    %1730 = vmatprep.subr.bf16.mxu0 0
    %1731 = vmatpush1.bf16.msra.mxu0 %v1595
    %1732 = vmatprep.subr.bf16.mxu0 0
    %1733 = vmatpush1.bf16.msra.mxu0 %v1596
    %1734 = vmatprep.subr.bf16.mxu0 0
    %1735 = vmatpush1.bf16.msra.mxu0 %v1597
    %1736 = vmatprep.subr.bf16.mxu0 0
    %1737 = vmatpush1.bf16.msra.mxu0 %v1598
    %1738 = vmatprep.subr.bf16.mxu0 0
    %1739 = vmatpush1.bf16.msra.mxu0 %v1599
    %1740 = vmatprep.subr.bf16.mxu0 0
    %1741 = vmatpush1.bf16.msra.mxu0 %v1600
    %1742 = vmatprep.subr.bf16.mxu0 0
    %1743 = vmatpush1.bf16.msra.mxu0 %v1601
    %1744 = vmatprep.subr.bf16.mxu0 0
    %1745 = vmatpush1.bf16.msra.mxu0 %v1602
    %1746 = vmatprep.subr.bf16.mxu0 0
    %1747 = vmatpush1.bf16.msra.mxu0 %v1603
    %1748 = vmatprep.mubr.bf16.mxu0 %v1317
    %1749 = vmatmul.mubr.bf16.gmra.mrb[0].mxu0 %v1316
    %v1750 = vpop.f32.mrb[0].mxu0
    %v1751 = vadd.f32 %v1290, %v1750
    %v1752 = vpop.f32.mrb[0].mxu0
    %v1753 = vpop.f32.mrb[0].mxu0
    %v1754 = vadd.f32 %v1290, %v1753
    %v1755 = vpop.f32.mrb[0].mxu0
    %1756 = vdwg.mxu0
    %1757 = vmatprep.subr.bf16.mxu0 0
    %1758 = vmatpush1.bf16.msra.mxu0 %v1604
    %1759 = vmatprep.subr.bf16.mxu0 0
    %1760 = vmatpush1.bf16.msra.mxu0 %v1605
    %1761 = vmatprep.subr.bf16.mxu0 0
    %1762 = vmatpush1.bf16.msra.mxu0 %v1606
    %1763 = vmatprep.subr.bf16.mxu0 0
    %1764 = vmatpush1.bf16.msra.mxu0 %v1607
    %1765 = vmatprep.subr.bf16.mxu0 0
    %1766 = vmatpush1.bf16.msra.mxu0 %v1608
    %1767 = vmatprep.subr.bf16.mxu0 0
    %1768 = vmatpush1.bf16.msra.mxu0 %v1609
    %1769 = vmatprep.subr.bf16.mxu0 0
    %1770 = vmatpush1.bf16.msra.mxu0 %v1610
    %1771 = vmatprep.subr.bf16.mxu0 0
    %1772 = vmatpush1.bf16.msra.mxu0 %v1611
    %1773 = vmatprep.subr.bf16.mxu0 0
    %1774 = vmatpush1.bf16.msra.mxu0 %v1612
    %1775 = vmatprep.subr.bf16.mxu0 0
    %1776 = vmatpush1.bf16.msra.mxu0 %v1613
    %1777 = vmatprep.subr.bf16.mxu0 0
    %1778 = vmatpush1.bf16.msra.mxu0 %v1614
    %1779 = vmatprep.subr.bf16.mxu0 0
    %1780 = vmatpush1.bf16.msra.mxu0 %v1615
    %1781 = vmatprep.subr.bf16.mxu0 0
    %1782 = vmatpush1.bf16.msra.mxu0 %v1616
    %1783 = vmatprep.subr.bf16.mxu0 0
    %1784 = vmatpush1.bf16.msra.mxu0 %v1617
    %1785 = vmatprep.subr.bf16.mxu0 0
    %1786 = vmatpush1.bf16.msra.mxu0 %v1618
    %1787 = vmatprep.subr.bf16.mxu0 0
    %1788 = vmatpush1.bf16.msra.mxu0 %v1619
    %1789 = vmatprep.mubr.bf16.mxu0 %v1319
    %1790 = vmatmul.mubr.bf16.gmra.mrb[0].mxu0 %v1318
    %v1791 = vpop.f32.mrb[0].mxu0
    %v1792 = vadd.f32 %v1751, %v1791
    %v1793 = vpop.f32.mrb[0].mxu0
    %v1794 = vpop.f32.mrb[0].mxu0
    %v1795 = vadd.f32 %v1754, %v1794
    %v1796 = vpop.f32.mrb[0].mxu0
    %1797 = vdwg.mxu0
    %1798 = vmatprep.subr.bf16.mxu0 0
    %1799 = vmatpush1.bf16.msra.mxu0 %v1620
    %1800 = vmatprep.subr.bf16.mxu0 0
    %1801 = vmatpush1.bf16.msra.mxu0 %v1621
    %1802 = vmatprep.subr.bf16.mxu0 0
    %1803 = vmatpush1.bf16.msra.mxu0 %v1622
    %1804 = vmatprep.subr.bf16.mxu0 0
    %1805 = vmatpush1.bf16.msra.mxu0 %v1623
    %1806 = vmatprep.subr.bf16.mxu0 0
    %1807 = vmatpush1.bf16.msra.mxu0 %v1624
    %1808 = vmatprep.subr.bf16.mxu0 0
    %1809 = vmatpush1.bf16.msra.mxu0 %v1625
    %1810 = vmatprep.subr.bf16.mxu0 0
    %1811 = vmatpush1.bf16.msra.mxu0 %v1626
    %1812 = vmatprep.subr.bf16.mxu0 0
    %1813 = vmatpush1.bf16.msra.mxu0 %v1627
    %1814 = vmatprep.subr.bf16.mxu0 0
    %1815 = vmatpush1.bf16.msra.mxu0 %v1628
    %1816 = vmatprep.subr.bf16.mxu0 0
    %1817 = vmatpush1.bf16.msra.mxu0 %v1629
    %1818 = vmatprep.subr.bf16.mxu0 0
    %1819 = vmatpush1.bf16.msra.mxu0 %v1630
    %1820 = vmatprep.subr.bf16.mxu0 0
    %1821 = vmatpush1.bf16.msra.mxu0 %v1631
    %1822 = vmatprep.subr.bf16.mxu0 0
    %1823 = vmatpush1.bf16.msra.mxu0 %v1632
    %1824 = vmatprep.subr.bf16.mxu0 0
    %1825 = vmatpush1.bf16.msra.mxu0 %v1633
    %1826 = vmatprep.subr.bf16.mxu0 0
    %1827 = vmatpush1.bf16.msra.mxu0 %v1634
    %1828 = vmatprep.subr.bf16.mxu0 0
    %1829 = vmatpush1.bf16.msra.mxu0 %v1635
    %1830 = vmatprep.mubr.bf16.mxu0 %v1321
    %1831 = vmatmul.mubr.bf16.gmra.mrb[0].mxu0 %v1320
    %v1832 = vpop.f32.mrb[0].mxu0
    %v1833 = vadd.f32 %v1792, %v1832
    %v1834 = vpop.f32.mrb[0].mxu0
    %v1835 = vpop.f32.mrb[0].mxu0
    %v1836 = vadd.f32 %v1795, %v1835
    %v1837 = vpop.f32.mrb[0].mxu0
    %1838 = vdwg.mxu0
    %1839 = vmatprep.subr.bf16.mxu0 0
    %1840 = vmatpush1.bf16.msra.mxu0 %v1636
    %1841 = vmatprep.subr.bf16.mxu0 0
    %1842 = vmatpush1.bf16.msra.mxu0 %v1637
    %1843 = vmatprep.subr.bf16.mxu0 0
    %1844 = vmatpush1.bf16.msra.mxu0 %v1638
    %1845 = vmatprep.subr.bf16.mxu0 0
    %1846 = vmatpush1.bf16.msra.mxu0 %v1639
    %1847 = vmatprep.subr.bf16.mxu0 0
    %1848 = vmatpush1.bf16.msra.mxu0 %v1640
    %1849 = vmatprep.subr.bf16.mxu0 0
    %1850 = vmatpush1.bf16.msra.mxu0 %v1641
    %1851 = vmatprep.subr.bf16.mxu0 0
    %1852 = vmatpush1.bf16.msra.mxu0 %v1642
    %1853 = vmatprep.subr.bf16.mxu0 0
    %1854 = vmatpush1.bf16.msra.mxu0 %v1643
    %1855 = vmatprep.subr.bf16.mxu0 0
    %1856 = vmatpush1.bf16.msra.mxu0 %v1644
    %1857 = vmatprep.subr.bf16.mxu0 0
    %1858 = vmatpush1.bf16.msra.mxu0 %v1645
    %1859 = vmatprep.subr.bf16.mxu0 0
    %1860 = vmatpush1.bf16.msra.mxu0 %v1646
    %1861 = vmatprep.subr.bf16.mxu0 0
    %1862 = vmatpush1.bf16.msra.mxu0 %v1647
    %1863 = vmatprep.subr.bf16.mxu0 0
    %1864 = vmatpush1.bf16.msra.mxu0 %v1648
    %1865 = vmatprep.subr.bf16.mxu0 0
    %1866 = vmatpush1.bf16.msra.mxu0 %v1649
    %1867 = vmatprep.subr.bf16.mxu0 0
    %1868 = vmatpush1.bf16.msra.mxu0 %v1650
    %1869 = vmatprep.subr.bf16.mxu0 0
    %1870 = vmatpush1.bf16.msra.mxu0 %v1651
    %1871 = vmatprep.mubr.bf16.mxu0 %v1323
    %1872 = vmatmul.mubr.bf16.gmra.mrb[0].mxu0 %v1322
    %v1873 = vpop.f32.mrb[0].mxu0
    %v1874 = vadd.f32 %v1833, %v1873
    %v1875 = vpop.f32.mrb[0].mxu0
    %v1876 = vpop.f32.mrb[0].mxu0
    %v1877 = vadd.f32 %v1836, %v1876
    %v1878 = vpop.f32.mrb[0].mxu0
    %1879 = vdwg.mxu0
    %v1880 = vmax.f32 %v1874, 0.0
    %v1881 = vmax.f32 %v1877, 0.0
    %v1882 = vpack.c.bf16 %v1881, %v1880
    %v1883 = vld [vmem:[%s16] sm:$0xf]
    %v1884 = vld [vmem:[%s16 + $0x4] sm:$0xf]
    %v1885 = vld [vmem:[%s16 + $0x8] sm:$0xf]
    %v1886 = vld [vmem:[%s16 + $0xc] sm:$0xf]
    %v1887 = vld [vmem:[%s16 + $0x10] sm:$0xf]
    %v1888 = vld [vmem:[%s16 + $0x14] sm:$0xf]
    %v1889 = vld [vmem:[%s16 + $0x18] sm:$0xf]
    %v1890 = vld [vmem:[%s16 + $0x1c] sm:$0xf]
    %v1891 = vld [vmem:[%s16 + $0x20] sm:$0xf]
    %v1892 = vld [vmem:[%s16 + $0x24] sm:$0xf]
    %v1893 = vld [vmem:[%s16 + $0x28] sm:$0xf]
    %v1894 = vld [vmem:[%s16 + $0x2c] sm:$0xf]
    %v1895 = vld [vmem:[%s16 + $0x30] sm:$0xf]
    %v1896 = vld [vmem:[%s16 + $0x34] sm:$0xf]
    %v1897 = vld [vmem:[%s16 + $0x38] sm:$0xf]
    %v1898 = vld [vmem:[%s16 + $0x3c] sm:$0xf]
    %v1899 = vld [vmem:[#allocation13] sm:$0x1]
    %v1901 = vlaneseq
    %v1902 = vshrl.u32 %v1901, 7
    %v1903 = vsub.s32 0, %v1902
    %v1904 = vrot.slane %v1899, %v1903
    %v1922 = vunpack.c.l.b16 %v1883
    %v1923 = vunpack.c.l.b16 %v1884
    %v1924 = vunpack.c.l.b16 %v1885
    %v1925 = vunpack.c.l.b16 %v1886
    %v1926 = vunpack.c.l.b16 %v1887
    %v1927 = vunpack.c.l.b16 %v1888
    %v1928 = vunpack.c.l.b16 %v1889
    %v1929 = vunpack.c.l.b16 %v1890
    %v1930 = vunpack.c.l.b16 %v1891
    %v1931 = vunpack.c.l.b16 %v1892
    %v1932 = vunpack.c.l.b16 %v1893
    %v1933 = vunpack.c.l.b16 %v1894
    %v1934 = vunpack.c.l.b16 %v1895
    %v1935 = vunpack.c.l.b16 %v1896
    %v1936 = vunpack.c.l.b16 %v1897
    %v1937 = vunpack.c.l.b16 %v1898
    %v1938 = vpack.c.b16 %v1923, %v1922
    %v1939 = vpack.c.b16 %v1925, %v1924
    %v1940 = vpack.c.b16 %v1927, %v1926
    %v1941 = vpack.c.b16 %v1929, %v1928
    %v1942 = vpack.c.b16 %v1931, %v1930
    %v1943 = vpack.c.b16 %v1933, %v1932
    %v1944 = vpack.c.b16 %v1935, %v1934
    %v1945 = vpack.c.b16 %v1937, %v1936
    %1954 = vmatprep.subr.bf16.mxu0 0
    %1955 = vmatpush1.bf16.msra.mxu0 %v1938
    %1956 = vmatprep.subr.bf16.mxu0 0
    %1957 = vmatpush1.bf16.msra.mxu0 %v1939
    %1958 = vmatprep.subr.bf16.mxu0 0
    %1959 = vmatpush1.bf16.msra.mxu0 %v1940
    %1960 = vmatprep.subr.bf16.mxu0 0
    %1961 = vmatpush1.bf16.msra.mxu0 %v1941
    %1962 = vmatprep.subr.bf16.mxu0 0
    %1963 = vmatpush1.bf16.msra.mxu0 %v1942
    %1964 = vmatprep.subr.bf16.mxu0 0
    %1965 = vmatpush1.bf16.msra.mxu0 %v1943
    %1966 = vmatprep.subr.bf16.mxu0 0
    %1967 = vmatpush1.bf16.msra.mxu0 %v1944
    %1968 = vmatprep.subr.bf16.mxu0 0
    %1969 = vmatpush1.bf16.msra.mxu0 %v1945
    %1970 = vmatprep.subr.bf16.mxu0 0
    %1971 = vmatpush1.bf16.msra.mxu0 0
    %1972 = vmatprep.subr.bf16.mxu0 0
    %1973 = vmatpush1.bf16.msra.mxu0 0
    %1974 = vmatprep.subr.bf16.mxu0 0
    %1975 = vmatpush1.bf16.msra.mxu0 0
    %1976 = vmatprep.subr.bf16.mxu0 0
    %1977 = vmatpush1.bf16.msra.mxu0 0
    %1978 = vmatprep.subr.bf16.mxu0 0
    %1979 = vmatpush1.bf16.msra.mxu0 0
    %1980 = vmatprep.subr.bf16.mxu0 0
    %1981 = vmatpush1.bf16.msra.mxu0 0
    %1982 = vmatprep.subr.bf16.mxu0 0
    %1983 = vmatpush1.bf16.msra.mxu0 0
    %1984 = vmatprep.subr.bf16.mxu0 0
    %1985 = vmatpush1.bf16.msra.mxu0 0
    %1986 = vmatprep.mubr.bf16.mxu0 0
    %1987 = vmatmul.mubr.bf16.gmra.mrb[0].mxu0 %v1882
    %v1988 = vpop.f32.mrb[0].mxu0
    %v1989 = vadd.f32 %v1904, %v1988
    %v1990 = vpop.f32.mrb[0].mxu0
    %v1991 = vpop.f32.mrb[0].mxu0
    %v1992 = vadd.f32 %v1904, %v1991
    %v1993 = vpop.f32.mrb[0].mxu0
    %1994 = vdwg.mxu0
    %v1995 = vld [vmem:[%s18] sm:$0xf]
    %v1996 = vld [vmem:[%s18 + $0x4] sm:$0xf]
    %v1997 = vld [vmem:[%s18 + $0x8] sm:$0xf]
    %v1998 = vld [vmem:[%s18 + $0xc] sm:$0xf]
    %v1999 = vld [vmem:[%s18 + $0x10] sm:$0xf]
    %v2000 = vld [vmem:[%s18 + $0x14] sm:$0xf]
    %v2001 = vld [vmem:[%s18 + $0x18] sm:$0xf]
    %v2002 = vld [vmem:[%s18 + $0x1c] sm:$0xf]
    %v2003 = vld [vmem:[%s18 + $0x20] sm:$0xf]
    %v2004 = vld [vmem:[%s18 + $0x24] sm:$0xf]
    %v2005 = vld [vmem:[%s18 + $0x28] sm:$0xf]
    %v2006 = vld [vmem:[%s18 + $0x2c] sm:$0xf]
    %v2007 = vld [vmem:[%s18 + $0x30] sm:$0xf]
    %v2008 = vld [vmem:[%s18 + $0x34] sm:$0xf]
    %v2009 = vld [vmem:[%s18 + $0x38] sm:$0xf]
    %v2010 = vld [vmem:[%s18 + $0x3c] sm:$0xf]
    %v2011 = vld [vmem:[%s19] sm:$0x1]
    %v2013 = vlaneseq
    %v2014 = vshrl.u32 %v2013, 7
    %v2015 = vsub.s32 0, %v2014
    %v2016 = vrot.slane %v2011, %v2015
    %v2034 = vunpack.c.l.b16 %v1995
    %v2035 = vunpack.c.l.b16 %v1996
    %v2036 = vunpack.c.l.b16 %v1997
    %v2037 = vunpack.c.l.b16 %v1998
    %v2038 = vunpack.c.l.b16 %v1999
    %v2039 = vunpack.c.l.b16 %v2000
    %v2040 = vunpack.c.l.b16 %v2001
    %v2041 = vunpack.c.l.b16 %v2002
    %v2042 = vunpack.c.l.b16 %v2003
    %v2043 = vunpack.c.l.b16 %v2004
    %v2044 = vunpack.c.l.b16 %v2005
    %v2045 = vunpack.c.l.b16 %v2006
    %v2046 = vunpack.c.l.b16 %v2007
    %v2047 = vunpack.c.l.b16 %v2008
    %v2048 = vunpack.c.l.b16 %v2009
    %v2049 = vunpack.c.l.b16 %v2010
    %v2050 = vpack.c.b16 %v2035, %v2034
    %v2051 = vpack.c.b16 %v2037, %v2036
    %v2052 = vpack.c.b16 %v2039, %v2038
    %v2053 = vpack.c.b16 %v2041, %v2040
    %v2054 = vpack.c.b16 %v2043, %v2042
    %v2055 = vpack.c.b16 %v2045, %v2044
    %v2056 = vpack.c.b16 %v2047, %v2046
    %v2057 = vpack.c.b16 %v2049, %v2048
    %2066 = vmatprep.subr.bf16.mxu0 0
    %2067 = vmatpush1.bf16.msra.mxu0 %v2050
    %2068 = vmatprep.subr.bf16.mxu0 0
    %2069 = vmatpush1.bf16.msra.mxu0 %v2051
    %2070 = vmatprep.subr.bf16.mxu0 0
    %2071 = vmatpush1.bf16.msra.mxu0 %v2052
    %2072 = vmatprep.subr.bf16.mxu0 0
    %2073 = vmatpush1.bf16.msra.mxu0 %v2053
    %2074 = vmatprep.subr.bf16.mxu0 0
    %2075 = vmatpush1.bf16.msra.mxu0 %v2054
    %2076 = vmatprep.subr.bf16.mxu0 0
    %2077 = vmatpush1.bf16.msra.mxu0 %v2055
    %2078 = vmatprep.subr.bf16.mxu0 0
    %2079 = vmatpush1.bf16.msra.mxu0 %v2056
    %2080 = vmatprep.subr.bf16.mxu0 0
    %2081 = vmatpush1.bf16.msra.mxu0 %v2057
    %2082 = vmatprep.subr.bf16.mxu0 0
    %2083 = vmatpush1.bf16.msra.mxu0 0
    %2084 = vmatprep.subr.bf16.mxu0 0
    %2085 = vmatpush1.bf16.msra.mxu0 0
    %2086 = vmatprep.subr.bf16.mxu0 0
    %2087 = vmatpush1.bf16.msra.mxu0 0
    %2088 = vmatprep.subr.bf16.mxu0 0
    %2089 = vmatpush1.bf16.msra.mxu0 0
    %2090 = vmatprep.subr.bf16.mxu0 0
    %2091 = vmatpush1.bf16.msra.mxu0 0
    %2092 = vmatprep.subr.bf16.mxu0 0
    %2093 = vmatpush1.bf16.msra.mxu0 0
    %2094 = vmatprep.subr.bf16.mxu0 0
    %2095 = vmatpush1.bf16.msra.mxu0 0
    %2096 = vmatprep.subr.bf16.mxu0 0
    %2097 = vmatpush1.bf16.msra.mxu0 0
    %2098 = vmatprep.mubr.bf16.mxu0 0
    %2099 = vmatmul.mubr.bf16.gmra.mrb[0].mxu0 %v1882
    %v2100 = vpop.f32.mrb[0].mxu0
    %v2101 = vadd.f32 %v2016, %v2100
    %v2102 = vpop.f32.mrb[0].mxu0
    %v2103 = vpop.f32.mrb[0].mxu0
    %v2104 = vadd.f32 %v2016, %v2103
    %v2105 = vpop.f32.mrb[0].mxu0
    %2106 = vdwg.mxu0
    %v2107 = vmul.f32 %v2101, 0.5
    %v2108 = vmul.f32 %v2104, 0.5
    %v2109 = vmul.f32 %v2107, 1.442695
    %v2110 = vpow.pop %v2109
    %v2111 = vmul.f32 %v2108, 1.442695
    %v2112 = vpow.pop %v2111
    %v2113 = vld [vmem:[%s3] sm:$0xff]
    %v2114 = vld [vmem:[%s3 + $0x8] sm:$0xff]
    %v2115 = vmul.f32 %v2110, %v2113
    %v2116 = vmul.f32 %v2112, %v2114
    %v2117 = vadd.f32 %v1989, %v2115
    %v2118 = vadd.f32 %v1992, %v2116
    %vm2119 = vcmask 261120
    %2120 = vst.msk [vmem:[%s26] sm:$0xff] %vm2119, %v1147
    %2121 = vst.msk [vmem:[%s26 + $0x8] sm:$0xff] %vm2119, %v1148
    %2122 = vst.msk [vmem:[%s27] sm:$0xff] %vm2119, %v2117
    %2123 = vst.msk [vmem:[%s27 + $0x8] sm:$0xff] %vm2119, %v2118
    %2124 = vst.msk [vmem:[#allocation2] sm:$0xff] %vm2119, %v1147
    %2125 = vst.msk [vmem:[#allocation2 + $0x8] sm:$0xff] %vm2119, %v1148
    %2126 = vst.msk [vmem:[#allocation2 + $0x10] sm:$0xff] %vm2119, %v2117
    %2127 = vst.msk [vmem:[#allocation2 + $0x18] sm:$0xff] %vm2119, %v2118
    %v2128 = vld [vmem:[#allocation2] sm:$0xff]
    %v2129 = vld [vmem:[#allocation2 + $0x8] sm:$0xff]
    %v2130 = vld [vmem:[#allocation2 + $0x10] sm:$0xff]
    %v2131 = vld [vmem:[#allocation2 + $0x18] sm:$0xff]
    %v2132 = vpack.c.bf16 %v2129, %v2128
    %v2133 = vpack.c.bf16 %v2131, %v2130
    %v2134 = vld [vmem:[%s10] sm:$0xf]
    %v2135 = vld [vmem:[%s10 + $0x4] sm:$0xf]
    %v2136 = vld [vmem:[%s10 + $0x8] sm:$0xf]
    %v2137 = vld [vmem:[%s10 + $0xc] sm:$0xf]
    %v2138 = vld [vmem:[#allocation7] sm:$0x1]
    %v2140 = vlaneseq
    %v2141 = vshrl.u32 %v2140, 7
    %v2142 = vsub.s32 0, %v2141
    %v2143 = vrot.slane %v2138, %v2142
    %v2149 = vunpack.c.l.b16 %v2134
    %v2150 = vunpack.c.l.b16 %v2135
    %v2151 = vunpack.c.l.b16 %v2136
    %v2152 = vunpack.c.l.b16 %v2137
    %v2153 = vpack.c.b16 %v2150, %v2149
    %v2154 = vpack.c.b16 %v2152, %v2151
    %v2158 = vsel %vm2119, %v2132, 0
    %v2161 = vsel %vm2119, %v2133, 0
    %2163 = vmatprep.subr.bf16.mxu0 0
    %2164 = vmatpush1.bf16.msra.mxu0 %v2153
    %2165 = vmatprep.subr.bf16.mxu0 0
    %2166 = vmatpush1.bf16.msra.mxu0 %v2154
    %2167 = vmatprep.subr.bf16.mxu0 0
    %2168 = vmatpush1.bf16.msra.mxu0 0
    %2169 = vmatprep.subr.bf16.mxu0 0
    %2170 = vmatpush1.bf16.msra.mxu0 0
    %2171 = vmatprep.subr.bf16.mxu0 0
    %2172 = vmatpush1.bf16.msra.mxu0 0
    %2173 = vmatprep.subr.bf16.mxu0 0
    %2174 = vmatpush1.bf16.msra.mxu0 0
    %2175 = vmatprep.subr.bf16.mxu0 0
    %2176 = vmatpush1.bf16.msra.mxu0 0
    %2177 = vmatprep.subr.bf16.mxu0 0
    %2178 = vmatpush1.bf16.msra.mxu0 0
    %2179 = vmatprep.subr.bf16.mxu0 0
    %2180 = vmatpush1.bf16.msra.mxu0 0
    %2181 = vmatprep.subr.bf16.mxu0 0
    %2182 = vmatpush1.bf16.msra.mxu0 0
    %2183 = vmatprep.subr.bf16.mxu0 0
    %2184 = vmatpush1.bf16.msra.mxu0 0
    %2185 = vmatprep.subr.bf16.mxu0 0
    %2186 = vmatpush1.bf16.msra.mxu0 0
    %2187 = vmatprep.subr.bf16.mxu0 0
    %2188 = vmatpush1.bf16.msra.mxu0 0
    %2189 = vmatprep.subr.bf16.mxu0 0
    %2190 = vmatpush1.bf16.msra.mxu0 0
    %2191 = vmatprep.subr.bf16.mxu0 0
    %2192 = vmatpush1.bf16.msra.mxu0 0
    %2193 = vmatprep.subr.bf16.mxu0 0
    %2194 = vmatpush1.bf16.msra.mxu0 0
    %2195 = vmatprep.mubr.bf16.mxu0 0
    %2196 = vmatmul.mubr.bf16.gmra.mrb[0].mxu0 %v2158
    %v2197 = vpop.f32.mrb[0].mxu0
    %v2198 = vadd.f32 %v2143, %v2197
    %v2199 = vpop.f32.mrb[0].mxu0
    %v2200 = vpop.f32.mrb[0].mxu0
    %v2201 = vadd.f32 %v2143, %v2200
    %v2202 = vpop.f32.mrb[0].mxu0
    %2203 = vmatprep.mubr.bf16.mxu0 0
    %2204 = vmatmul.mubr.bf16.gmra.mrb[0].mxu0 %v2161
    %v2205 = vpop.f32.mrb[0].mxu0
    %v2206 = vadd.f32 %v2143, %v2205
    %v2207 = vpop.f32.mrb[0].mxu0
    %v2208 = vpop.f32.mrb[0].mxu0
    %v2209 = vadd.f32 %v2143, %v2208
    %v2210 = vpop.f32.mrb[0].mxu0
    %2211 = vdwg.mxu0
    %v2212 = vmax.f32 %v2198, 0.0
    %v2213 = vmax.f32 %v2201, 0.0
    %v2214 = vmax.f32 %v2206, 0.0
    %v2215 = vmax.f32 %v2209, 0.0
    %v2216 = vpack.c.bf16 %v2213, %v2212
    %v2217 = vpack.c.bf16 %v2215, %v2214
    %v2218 = vld [vmem:[%s12] sm:$0xff]
    %v2219 = vld [vmem:[%s12 + $0x8] sm:$0xff]
    %v2220 = vld [vmem:[%s12 + $0x10] sm:$0xff]
    %v2221 = vld [vmem:[%s12 + $0x18] sm:$0xff]
    %v2222 = vld [vmem:[%s12 + $0x20] sm:$0xff]
    %v2223 = vld [vmem:[%s12 + $0x28] sm:$0xff]
    %v2224 = vld [vmem:[%s12 + $0x30] sm:$0xff]
    %v2225 = vld [vmem:[%s12 + $0x38] sm:$0xff]
    %v2226 = vld [vmem:[%s12 + $0x40] sm:$0xff]
    %v2227 = vld [vmem:[%s12 + $0x48] sm:$0xff]
    %v2228 = vld [vmem:[%s12 + $0x50] sm:$0xff]
    %v2229 = vld [vmem:[%s12 + $0x58] sm:$0xff]
    %v2230 = vld [vmem:[%s12 + $0x60] sm:$0xff]
    %v2231 = vld [vmem:[%s12 + $0x68] sm:$0xff]
    %v2232 = vld [vmem:[%s12 + $0x70] sm:$0xff]
    %v2233 = vld [vmem:[%s12 + $0x78] sm:$0xff]
    %v2234 = vld [vmem:[%s12 + $0x80] sm:$0xff]
    %v2235 = vld [vmem:[%s12 + $0x88] sm:$0xff]
    %v2236 = vld [vmem:[%s12 + $0x90] sm:$0xff]
    %v2237 = vld [vmem:[%s12 + $0x98] sm:$0xff]
    %v2238 = vld [vmem:[%s12 + $0xa0] sm:$0xff]
    %v2239 = vld [vmem:[%s12 + $0xa8] sm:$0xff]
    %v2240 = vld [vmem:[%s12 + $0xb0] sm:$0xff]
    %v2241 = vld [vmem:[%s12 + $0xb8] sm:$0xff]
    %v2242 = vld [vmem:[%s12 + $0xc0] sm:$0xff]
    %v2243 = vld [vmem:[%s12 + $0xc8] sm:$0xff]
    %v2244 = vld [vmem:[%s12 + $0xd0] sm:$0xff]
    %v2245 = vld [vmem:[%s12 + $0xd8] sm:$0xff]
    %v2246 = vld [vmem:[%s12 + $0xe0] sm:$0xff]
    %v2247 = vld [vmem:[%s12 + $0xe8] sm:$0xff]
    %v2248 = vld [vmem:[%s12 + $0xf0] sm:$0xff]
    %v2249 = vld [vmem:[%s12 + $0xf8] sm:$0xff]
    %v2250 = vld [vmem:[%s12 + $0x100] sm:$0xff]
    %v2251 = vld [vmem:[%s12 + $0x108] sm:$0xff]
    %v2252 = vld [vmem:[%s12 + $0x110] sm:$0xff]
    %v2253 = vld [vmem:[%s12 + $0x118] sm:$0xff]
    %v2254 = vld [vmem:[%s12 + $0x120] sm:$0xff]
    %v2255 = vld [vmem:[%s12 + $0x128] sm:$0xff]
    %v2256 = vld [vmem:[%s12 + $0x130] sm:$0xff]
    %v2257 = vld [vmem:[%s12 + $0x138] sm:$0xff]
    %v2258 = vld [vmem:[%s12 + $0x140] sm:$0xff]
    %v2259 = vld [vmem:[%s12 + $0x148] sm:$0xff]
    %v2260 = vld [vmem:[%s12 + $0x150] sm:$0xff]
    %v2261 = vld [vmem:[%s12 + $0x158] sm:$0xff]
    %v2262 = vld [vmem:[%s12 + $0x160] sm:$0xff]
    %v2263 = vld [vmem:[%s12 + $0x168] sm:$0xff]
    %v2264 = vld [vmem:[%s12 + $0x170] sm:$0xff]
    %v2265 = vld [vmem:[%s12 + $0x178] sm:$0xff]
    %v2266 = vld [vmem:[%s12 + $0x180] sm:$0xff]
    %v2267 = vld [vmem:[%s12 + $0x188] sm:$0xff]
    %v2268 = vld [vmem:[%s12 + $0x190] sm:$0xff]
    %v2269 = vld [vmem:[%s12 + $0x198] sm:$0xff]
    %v2270 = vld [vmem:[%s12 + $0x1a0] sm:$0xff]
    %v2271 = vld [vmem:[%s12 + $0x1a8] sm:$0xff]
    %v2272 = vld [vmem:[%s12 + $0x1b0] sm:$0xff]
    %v2273 = vld [vmem:[%s12 + $0x1b8] sm:$0xff]
    %v2274 = vld [vmem:[%s12 + $0x1c0] sm:$0xff]
    %v2275 = vld [vmem:[%s12 + $0x1c8] sm:$0xff]
    %v2276 = vld [vmem:[%s12 + $0x1d0] sm:$0xff]
    %v2277 = vld [vmem:[%s12 + $0x1d8] sm:$0xff]
    %v2278 = vld [vmem:[%s12 + $0x1e0] sm:$0xff]
    %v2279 = vld [vmem:[%s12 + $0x1e8] sm:$0xff]
    %v2280 = vld [vmem:[%s12 + $0x1f0] sm:$0xff]
    %v2281 = vld [vmem:[%s12 + $0x1f8] sm:$0xff]
    %v2282 = vld [vmem:[#allocation8] sm:$0xff]
    %v2284 = vlaneseq
    %v2285 = vshrl.u32 %v2284, 7
    %v2286 = vsub.s32 0, %v2285
    %v2287 = vrot.slane %v2282, %v2286
    %v2288 = vlaneseq
    %v2289 = vshrl.u32 %v2288, 7
    %v2290 = vsub.s32 1, %v2289
    %v2291 = vrot.slane %v2282, %v2290
    %v2292 = vlaneseq
    %v2293 = vshrl.u32 %v2292, 7
    %v2294 = vsub.s32 2, %v2293
    %v2295 = vrot.slane %v2282, %v2294
    %v2296 = vlaneseq
    %v2297 = vshrl.u32 %v2296, 7
    %v2298 = vsub.s32 3, %v2297
    %v2299 = vrot.slane %v2282, %v2298
    %v2300 = vlaneseq
    %v2301 = vshrl.u32 %v2300, 7
    %v2302 = vsub.s32 4, %v2301
    %v2303 = vrot.slane %v2282, %v2302
    %v2304 = vlaneseq
    %v2305 = vshrl.u32 %v2304, 7
    %v2306 = vsub.s32 5, %v2305
    %v2307 = vrot.slane %v2282, %v2306
    %v2308 = vlaneseq
    %v2309 = vshrl.u32 %v2308, 7
    %v2310 = vsub.s32 6, %v2309
    %v2311 = vrot.slane %v2282, %v2310
    %v2312 = vlaneseq
    %v2313 = vshrl.u32 %v2312, 7
    %v2314 = vsub.s32 7, %v2313
    %v2315 = vrot.slane %v2282, %v2314
    %v2388 = vunpack.c.l.b16 %v2218
    %v2389 = vunpack.c.h.b16 %v2218
    %v2390 = vunpack.c.l.b16 %v2219
    %v2391 = vunpack.c.h.b16 %v2219
    %v2392 = vunpack.c.l.b16 %v2220
    %v2393 = vunpack.c.h.b16 %v2220
    %v2394 = vunpack.c.l.b16 %v2221
    %v2395 = vunpack.c.h.b16 %v2221
    %v2396 = vunpack.c.l.b16 %v2222
    %v2397 = vunpack.c.h.b16 %v2222
    %v2398 = vunpack.c.l.b16 %v2223
    %v2399 = vunpack.c.h.b16 %v2223
    %v2400 = vunpack.c.l.b16 %v2224
    %v2401 = vunpack.c.h.b16 %v2224
    %v2402 = vunpack.c.l.b16 %v2225
    %v2403 = vunpack.c.h.b16 %v2225
    %v2404 = vunpack.c.l.b16 %v2226
    %v2405 = vunpack.c.h.b16 %v2226
    %v2406 = vunpack.c.l.b16 %v2227
    %v2407 = vunpack.c.h.b16 %v2227
    %v2408 = vunpack.c.l.b16 %v2228
    %v2409 = vunpack.c.h.b16 %v2228
    %v2410 = vunpack.c.l.b16 %v2229
    %v2411 = vunpack.c.h.b16 %v2229
    %v2412 = vunpack.c.l.b16 %v2230
    %v2413 = vunpack.c.h.b16 %v2230
    %v2414 = vunpack.c.l.b16 %v2231
    %v2415 = vunpack.c.h.b16 %v2231
    %v2416 = vunpack.c.l.b16 %v2232
    %v2417 = vunpack.c.h.b16 %v2232
    %v2418 = vunpack.c.l.b16 %v2233
    %v2419 = vunpack.c.h.b16 %v2233
    %v2420 = vunpack.c.l.b16 %v2234
    %v2421 = vunpack.c.h.b16 %v2234
    %v2422 = vunpack.c.l.b16 %v2235
    %v2423 = vunpack.c.h.b16 %v2235
    %v2424 = vunpack.c.l.b16 %v2236
    %v2425 = vunpack.c.h.b16 %v2236
    %v2426 = vunpack.c.l.b16 %v2237
    %v2427 = vunpack.c.h.b16 %v2237
    %v2428 = vunpack.c.l.b16 %v2238
    %v2429 = vunpack.c.h.b16 %v2238
    %v2430 = vunpack.c.l.b16 %v2239
    %v2431 = vunpack.c.h.b16 %v2239
    %v2432 = vunpack.c.l.b16 %v2240
    %v2433 = vunpack.c.h.b16 %v2240
    %v2434 = vunpack.c.l.b16 %v2241
    %v2435 = vunpack.c.h.b16 %v2241
    %v2436 = vunpack.c.l.b16 %v2242
    %v2437 = vunpack.c.h.b16 %v2242
    %v2438 = vunpack.c.l.b16 %v2243
    %v2439 = vunpack.c.h.b16 %v2243
    %v2440 = vunpack.c.l.b16 %v2244
    %v2441 = vunpack.c.h.b16 %v2244
    %v2442 = vunpack.c.l.b16 %v2245
    %v2443 = vunpack.c.h.b16 %v2245
    %v2444 = vunpack.c.l.b16 %v2246
    %v2445 = vunpack.c.h.b16 %v2246
    %v2446 = vunpack.c.l.b16 %v2247
    %v2447 = vunpack.c.h.b16 %v2247
    %v2448 = vunpack.c.l.b16 %v2248
    %v2449 = vunpack.c.h.b16 %v2248
    %v2450 = vunpack.c.l.b16 %v2249
    %v2451 = vunpack.c.h.b16 %v2249
    %v2452 = vunpack.c.l.b16 %v2250
    %v2453 = vunpack.c.h.b16 %v2250
    %v2454 = vunpack.c.l.b16 %v2251
    %v2455 = vunpack.c.h.b16 %v2251
    %v2456 = vunpack.c.l.b16 %v2252
    %v2457 = vunpack.c.h.b16 %v2252
    %v2458 = vunpack.c.l.b16 %v2253
    %v2459 = vunpack.c.h.b16 %v2253
    %v2460 = vunpack.c.l.b16 %v2254
    %v2461 = vunpack.c.h.b16 %v2254
    %v2462 = vunpack.c.l.b16 %v2255
    %v2463 = vunpack.c.h.b16 %v2255
    %v2464 = vunpack.c.l.b16 %v2256
    %v2465 = vunpack.c.h.b16 %v2256
    %v2466 = vunpack.c.l.b16 %v2257
    %v2467 = vunpack.c.h.b16 %v2257
    %v2468 = vunpack.c.l.b16 %v2258
    %v2469 = vunpack.c.h.b16 %v2258
    %v2470 = vunpack.c.l.b16 %v2259
    %v2471 = vunpack.c.h.b16 %v2259
    %v2472 = vunpack.c.l.b16 %v2260
    %v2473 = vunpack.c.h.b16 %v2260
    %v2474 = vunpack.c.l.b16 %v2261
    %v2475 = vunpack.c.h.b16 %v2261
    %v2476 = vunpack.c.l.b16 %v2262
    %v2477 = vunpack.c.h.b16 %v2262
    %v2478 = vunpack.c.l.b16 %v2263
    %v2479 = vunpack.c.h.b16 %v2263
    %v2480 = vunpack.c.l.b16 %v2264
    %v2481 = vunpack.c.h.b16 %v2264
    %v2482 = vunpack.c.l.b16 %v2265
    %v2483 = vunpack.c.h.b16 %v2265
    %v2484 = vunpack.c.l.b16 %v2266
    %v2485 = vunpack.c.h.b16 %v2266
    %v2486 = vunpack.c.l.b16 %v2267
    %v2487 = vunpack.c.h.b16 %v2267
    %v2488 = vunpack.c.l.b16 %v2268
    %v2489 = vunpack.c.h.b16 %v2268
    %v2490 = vunpack.c.l.b16 %v2269
    %v2491 = vunpack.c.h.b16 %v2269
    %v2492 = vunpack.c.l.b16 %v2270
    %v2493 = vunpack.c.h.b16 %v2270
    %v2494 = vunpack.c.l.b16 %v2271
    %v2495 = vunpack.c.h.b16 %v2271
    %v2496 = vunpack.c.l.b16 %v2272
    %v2497 = vunpack.c.h.b16 %v2272
    %v2498 = vunpack.c.l.b16 %v2273
    %v2499 = vunpack.c.h.b16 %v2273
    %v2500 = vunpack.c.l.b16 %v2274
    %v2501 = vunpack.c.h.b16 %v2274
    %v2502 = vunpack.c.l.b16 %v2275
    %v2503 = vunpack.c.h.b16 %v2275
    %v2504 = vunpack.c.l.b16 %v2276
    %v2505 = vunpack.c.h.b16 %v2276
    %v2506 = vunpack.c.l.b16 %v2277
    %v2507 = vunpack.c.h.b16 %v2277
    %v2508 = vunpack.c.l.b16 %v2278
    %v2509 = vunpack.c.h.b16 %v2278
    %v2510 = vunpack.c.l.b16 %v2279
    %v2511 = vunpack.c.h.b16 %v2279
    %v2512 = vunpack.c.l.b16 %v2280
    %v2513 = vunpack.c.h.b16 %v2280
    %v2514 = vunpack.c.l.b16 %v2281
    %v2515 = vunpack.c.h.b16 %v2281
    %v2516 = vpack.c.b16 %v2396, %v2388
    %v2517 = vpack.c.b16 %v2397, %v2389
    %v2518 = vpack.c.b16 %v2398, %v2390
    %v2519 = vpack.c.b16 %v2399, %v2391
    %v2520 = vpack.c.b16 %v2400, %v2392
    %v2521 = vpack.c.b16 %v2401, %v2393
    %v2522 = vpack.c.b16 %v2402, %v2394
    %v2523 = vpack.c.b16 %v2403, %v2395
    %v2524 = vpack.c.b16 %v2412, %v2404
    %v2525 = vpack.c.b16 %v2413, %v2405
    %v2526 = vpack.c.b16 %v2414, %v2406
    %v2527 = vpack.c.b16 %v2415, %v2407
    %v2528 = vpack.c.b16 %v2416, %v2408
    %v2529 = vpack.c.b16 %v2417, %v2409
    %v2530 = vpack.c.b16 %v2418, %v2410
    %v2531 = vpack.c.b16 %v2419, %v2411
    %v2532 = vpack.c.b16 %v2428, %v2420
    %v2533 = vpack.c.b16 %v2429, %v2421
    %v2534 = vpack.c.b16 %v2430, %v2422
    %v2535 = vpack.c.b16 %v2431, %v2423
    %v2536 = vpack.c.b16 %v2432, %v2424
    %v2537 = vpack.c.b16 %v2433, %v2425
    %v2538 = vpack.c.b16 %v2434, %v2426
    %v2539 = vpack.c.b16 %v2435, %v2427
    %v2540 = vpack.c.b16 %v2444, %v2436
    %v2541 = vpack.c.b16 %v2445, %v2437
    %v2542 = vpack.c.b16 %v2446, %v2438
    %v2543 = vpack.c.b16 %v2447, %v2439
    %v2544 = vpack.c.b16 %v2448, %v2440
    %v2545 = vpack.c.b16 %v2449, %v2441
    %v2546 = vpack.c.b16 %v2450, %v2442
    %v2547 = vpack.c.b16 %v2451, %v2443
    %v2548 = vpack.c.b16 %v2460, %v2452
    %v2549 = vpack.c.b16 %v2461, %v2453
    %v2550 = vpack.c.b16 %v2462, %v2454
    %v2551 = vpack.c.b16 %v2463, %v2455
    %v2552 = vpack.c.b16 %v2464, %v2456
    %v2553 = vpack.c.b16 %v2465, %v2457
    %v2554 = vpack.c.b16 %v2466, %v2458
    %v2555 = vpack.c.b16 %v2467, %v2459
    %v2556 = vpack.c.b16 %v2476, %v2468
    %v2557 = vpack.c.b16 %v2477, %v2469
    %v2558 = vpack.c.b16 %v2478, %v2470
    %v2559 = vpack.c.b16 %v2479, %v2471
    %v2560 = vpack.c.b16 %v2480, %v2472
    %v2561 = vpack.c.b16 %v2481, %v2473
    %v2562 = vpack.c.b16 %v2482, %v2474
    %v2563 = vpack.c.b16 %v2483, %v2475
    %v2564 = vpack.c.b16 %v2492, %v2484
    %v2565 = vpack.c.b16 %v2493, %v2485
    %v2566 = vpack.c.b16 %v2494, %v2486
    %v2567 = vpack.c.b16 %v2495, %v2487
    %v2568 = vpack.c.b16 %v2496, %v2488
    %v2569 = vpack.c.b16 %v2497, %v2489
    %v2570 = vpack.c.b16 %v2498, %v2490
    %v2571 = vpack.c.b16 %v2499, %v2491
    %v2572 = vpack.c.b16 %v2508, %v2500
    %v2573 = vpack.c.b16 %v2509, %v2501
    %v2574 = vpack.c.b16 %v2510, %v2502
    %v2575 = vpack.c.b16 %v2511, %v2503
    %v2576 = vpack.c.b16 %v2512, %v2504
    %v2577 = vpack.c.b16 %v2513, %v2505
    %v2578 = vpack.c.b16 %v2514, %v2506
    %v2579 = vpack.c.b16 %v2515, %v2507
    %2644 = vmatprep.subr.bf16.mxu0 %v2517
    %2645 = vmatpush1.bf16.msra.mxu0 %v2516
    %2646 = vmatprep.subr.bf16.mxu0 %v2525
    %2647 = vmatpush1.bf16.msra.mxu0 %v2524
    %2648 = vmatprep.subr.bf16.mxu0 %v2533
    %2649 = vmatpush1.bf16.msra.mxu0 %v2532
    %2650 = vmatprep.subr.bf16.mxu0 %v2541
    %2651 = vmatpush1.bf16.msra.mxu0 %v2540
    %2652 = vmatprep.subr.bf16.mxu0 %v2549
    %2653 = vmatpush1.bf16.msra.mxu0 %v2548
    %2654 = vmatprep.subr.bf16.mxu0 %v2557
    %2655 = vmatpush1.bf16.msra.mxu0 %v2556
    %2656 = vmatprep.subr.bf16.mxu0 %v2565
    %2657 = vmatpush1.bf16.msra.mxu0 %v2564
    %2658 = vmatprep.subr.bf16.mxu0 %v2573
    %2659 = vmatpush1.bf16.msra.mxu0 %v2572
    %2660 = vmatprep.subr.bf16.mxu0 0
    %2661 = vmatpush1.bf16.msra.mxu0 0
    %2662 = vmatprep.subr.bf16.mxu0 0
    %2663 = vmatpush1.bf16.msra.mxu0 0
    %2664 = vmatprep.subr.bf16.mxu0 0
    %2665 = vmatpush1.bf16.msra.mxu0 0
    %2666 = vmatprep.subr.bf16.mxu0 0
    %2667 = vmatpush1.bf16.msra.mxu0 0
    %2668 = vmatprep.subr.bf16.mxu0 0
    %2669 = vmatpush1.bf16.msra.mxu0 0
    %2670 = vmatprep.subr.bf16.mxu0 0
    %2671 = vmatpush1.bf16.msra.mxu0 0
    %2672 = vmatprep.subr.bf16.mxu0 0
    %2673 = vmatpush1.bf16.msra.mxu0 0
    %2674 = vmatprep.subr.bf16.mxu0 0
    %2675 = vmatpush1.bf16.msra.mxu0 0
    %2676 = vmatprep.mubr.bf16.mxu0 0
    %2677 = vmatmul.mubr.bf16.gmra.mrb[0].mxu0 %v2216
    %v2678 = vpop.f32.mrb[0].mxu0
    %v2679 = vadd.f32 %v2287, %v2678
    %v2680 = vpop.f32.mrb[0].mxu0
    %v2681 = vadd.f32 %v2291, %v2680
    %v2682 = vpop.f32.mrb[0].mxu0
    %v2683 = vadd.f32 %v2287, %v2682
    %v2684 = vpop.f32.mrb[0].mxu0
    %v2685 = vadd.f32 %v2291, %v2684
    %2686 = vmatprep.mubr.bf16.mxu0 0
    %2687 = vmatmul.mubr.bf16.gmra.mrb[0].mxu0 %v2217
    %v2688 = vpop.f32.mrb[0].mxu0
    %v2689 = vadd.f32 %v2287, %v2688
    %v2690 = vpop.f32.mrb[0].mxu0
    %v2691 = vadd.f32 %v2291, %v2690
    %v2692 = vpop.f32.mrb[0].mxu0
    %v2693 = vadd.f32 %v2287, %v2692
    %v2694 = vpop.f32.mrb[0].mxu0
    %v2695 = vadd.f32 %v2291, %v2694
    %2696 = vdwg.mxu0
    %2697 = vmatprep.subr.bf16.mxu0 %v2519
    %2698 = vmatpush1.bf16.msra.mxu0 %v2518
    %2699 = vmatprep.subr.bf16.mxu0 %v2527
    %2700 = vmatpush1.bf16.msra.mxu0 %v2526
    %2701 = vmatprep.subr.bf16.mxu0 %v2535
    %2702 = vmatpush1.bf16.msra.mxu0 %v2534
    %2703 = vmatprep.subr.bf16.mxu0 %v2543
    %2704 = vmatpush1.bf16.msra.mxu0 %v2542
    %2705 = vmatprep.subr.bf16.mxu0 %v2551
    %2706 = vmatpush1.bf16.msra.mxu0 %v2550
    %2707 = vmatprep.subr.bf16.mxu0 %v2559
    %2708 = vmatpush1.bf16.msra.mxu0 %v2558
    %2709 = vmatprep.subr.bf16.mxu0 %v2567
    %2710 = vmatpush1.bf16.msra.mxu0 %v2566
    %2711 = vmatprep.subr.bf16.mxu0 %v2575
    %2712 = vmatpush1.bf16.msra.mxu0 %v2574
    %2713 = vmatprep.subr.bf16.mxu0 0
    %2714 = vmatpush1.bf16.msra.mxu0 0
    %2715 = vmatprep.subr.bf16.mxu0 0
    %2716 = vmatpush1.bf16.msra.mxu0 0
    %2717 = vmatprep.subr.bf16.mxu0 0
    %2718 = vmatpush1.bf16.msra.mxu0 0
    %2719 = vmatprep.subr.bf16.mxu0 0
    %2720 = vmatpush1.bf16.msra.mxu0 0
    %2721 = vmatprep.subr.bf16.mxu0 0
    %2722 = vmatpush1.bf16.msra.mxu0 0
    %2723 = vmatprep.subr.bf16.mxu0 0
    %2724 = vmatpush1.bf16.msra.mxu0 0
    %2725 = vmatprep.subr.bf16.mxu0 0
    %2726 = vmatpush1.bf16.msra.mxu0 0
    %2727 = vmatprep.subr.bf16.mxu0 0
    %2728 = vmatpush1.bf16.msra.mxu0 0
    %2729 = vmatprep.mubr.bf16.mxu0 0
    %2730 = vmatmul.mubr.bf16.gmra.mrb[0].mxu0 %v2216
    %v2731 = vpop.f32.mrb[0].mxu0
    %v2732 = vadd.f32 %v2295, %v2731
    %v2733 = vpop.f32.mrb[0].mxu0
    %v2734 = vadd.f32 %v2299, %v2733
    %v2735 = vpop.f32.mrb[0].mxu0
    %v2736 = vadd.f32 %v2295, %v2735
    %v2737 = vpop.f32.mrb[0].mxu0
    %v2738 = vadd.f32 %v2299, %v2737
    %2739 = vmatprep.mubr.bf16.mxu0 0
    %2740 = vmatmul.mubr.bf16.gmra.mrb[0].mxu0 %v2217
    %v2741 = vpop.f32.mrb[0].mxu0
    %v2742 = vadd.f32 %v2295, %v2741
    %v2743 = vpop.f32.mrb[0].mxu0
    %v2744 = vadd.f32 %v2299, %v2743
    %v2745 = vpop.f32.mrb[0].mxu0
    %v2746 = vadd.f32 %v2295, %v2745
    %v2747 = vpop.f32.mrb[0].mxu0
    %v2748 = vadd.f32 %v2299, %v2747
    %2749 = vdwg.mxu0
    %2750 = vmatprep.subr.bf16.mxu0 %v2521
    %2751 = vmatpush1.bf16.msra.mxu0 %v2520
    %2752 = vmatprep.subr.bf16.mxu0 %v2529
    %2753 = vmatpush1.bf16.msra.mxu0 %v2528
    %2754 = vmatprep.subr.bf16.mxu0 %v2537
    %2755 = vmatpush1.bf16.msra.mxu0 %v2536
    %2756 = vmatprep.subr.bf16.mxu0 %v2545
    %2757 = vmatpush1.bf16.msra.mxu0 %v2544
    %2758 = vmatprep.subr.bf16.mxu0 %v2553
    %2759 = vmatpush1.bf16.msra.mxu0 %v2552
    %2760 = vmatprep.subr.bf16.mxu0 %v2561
    %2761 = vmatpush1.bf16.msra.mxu0 %v2560
    %2762 = vmatprep.subr.bf16.mxu0 %v2569
    %2763 = vmatpush1.bf16.msra.mxu0 %v2568
    %2764 = vmatprep.subr.bf16.mxu0 %v2577
    %2765 = vmatpush1.bf16.msra.mxu0 %v2576
    %2766 = vmatprep.subr.bf16.mxu0 0
    %2767 = vmatpush1.bf16.msra.mxu0 0
    %2768 = vmatprep.subr.bf16.mxu0 0
    %2769 = vmatpush1.bf16.msra.mxu0 0
    %2770 = vmatprep.subr.bf16.mxu0 0
    %2771 = vmatpush1.bf16.msra.mxu0 0
    %2772 = vmatprep.subr.bf16.mxu0 0
    %2773 = vmatpush1.bf16.msra.mxu0 0
    %2774 = vmatprep.subr.bf16.mxu0 0
    %2775 = vmatpush1.bf16.msra.mxu0 0
    %2776 = vmatprep.subr.bf16.mxu0 0
    %2777 = vmatpush1.bf16.msra.mxu0 0
    %2778 = vmatprep.subr.bf16.mxu0 0
    %2779 = vmatpush1.bf16.msra.mxu0 0
    %2780 = vmatprep.subr.bf16.mxu0 0
    %2781 = vmatpush1.bf16.msra.mxu0 0
    %2782 = vmatprep.mubr.bf16.mxu0 0
    %2783 = vmatmul.mubr.bf16.gmra.mrb[0].mxu0 %v2216
    %v2784 = vpop.f32.mrb[0].mxu0
    %v2785 = vadd.f32 %v2303, %v2784
    %v2786 = vpop.f32.mrb[0].mxu0
    %v2787 = vadd.f32 %v2307, %v2786
    %v2788 = vpop.f32.mrb[0].mxu0
    %v2789 = vadd.f32 %v2303, %v2788
    %v2790 = vpop.f32.mrb[0].mxu0
    %v2791 = vadd.f32 %v2307, %v2790
    %2792 = vmatprep.mubr.bf16.mxu0 0
    %2793 = vmatmul.mubr.bf16.gmra.mrb[0].mxu0 %v2217
    %v2794 = vpop.f32.mrb[0].mxu0
    %v2795 = vadd.f32 %v2303, %v2794
    %v2796 = vpop.f32.mrb[0].mxu0
    %v2797 = vadd.f32 %v2307, %v2796
    %v2798 = vpop.f32.mrb[0].mxu0
    %v2799 = vadd.f32 %v2303, %v2798
    %v2800 = vpop.f32.mrb[0].mxu0
    %v2801 = vadd.f32 %v2307, %v2800
    %2802 = vdwg.mxu0
    %2803 = vmatprep.subr.bf16.mxu0 %v2523
    %2804 = vmatpush1.bf16.msra.mxu0 %v2522
    %2805 = vmatprep.subr.bf16.mxu0 %v2531
    %2806 = vmatpush1.bf16.msra.mxu0 %v2530
    %2807 = vmatprep.subr.bf16.mxu0 %v2539
    %2808 = vmatpush1.bf16.msra.mxu0 %v2538
    %2809 = vmatprep.subr.bf16.mxu0 %v2547
    %2810 = vmatpush1.bf16.msra.mxu0 %v2546
    %2811 = vmatprep.subr.bf16.mxu0 %v2555
    %2812 = vmatpush1.bf16.msra.mxu0 %v2554
    %2813 = vmatprep.subr.bf16.mxu0 %v2563
    %2814 = vmatpush1.bf16.msra.mxu0 %v2562
    %2815 = vmatprep.subr.bf16.mxu0 %v2571
    %2816 = vmatpush1.bf16.msra.mxu0 %v2570
    %2817 = vmatprep.subr.bf16.mxu0 %v2579
    %2818 = vmatpush1.bf16.msra.mxu0 %v2578
    %2819 = vmatprep.subr.bf16.mxu0 0
    %2820 = vmatpush1.bf16.msra.mxu0 0
    %2821 = vmatprep.subr.bf16.mxu0 0
    %2822 = vmatpush1.bf16.msra.mxu0 0
    %2823 = vmatprep.subr.bf16.mxu0 0
    %2824 = vmatpush1.bf16.msra.mxu0 0
    %2825 = vmatprep.subr.bf16.mxu0 0
    %2826 = vmatpush1.bf16.msra.mxu0 0
    %2827 = vmatprep.subr.bf16.mxu0 0
    %2828 = vmatpush1.bf16.msra.mxu0 0
    %2829 = vmatprep.subr.bf16.mxu0 0
    %2830 = vmatpush1.bf16.msra.mxu0 0
    %2831 = vmatprep.subr.bf16.mxu0 0
    %2832 = vmatpush1.bf16.msra.mxu0 0
    %2833 = vmatprep.subr.bf16.mxu0 0
    %2834 = vmatpush1.bf16.msra.mxu0 0
    %2835 = vmatprep.mubr.bf16.mxu0 0
    %2836 = vmatmul.mubr.bf16.gmra.mrb[0].mxu0 %v2216
    %v2837 = vpop.f32.mrb[0].mxu0
    %v2838 = vadd.f32 %v2311, %v2837
    %v2839 = vpop.f32.mrb[0].mxu0
    %v2840 = vadd.f32 %v2315, %v2839
    %v2841 = vpop.f32.mrb[0].mxu0
    %v2842 = vadd.f32 %v2311, %v2841
    %v2843 = vpop.f32.mrb[0].mxu0
    %v2844 = vadd.f32 %v2315, %v2843
    %2845 = vmatprep.mubr.bf16.mxu0 0
    %2846 = vmatmul.mubr.bf16.gmra.mrb[0].mxu0 %v2217
    %v2847 = vpop.f32.mrb[0].mxu0
    %v2848 = vadd.f32 %v2311, %v2847
    %v2849 = vpop.f32.mrb[0].mxu0
    %v2850 = vadd.f32 %v2315, %v2849
    %v2851 = vpop.f32.mrb[0].mxu0
    %v2852 = vadd.f32 %v2311, %v2851
    %v2853 = vpop.f32.mrb[0].mxu0
    %v2854 = vadd.f32 %v2315, %v2853
    %2855 = vdwg.mxu0
    %v2856 = vxor.u32 %v2679, 2147483648
    %v2857 = vxor.u32 %v2681, 2147483648
    %v2858 = vxor.u32 %v2732, 2147483648
    %v2859 = vxor.u32 %v2734, 2147483648
    %v2860 = vxor.u32 %v2785, 2147483648
    %v2861 = vxor.u32 %v2787, 2147483648
    %v2862 = vxor.u32 %v2838, 2147483648
    %v2863 = vxor.u32 %v2840, 2147483648
    %v2864 = vxor.u32 %v2683, 2147483648
    %v2865 = vxor.u32 %v2685, 2147483648
    %v2866 = vxor.u32 %v2736, 2147483648
    %v2867 = vxor.u32 %v2738, 2147483648
    %v2868 = vxor.u32 %v2789, 2147483648
    %v2869 = vxor.u32 %v2791, 2147483648
    %v2870 = vxor.u32 %v2842, 2147483648
    %v2871 = vxor.u32 %v2844, 2147483648
    %v2872 = vxor.u32 %v2689, 2147483648
    %v2873 = vxor.u32 %v2691, 2147483648
    %v2874 = vxor.u32 %v2742, 2147483648
    %v2875 = vxor.u32 %v2744, 2147483648
    %v2876 = vxor.u32 %v2795, 2147483648
    %v2877 = vxor.u32 %v2797, 2147483648
    %v2878 = vxor.u32 %v2848, 2147483648
    %v2879 = vxor.u32 %v2850, 2147483648
    %v2880 = vxor.u32 %v2693, 2147483648
    %v2881 = vxor.u32 %v2695, 2147483648
    %v2882 = vxor.u32 %v2746, 2147483648
    %v2883 = vxor.u32 %v2748, 2147483648
    %v2884 = vxor.u32 %v2799, 2147483648
    %v2885 = vxor.u32 %v2801, 2147483648
    %v2886 = vxor.u32 %v2852, 2147483648
    %v2887 = vxor.u32 %v2854, 2147483648
    %v2888 = vmul.f32 %v2856, 1.442695
    %v2889 = vpow.pop %v2888
    %v2890 = vmul.f32 %v2857, 1.442695
    %v2891 = vpow.pop %v2890
    %v2892 = vmul.f32 %v2858, 1.442695
    %v2893 = vpow.pop %v2892
    %v2894 = vmul.f32 %v2859, 1.442695
    %v2895 = vpow.pop %v2894
    %v2896 = vmul.f32 %v2860, 1.442695
    %v2897 = vpow.pop %v2896
    %v2898 = vmul.f32 %v2861, 1.442695
    %v2899 = vpow.pop %v2898
    %v2900 = vmul.f32 %v2862, 1.442695
    %v2901 = vpow.pop %v2900
    %v2902 = vmul.f32 %v2863, 1.442695
    %v2903 = vpow.pop %v2902
    %v2904 = vmul.f32 %v2864, 1.442695
    %v2905 = vpow.pop %v2904
    %v2906 = vmul.f32 %v2865, 1.442695
    %v2907 = vpow.pop %v2906
    %v2908 = vmul.f32 %v2866, 1.442695
    %v2909 = vpow.pop %v2908
    %v2910 = vmul.f32 %v2867, 1.442695
    %v2911 = vpow.pop %v2910
    %v2912 = vmul.f32 %v2868, 1.442695
    %v2913 = vpow.pop %v2912
    %v2914 = vmul.f32 %v2869, 1.442695
    %v2915 = vpow.pop %v2914
    %v2916 = vmul.f32 %v2870, 1.442695
    %v2917 = vpow.pop %v2916
    %v2918 = vmul.f32 %v2871, 1.442695
    %v2919 = vpow.pop %v2918
    %v2920 = vmul.f32 %v2872, 1.442695
    %v2921 = vpow.pop %v2920
    %v2922 = vmul.f32 %v2873, 1.442695
    %v2923 = vpow.pop %v2922
    %v2924 = vmul.f32 %v2874, 1.442695
    %v2925 = vpow.pop %v2924
    %v2926 = vmul.f32 %v2875, 1.442695
    %v2927 = vpow.pop %v2926
    %v2928 = vmul.f32 %v2876, 1.442695
    %v2929 = vpow.pop %v2928
    %v2930 = vmul.f32 %v2877, 1.442695
    %v2931 = vpow.pop %v2930
    %v2932 = vmul.f32 %v2878, 1.442695
    %v2933 = vpow.pop %v2932
    %v2934 = vmul.f32 %v2879, 1.442695
    %v2935 = vpow.pop %v2934
    %v2936 = vmul.f32 %v2880, 1.442695
    %v2937 = vpow.pop %v2936
    %v2938 = vmul.f32 %v2881, 1.442695
    %v2939 = vpow.pop %v2938
    %v2940 = vmul.f32 %v2882, 1.442695
    %v2941 = vpow.pop %v2940
    %v2942 = vmul.f32 %v2883, 1.442695
    %v2943 = vpow.pop %v2942
    %v2944 = vmul.f32 %v2884, 1.442695
    %v2945 = vpow.pop %v2944
    %v2946 = vmul.f32 %v2885, 1.442695
    %v2947 = vpow.pop %v2946
    %v2948 = vmul.f32 %v2886, 1.442695
    %v2949 = vpow.pop %v2948
    %v2950 = vmul.f32 %v2887, 1.442695
    %v2951 = vpow.pop %v2950
    %v2952 = vadd.f32 %v2889, 1.0
    %v2953 = vadd.f32 %v2891, 1.0
    %v2954 = vadd.f32 %v2893, 1.0
    %v2955 = vadd.f32 %v2895, 1.0
    %v2956 = vadd.f32 %v2897, 1.0
    %v2957 = vadd.f32 %v2899, 1.0
    %v2958 = vadd.f32 %v2901, 1.0
    %v2959 = vadd.f32 %v2903, 1.0
    %v2960 = vadd.f32 %v2905, 1.0
    %v2961 = vadd.f32 %v2907, 1.0
    %v2962 = vadd.f32 %v2909, 1.0
    %v2963 = vadd.f32 %v2911, 1.0
    %v2964 = vadd.f32 %v2913, 1.0
    %v2965 = vadd.f32 %v2915, 1.0
    %v2966 = vadd.f32 %v2917, 1.0
    %v2967 = vadd.f32 %v2919, 1.0
    %v2968 = vadd.f32 %v2921, 1.0
    %v2969 = vadd.f32 %v2923, 1.0
    %v2970 = vadd.f32 %v2925, 1.0
    %v2971 = vadd.f32 %v2927, 1.0
    %v2972 = vadd.f32 %v2929, 1.0
    %v2973 = vadd.f32 %v2931, 1.0
    %v2974 = vadd.f32 %v2933, 1.0
    %v2975 = vadd.f32 %v2935, 1.0
    %v2976 = vadd.f32 %v2937, 1.0
    %v2977 = vadd.f32 %v2939, 1.0
    %v2978 = vadd.f32 %v2941, 1.0
    %v2979 = vadd.f32 %v2943, 1.0
    %v2980 = vadd.f32 %v2945, 1.0
    %v2981 = vadd.f32 %v2947, 1.0
    %v2982 = vadd.f32 %v2949, 1.0
    %v2983 = vadd.f32 %v2951, 1.0
    %v2984 = vrcp.pop %v2952
    %v2985 = vmul.f32 1.0, %v2984
    %v2986 = vrcp.pop %v2953
    %v2987 = vmul.f32 1.0, %v2986
    %v2988 = vrcp.pop %v2954
    %v2989 = vmul.f32 1.0, %v2988
    %v2990 = vrcp.pop %v2955
    %v2991 = vmul.f32 1.0, %v2990
    %v2992 = vrcp.pop %v2956
    %v2993 = vmul.f32 1.0, %v2992
    %v2994 = vrcp.pop %v2957
    %v2995 = vmul.f32 1.0, %v2994
    %v2996 = vrcp.pop %v2958
    %v2997 = vmul.f32 1.0, %v2996
    %v2998 = vrcp.pop %v2959
    %v2999 = vmul.f32 1.0, %v2998
    %v3000 = vrcp.pop %v2960
    %v3001 = vmul.f32 1.0, %v3000
    %v3002 = vrcp.pop %v2961
    %v3003 = vmul.f32 1.0, %v3002
    %v3004 = vrcp.pop %v2962
    %v3005 = vmul.f32 1.0, %v3004
    %v3006 = vrcp.pop %v2963
    %v3007 = vmul.f32 1.0, %v3006
    %v3008 = vrcp.pop %v2964
    %v3009 = vmul.f32 1.0, %v3008
    %v3010 = vrcp.pop %v2965
    %v3011 = vmul.f32 1.0, %v3010
    %v3012 = vrcp.pop %v2966
    %v3013 = vmul.f32 1.0, %v3012
    %v3014 = vrcp.pop %v2967
    %v3015 = vmul.f32 1.0, %v3014
    %v3016 = vrcp.pop %v2968
    %v3017 = vmul.f32 1.0, %v3016
    %v3018 = vrcp.pop %v2969
    %v3019 = vmul.f32 1.0, %v3018
    %v3020 = vrcp.pop %v2970
    %v3021 = vmul.f32 1.0, %v3020
    %v3022 = vrcp.pop %v2971
    %v3023 = vmul.f32 1.0, %v3022
    %v3024 = vrcp.pop %v2972
    %v3025 = vmul.f32 1.0, %v3024
    %v3026 = vrcp.pop %v2973
    %v3027 = vmul.f32 1.0, %v3026
    %v3028 = vrcp.pop %v2974
    %v3029 = vmul.f32 1.0, %v3028
    %v3030 = vrcp.pop %v2975
    %v3031 = vmul.f32 1.0, %v3030
    %v3032 = vrcp.pop %v2976
    %v3033 = vmul.f32 1.0, %v3032
    %v3034 = vrcp.pop %v2977
    %v3035 = vmul.f32 1.0, %v3034
    %v3036 = vrcp.pop %v2978
    %v3037 = vmul.f32 1.0, %v3036
    %v3038 = vrcp.pop %v2979
    %v3039 = vmul.f32 1.0, %v3038
    %v3040 = vrcp.pop %v2980
    %v3041 = vmul.f32 1.0, %v3040
    %v3042 = vrcp.pop %v2981
    %v3043 = vmul.f32 1.0, %v3042
    %v3044 = vrcp.pop %v2982
    %v3045 = vmul.f32 1.0, %v3044
    %v3046 = vrcp.pop %v2983
    %v3047 = vmul.f32 1.0, %v3046
    %v3048 = vpack.c.bf16 %v3001, %v2985
    %v3049 = vpack.c.bf16 %v3003, %v2987
    %v3050 = vpack.c.bf16 %v3005, %v2989
    %v3051 = vpack.c.bf16 %v3007, %v2991
    %v3052 = vpack.c.bf16 %v3009, %v2993
    %v3053 = vpack.c.bf16 %v3011, %v2995
    %v3054 = vpack.c.bf16 %v3013, %v2997
    %v3055 = vpack.c.bf16 %v3015, %v2999
    %v3056 = vpack.c.bf16 %v3033, %v3017
    %v3057 = vpack.c.bf16 %v3035, %v3019
    %v3058 = vpack.c.bf16 %v3037, %v3021
    %v3059 = vpack.c.bf16 %v3039, %v3023
    %v3060 = vpack.c.bf16 %v3041, %v3025
    %v3061 = vpack.c.bf16 %v3043, %v3027
    %v3062 = vpack.c.bf16 %v3045, %v3029
    %v3063 = vpack.c.bf16 %v3047, %v3031
    %v3080 = vunpack.c.l.b16 %v3048
    %v3081 = vunpack.c.l.b16 %v3049
    %v3082 = vunpack.c.l.b16 %v3050
    %v3083 = vunpack.c.l.b16 %v3051
    %v3084 = vunpack.c.l.b16 %v3052
    %v3085 = vunpack.c.l.b16 %v3053
    %v3086 = vunpack.c.l.b16 %v3054
    %v3087 = vunpack.c.l.b16 %v3055
    %v3088 = vunpack.c.h.b16 %v3048
    %v3089 = vunpack.c.h.b16 %v3049
    %v3090 = vunpack.c.h.b16 %v3050
    %v3091 = vunpack.c.h.b16 %v3051
    %v3092 = vunpack.c.h.b16 %v3052
    %v3093 = vunpack.c.h.b16 %v3053
    %v3094 = vunpack.c.h.b16 %v3054
    %v3095 = vunpack.c.h.b16 %v3055
    %v3096 = vunpack.c.l.b16 %v3056
    %v3097 = vunpack.c.l.b16 %v3057
    %v3098 = vunpack.c.l.b16 %v3058
    %v3099 = vunpack.c.l.b16 %v3059
    %v3100 = vunpack.c.l.b16 %v3060
    %v3101 = vunpack.c.l.b16 %v3061
    %v3102 = vunpack.c.l.b16 %v3062
    %v3103 = vunpack.c.l.b16 %v3063
    %v3104 = vunpack.c.h.b16 %v3056
    %v3105 = vunpack.c.h.b16 %v3057
    %v3106 = vunpack.c.h.b16 %v3058
    %v3107 = vunpack.c.h.b16 %v3059
    %v3108 = vunpack.c.h.b16 %v3060
    %v3109 = vunpack.c.h.b16 %v3061
    %v3110 = vunpack.c.h.b16 %v3062
    %v3111 = vunpack.c.h.b16 %v3063
    %v3112 = vpack.c.b16 %v3081, %v3080
    %v3113 = vpack.c.b16 %v3083, %v3082
    %v3114 = vpack.c.b16 %v3085, %v3084
    %v3115 = vpack.c.b16 %v3087, %v3086
    %v3116 = vpack.c.b16 %v3089, %v3088
    %v3117 = vpack.c.b16 %v3091, %v3090
    %v3118 = vpack.c.b16 %v3093, %v3092
    %v3119 = vpack.c.b16 %v3095, %v3094
    %v3120 = vpack.c.b16 %v3097, %v3096
    %v3121 = vpack.c.b16 %v3099, %v3098
    %v3122 = vpack.c.b16 %v3101, %v3100
    %v3123 = vpack.c.b16 %v3103, %v3102
    %v3124 = vpack.c.b16 %v3105, %v3104
    %v3125 = vpack.c.b16 %v3107, %v3106
    %v3126 = vpack.c.b16 %v3109, %v3108
    %v3127 = vpack.c.b16 %v3111, %v3110
    %3144 = vst [vmem:[%s24] sm:$0xff] %v3112
    %3145 = vst [vmem:[%s24 + $0x8] sm:$0xff] %v3113
    %3146 = vst [vmem:[%s24 + $0x10] sm:$0xff] %v3114
    %3147 = vst [vmem:[%s24 + $0x18] sm:$0xff] %v3115
    %3148 = vst [vmem:[%s24 + $0x20] sm:$0xff] %v3116
    %3149 = vst [vmem:[%s24 + $0x28] sm:$0xff] %v3117
    %3150 = vst [vmem:[%s24 + $0x30] sm:$0xff] %v3118
    %3151 = vst [vmem:[%s24 + $0x38] sm:$0xff] %v3119
    %3152 = vst [vmem:[%s24 + $0x40] sm:$0xff] %v3120
    %3153 = vst [vmem:[%s24 + $0x48] sm:$0xff] %v3121
    %3154 = vst [vmem:[%s24 + $0x50] sm:$0xff] %v3122
    %3155 = vst [vmem:[%s24 + $0x58] sm:$0xff] %v3123
    %3156 = vst [vmem:[%s24 + $0x60] sm:$0xff] %v3124
    %3157 = vst [vmem:[%s24 + $0x68] sm:$0xff] %v3125
    %3158 = vst [vmem:[%s24 + $0x70] sm:$0xff] %v3126
    %3159 = vst [vmem:[%s24 + $0x78] sm:$0xff] %v3127
    %v3160 = vld [vmem:[#allocation2] sm:$0xff]
    %v3161 = vld [vmem:[#allocation2 + $0x8] sm:$0xff]
    %v3162 = vld [vmem:[#allocation2 + $0x10] sm:$0xff]
    %v3163 = vld [vmem:[#allocation2 + $0x18] sm:$0xff]
    %v3164 = vpack.c.bf16 %v3161, %v3160
    %v3165 = vpack.c.bf16 %v3163, %v3162
    %v3166 = vld [vmem:[%s20] sm:$0xf]
    %v3167 = vld [vmem:[%s20 + $0x4] sm:$0xf]
    %v3168 = vld [vmem:[%s20 + $0x8] sm:$0xf]
    %v3169 = vld [vmem:[%s20 + $0xc] sm:$0xf]
    %v3170 = vld [vmem:[%s21] sm:$0x1]
    %v3172 = vlaneseq
    %v3173 = vshrl.u32 %v3172, 7
    %v3174 = vsub.s32 0, %v3173
    %v3175 = vrot.slane %v3170, %v3174
    %v3181 = vunpack.c.l.b16 %v3166
    %v3182 = vunpack.c.l.b16 %v3167
    %v3183 = vunpack.c.l.b16 %v3168
    %v3184 = vunpack.c.l.b16 %v3169
    %v3185 = vpack.c.b16 %v3182, %v3181
    %v3186 = vpack.c.b16 %v3184, %v3183
    %v3190 = vsel %vm2119, %v3164, 0
    %v3193 = vsel %vm2119, %v3165, 0
    %3195 = vmatprep.subr.bf16.mxu0 0
    %3196 = vmatpush1.bf16.msra.mxu0 %v3185
    %3197 = vmatprep.subr.bf16.mxu0 0
    %3198 = vmatpush1.bf16.msra.mxu0 %v3186
    %3199 = vmatprep.subr.bf16.mxu0 0
    %3200 = vmatpush1.bf16.msra.mxu0 0
    %3201 = vmatprep.subr.bf16.mxu0 0
    %3202 = vmatpush1.bf16.msra.mxu0 0
    %3203 = vmatprep.subr.bf16.mxu0 0
    %3204 = vmatpush1.bf16.msra.mxu0 0
    %3205 = vmatprep.subr.bf16.mxu0 0
    %3206 = vmatpush1.bf16.msra.mxu0 0
    %3207 = vmatprep.subr.bf16.mxu0 0
    %3208 = vmatpush1.bf16.msra.mxu0 0
    %3209 = vmatprep.subr.bf16.mxu0 0
    %3210 = vmatpush1.bf16.msra.mxu0 0
    %3211 = vmatprep.subr.bf16.mxu0 0
    %3212 = vmatpush1.bf16.msra.mxu0 0
    %3213 = vmatprep.subr.bf16.mxu0 0
    %3214 = vmatpush1.bf16.msra.mxu0 0
    %3215 = vmatprep.subr.bf16.mxu0 0
    %3216 = vmatpush1.bf16.msra.mxu0 0
    %3217 = vmatprep.subr.bf16.mxu0 0
    %3218 = vmatpush1.bf16.msra.mxu0 0
    %3219 = vmatprep.subr.bf16.mxu0 0
    %3220 = vmatpush1.bf16.msra.mxu0 0
    %3221 = vmatprep.subr.bf16.mxu0 0
    %3222 = vmatpush1.bf16.msra.mxu0 0
    %3223 = vmatprep.subr.bf16.mxu0 0
    %3224 = vmatpush1.bf16.msra.mxu0 0
    %3225 = vmatprep.subr.bf16.mxu0 0
    %3226 = vmatpush1.bf16.msra.mxu0 0
    %3227 = vmatprep.mubr.bf16.mxu0 0
    %3228 = vmatmul.mubr.bf16.gmra.mrb[0].mxu0 %v3190
    %v3229 = vpop.f32.mrb[0].mxu0
    %v3230 = vadd.f32 %v3175, %v3229
    %v3231 = vpop.f32.mrb[0].mxu0
    %v3232 = vpop.f32.mrb[0].mxu0
    %v3233 = vadd.f32 %v3175, %v3232
    %v3234 = vpop.f32.mrb[0].mxu0
    %3235 = vmatprep.mubr.bf16.mxu0 0
    %3236 = vmatmul.mubr.bf16.gmra.mrb[0].mxu0 %v3193
    %v3237 = vpop.f32.mrb[0].mxu0
    %v3238 = vadd.f32 %v3175, %v3237
    %v3239 = vpop.f32.mrb[0].mxu0
    %v3240 = vpop.f32.mrb[0].mxu0
    %v3241 = vadd.f32 %v3175, %v3240
    %v3242 = vpop.f32.mrb[0].mxu0
    %3243 = vdwg.mxu0
    %v3244 = vmax.f32 %v3230, 0.0
    %v3245 = vmax.f32 %v3233, 0.0
    %v3246 = vmax.f32 %v3238, 0.0
    %v3247 = vmax.f32 %v3241, 0.0
    %v3248 = vpack.c.bf16 %v3245, %v3244
    %v3249 = vpack.c.bf16 %v3247, %v3246
    %v3250 = vld [vmem:[#allocation14] sm:$0xff]
    %v3251 = vld [vmem:[#allocation14 + $0x8] sm:$0xff]
    %v3252 = vld [vmem:[#allocation14 + $0x10] sm:$0xff]
    %v3253 = vld [vmem:[#allocation14 + $0x18] sm:$0xff]
    %v3254 = vld [vmem:[#allocation14 + $0x20] sm:$0xff]
    %v3255 = vld [vmem:[#allocation14 + $0x28] sm:$0xff]
    %v3256 = vld [vmem:[#allocation14 + $0x30] sm:$0xff]
    %v3257 = vld [vmem:[#allocation14 + $0x38] sm:$0xff]
    %v3258 = vld [vmem:[#allocation14 + $0x40] sm:$0xff]
    %v3259 = vld [vmem:[#allocation14 + $0x48] sm:$0xff]
    %v3260 = vld [vmem:[#allocation14 + $0x50] sm:$0xff]
    %v3261 = vld [vmem:[#allocation14 + $0x58] sm:$0xff]
    %v3262 = vld [vmem:[#allocation14 + $0x60] sm:$0xff]
    %v3263 = vld [vmem:[#allocation14 + $0x68] sm:$0xff]
    %v3264 = vld [vmem:[#allocation14 + $0x70] sm:$0xff]
    %v3265 = vld [vmem:[#allocation14 + $0x78] sm:$0xff]
    %v3266 = vld [vmem:[#allocation14 + $0x80] sm:$0xff]
    %v3267 = vld [vmem:[#allocation14 + $0x88] sm:$0xff]
    %v3268 = vld [vmem:[#allocation14 + $0x90] sm:$0xff]
    %v3269 = vld [vmem:[#allocation14 + $0x98] sm:$0xff]
    %v3270 = vld [vmem:[#allocation14 + $0xa0] sm:$0xff]
    %v3271 = vld [vmem:[#allocation14 + $0xa8] sm:$0xff]
    %v3272 = vld [vmem:[#allocation14 + $0xb0] sm:$0xff]
    %v3273 = vld [vmem:[#allocation14 + $0xb8] sm:$0xff]
    %v3274 = vld [vmem:[#allocation14 + $0xc0] sm:$0xff]
    %v3275 = vld [vmem:[#allocation14 + $0xc8] sm:$0xff]
    %v3276 = vld [vmem:[#allocation14 + $0xd0] sm:$0xff]
    %v3277 = vld [vmem:[#allocation14 + $0xd8] sm:$0xff]
    %v3278 = vld [vmem:[#allocation14 + $0xe0] sm:$0xff]
    %v3279 = vld [vmem:[#allocation14 + $0xe8] sm:$0xff]
    %v3280 = vld [vmem:[#allocation14 + $0xf0] sm:$0xff]
    %v3281 = vld [vmem:[#allocation14 + $0xf8] sm:$0xff]
    %v3282 = vld [vmem:[#allocation14 + $0x100] sm:$0xff]
    %v3283 = vld [vmem:[#allocation14 + $0x108] sm:$0xff]
    %v3284 = vld [vmem:[#allocation14 + $0x110] sm:$0xff]
    %v3285 = vld [vmem:[#allocation14 + $0x118] sm:$0xff]
    %v3286 = vld [vmem:[#allocation14 + $0x120] sm:$0xff]
    %v3287 = vld [vmem:[#allocation14 + $0x128] sm:$0xff]
    %v3288 = vld [vmem:[#allocation14 + $0x130] sm:$0xff]
    %v3289 = vld [vmem:[#allocation14 + $0x138] sm:$0xff]
    %v3290 = vld [vmem:[#allocation14 + $0x140] sm:$0xff]
    %v3291 = vld [vmem:[#allocation14 + $0x148] sm:$0xff]
    %v3292 = vld [vmem:[#allocation14 + $0x150] sm:$0xff]
    %v3293 = vld [vmem:[#allocation14 + $0x158] sm:$0xff]
    %v3294 = vld [vmem:[#allocation14 + $0x160] sm:$0xff]
    %v3295 = vld [vmem:[#allocation14 + $0x168] sm:$0xff]
    %v3296 = vld [vmem:[#allocation14 + $0x170] sm:$0xff]
    %v3297 = vld [vmem:[#allocation14 + $0x178] sm:$0xff]
    %v3298 = vld [vmem:[#allocation14 + $0x180] sm:$0xff]
    %v3299 = vld [vmem:[#allocation14 + $0x188] sm:$0xff]
    %v3300 = vld [vmem:[#allocation14 + $0x190] sm:$0xff]
    %v3301 = vld [vmem:[#allocation14 + $0x198] sm:$0xff]
    %v3302 = vld [vmem:[#allocation14 + $0x1a0] sm:$0xff]
    %v3303 = vld [vmem:[#allocation14 + $0x1a8] sm:$0xff]
    %v3304 = vld [vmem:[#allocation14 + $0x1b0] sm:$0xff]
    %v3305 = vld [vmem:[#allocation14 + $0x1b8] sm:$0xff]
    %v3306 = vld [vmem:[#allocation14 + $0x1c0] sm:$0xff]
    %v3307 = vld [vmem:[#allocation14 + $0x1c8] sm:$0xff]
    %v3308 = vld [vmem:[#allocation14 + $0x1d0] sm:$0xff]
    %v3309 = vld [vmem:[#allocation14 + $0x1d8] sm:$0xff]
    %v3310 = vld [vmem:[#allocation14 + $0x1e0] sm:$0xff]
    %v3311 = vld [vmem:[#allocation14 + $0x1e8] sm:$0xff]
    %v3312 = vld [vmem:[#allocation14 + $0x1f0] sm:$0xff]
    %v3313 = vld [vmem:[#allocation14 + $0x1f8] sm:$0xff]
    %v3314 = vld [vmem:[%s23] sm:$0xff]
    %v3316 = vlaneseq
    %v3317 = vshrl.u32 %v3316, 7
    %v3318 = vsub.s32 0, %v3317
    %v3319 = vrot.slane %v3314, %v3318
    %v3320 = vlaneseq
    %v3321 = vshrl.u32 %v3320, 7
    %v3322 = vsub.s32 1, %v3321
    %v3323 = vrot.slane %v3314, %v3322
    %v3324 = vlaneseq
    %v3325 = vshrl.u32 %v3324, 7
    %v3326 = vsub.s32 2, %v3325
    %v3327 = vrot.slane %v3314, %v3326
    %v3328 = vlaneseq
    %v3329 = vshrl.u32 %v3328, 7
    %v3330 = vsub.s32 3, %v3329
    %v3331 = vrot.slane %v3314, %v3330
    %v3332 = vlaneseq
    %v3333 = vshrl.u32 %v3332, 7
    %v3334 = vsub.s32 4, %v3333
    %v3335 = vrot.slane %v3314, %v3334
    %v3336 = vlaneseq
    %v3337 = vshrl.u32 %v3336, 7
    %v3338 = vsub.s32 5, %v3337
    %v3339 = vrot.slane %v3314, %v3338
    %v3340 = vlaneseq
    %v3341 = vshrl.u32 %v3340, 7
    %v3342 = vsub.s32 6, %v3341
    %v3343 = vrot.slane %v3314, %v3342
    %v3344 = vlaneseq
    %v3345 = vshrl.u32 %v3344, 7
    %v3346 = vsub.s32 7, %v3345
    %v3347 = vrot.slane %v3314, %v3346
    %v3420 = vunpack.c.l.b16 %v3250
    %v3421 = vunpack.c.h.b16 %v3250
    %v3422 = vunpack.c.l.b16 %v3251
    %v3423 = vunpack.c.h.b16 %v3251
    %v3424 = vunpack.c.l.b16 %v3252
    %v3425 = vunpack.c.h.b16 %v3252
    %v3426 = vunpack.c.l.b16 %v3253
    %v3427 = vunpack.c.h.b16 %v3253
    %v3428 = vunpack.c.l.b16 %v3254
    %v3429 = vunpack.c.h.b16 %v3254
    %v3430 = vunpack.c.l.b16 %v3255
    %v3431 = vunpack.c.h.b16 %v3255
    %v3432 = vunpack.c.l.b16 %v3256
    %v3433 = vunpack.c.h.b16 %v3256
    %v3434 = vunpack.c.l.b16 %v3257
    %v3435 = vunpack.c.h.b16 %v3257
    %v3436 = vunpack.c.l.b16 %v3258
    %v3437 = vunpack.c.h.b16 %v3258
    %v3438 = vunpack.c.l.b16 %v3259
    %v3439 = vunpack.c.h.b16 %v3259
    %v3440 = vunpack.c.l.b16 %v3260
    %v3441 = vunpack.c.h.b16 %v3260
    %v3442 = vunpack.c.l.b16 %v3261
    %v3443 = vunpack.c.h.b16 %v3261
    %v3444 = vunpack.c.l.b16 %v3262
    %v3445 = vunpack.c.h.b16 %v3262
    %v3446 = vunpack.c.l.b16 %v3263
    %v3447 = vunpack.c.h.b16 %v3263
    %v3448 = vunpack.c.l.b16 %v3264
    %v3449 = vunpack.c.h.b16 %v3264
    %v3450 = vunpack.c.l.b16 %v3265
    %v3451 = vunpack.c.h.b16 %v3265
    %v3452 = vunpack.c.l.b16 %v3266
    %v3453 = vunpack.c.h.b16 %v3266
    %v3454 = vunpack.c.l.b16 %v3267
    %v3455 = vunpack.c.h.b16 %v3267
    %v3456 = vunpack.c.l.b16 %v3268
    %v3457 = vunpack.c.h.b16 %v3268
    %v3458 = vunpack.c.l.b16 %v3269
    %v3459 = vunpack.c.h.b16 %v3269
    %v3460 = vunpack.c.l.b16 %v3270
    %v3461 = vunpack.c.h.b16 %v3270
    %v3462 = vunpack.c.l.b16 %v3271
    %v3463 = vunpack.c.h.b16 %v3271
    %v3464 = vunpack.c.l.b16 %v3272
    %v3465 = vunpack.c.h.b16 %v3272
    %v3466 = vunpack.c.l.b16 %v3273
    %v3467 = vunpack.c.h.b16 %v3273
    %v3468 = vunpack.c.l.b16 %v3274
    %v3469 = vunpack.c.h.b16 %v3274
    %v3470 = vunpack.c.l.b16 %v3275
    %v3471 = vunpack.c.h.b16 %v3275
    %v3472 = vunpack.c.l.b16 %v3276
    %v3473 = vunpack.c.h.b16 %v3276
    %v3474 = vunpack.c.l.b16 %v3277
    %v3475 = vunpack.c.h.b16 %v3277
    %v3476 = vunpack.c.l.b16 %v3278
    %v3477 = vunpack.c.h.b16 %v3278
    %v3478 = vunpack.c.l.b16 %v3279
    %v3479 = vunpack.c.h.b16 %v3279
    %v3480 = vunpack.c.l.b16 %v3280
    %v3481 = vunpack.c.h.b16 %v3280
    %v3482 = vunpack.c.l.b16 %v3281
    %v3483 = vunpack.c.h.b16 %v3281
    %v3484 = vunpack.c.l.b16 %v3282
    %v3485 = vunpack.c.h.b16 %v3282
    %v3486 = vunpack.c.l.b16 %v3283
    %v3487 = vunpack.c.h.b16 %v3283
    %v3488 = vunpack.c.l.b16 %v3284
    %v3489 = vunpack.c.h.b16 %v3284
    %v3490 = vunpack.c.l.b16 %v3285
    %v3491 = vunpack.c.h.b16 %v3285
    %v3492 = vunpack.c.l.b16 %v3286
    %v3493 = vunpack.c.h.b16 %v3286
    %v3494 = vunpack.c.l.b16 %v3287
    %v3495 = vunpack.c.h.b16 %v3287
    %v3496 = vunpack.c.l.b16 %v3288
    %v3497 = vunpack.c.h.b16 %v3288
    %v3498 = vunpack.c.l.b16 %v3289
    %v3499 = vunpack.c.h.b16 %v3289
    %v3500 = vunpack.c.l.b16 %v3290
    %v3501 = vunpack.c.h.b16 %v3290
    %v3502 = vunpack.c.l.b16 %v3291
    %v3503 = vunpack.c.h.b16 %v3291
    %v3504 = vunpack.c.l.b16 %v3292
    %v3505 = vunpack.c.h.b16 %v3292
    %v3506 = vunpack.c.l.b16 %v3293
    %v3507 = vunpack.c.h.b16 %v3293
    %v3508 = vunpack.c.l.b16 %v3294
    %v3509 = vunpack.c.h.b16 %v3294
    %v3510 = vunpack.c.l.b16 %v3295
    %v3511 = vunpack.c.h.b16 %v3295
    %v3512 = vunpack.c.l.b16 %v3296
    %v3513 = vunpack.c.h.b16 %v3296
    %v3514 = vunpack.c.l.b16 %v3297
    %v3515 = vunpack.c.h.b16 %v3297
    %v3516 = vunpack.c.l.b16 %v3298
    %v3517 = vunpack.c.h.b16 %v3298
    %v3518 = vunpack.c.l.b16 %v3299
    %v3519 = vunpack.c.h.b16 %v3299
    %v3520 = vunpack.c.l.b16 %v3300
    %v3521 = vunpack.c.h.b16 %v3300
    %v3522 = vunpack.c.l.b16 %v3301
    %v3523 = vunpack.c.h.b16 %v3301
    %v3524 = vunpack.c.l.b16 %v3302
    %v3525 = vunpack.c.h.b16 %v3302
    %v3526 = vunpack.c.l.b16 %v3303
    %v3527 = vunpack.c.h.b16 %v3303
    %v3528 = vunpack.c.l.b16 %v3304
    %v3529 = vunpack.c.h.b16 %v3304
    %v3530 = vunpack.c.l.b16 %v3305
    %v3531 = vunpack.c.h.b16 %v3305
    %v3532 = vunpack.c.l.b16 %v3306
    %v3533 = vunpack.c.h.b16 %v3306
    %v3534 = vunpack.c.l.b16 %v3307
    %v3535 = vunpack.c.h.b16 %v3307
    %v3536 = vunpack.c.l.b16 %v3308
    %v3537 = vunpack.c.h.b16 %v3308
    %v3538 = vunpack.c.l.b16 %v3309
    %v3539 = vunpack.c.h.b16 %v3309
    %v3540 = vunpack.c.l.b16 %v3310
    %v3541 = vunpack.c.h.b16 %v3310
    %v3542 = vunpack.c.l.b16 %v3311
    %v3543 = vunpack.c.h.b16 %v3311
    %v3544 = vunpack.c.l.b16 %v3312
    %v3545 = vunpack.c.h.b16 %v3312
    %v3546 = vunpack.c.l.b16 %v3313
    %v3547 = vunpack.c.h.b16 %v3313
    %v3548 = vpack.c.b16 %v3428, %v3420
    %v3549 = vpack.c.b16 %v3429, %v3421
    %v3550 = vpack.c.b16 %v3430, %v3422
    %v3551 = vpack.c.b16 %v3431, %v3423
    %v3552 = vpack.c.b16 %v3432, %v3424
    %v3553 = vpack.c.b16 %v3433, %v3425
    %v3554 = vpack.c.b16 %v3434, %v3426
    %v3555 = vpack.c.b16 %v3435, %v3427
    %v3556 = vpack.c.b16 %v3444, %v3436
    %v3557 = vpack.c.b16 %v3445, %v3437
    %v3558 = vpack.c.b16 %v3446, %v3438
    %v3559 = vpack.c.b16 %v3447, %v3439
    %v3560 = vpack.c.b16 %v3448, %v3440
    %v3561 = vpack.c.b16 %v3449, %v3441
    %v3562 = vpack.c.b16 %v3450, %v3442
    %v3563 = vpack.c.b16 %v3451, %v3443
    %v3564 = vpack.c.b16 %v3460, %v3452
    %v3565 = vpack.c.b16 %v3461, %v3453
    %v3566 = vpack.c.b16 %v3462, %v3454
    %v3567 = vpack.c.b16 %v3463, %v3455
    %v3568 = vpack.c.b16 %v3464, %v3456
    %v3569 = vpack.c.b16 %v3465, %v3457
    %v3570 = vpack.c.b16 %v3466, %v3458
    %v3571 = vpack.c.b16 %v3467, %v3459
    %v3572 = vpack.c.b16 %v3476, %v3468
    %v3573 = vpack.c.b16 %v3477, %v3469
    %v3574 = vpack.c.b16 %v3478, %v3470
    %v3575 = vpack.c.b16 %v3479, %v3471
    %v3576 = vpack.c.b16 %v3480, %v3472
    %v3577 = vpack.c.b16 %v3481, %v3473
    %v3578 = vpack.c.b16 %v3482, %v3474
    %v3579 = vpack.c.b16 %v3483, %v3475
    %v3580 = vpack.c.b16 %v3492, %v3484
    %v3581 = vpack.c.b16 %v3493, %v3485
    %v3582 = vpack.c.b16 %v3494, %v3486
    %v3583 = vpack.c.b16 %v3495, %v3487
    %v3584 = vpack.c.b16 %v3496, %v3488
    %v3585 = vpack.c.b16 %v3497, %v3489
    %v3586 = vpack.c.b16 %v3498, %v3490
    %v3587 = vpack.c.b16 %v3499, %v3491
    %v3588 = vpack.c.b16 %v3508, %v3500
    %v3589 = vpack.c.b16 %v3509, %v3501
    %v3590 = vpack.c.b16 %v3510, %v3502
    %v3591 = vpack.c.b16 %v3511, %v3503
    %v3592 = vpack.c.b16 %v3512, %v3504
    %v3593 = vpack.c.b16 %v3513, %v3505
    %v3594 = vpack.c.b16 %v3514, %v3506
    %v3595 = vpack.c.b16 %v3515, %v3507
    %v3596 = vpack.c.b16 %v3524, %v3516
    %v3597 = vpack.c.b16 %v3525, %v3517
    %v3598 = vpack.c.b16 %v3526, %v3518
    %v3599 = vpack.c.b16 %v3527, %v3519
    %v3600 = vpack.c.b16 %v3528, %v3520
    %v3601 = vpack.c.b16 %v3529, %v3521
    %v3602 = vpack.c.b16 %v3530, %v3522
    %v3603 = vpack.c.b16 %v3531, %v3523
    %v3604 = vpack.c.b16 %v3540, %v3532
    %v3605 = vpack.c.b16 %v3541, %v3533
    %v3606 = vpack.c.b16 %v3542, %v3534
    %v3607 = vpack.c.b16 %v3543, %v3535
    %v3608 = vpack.c.b16 %v3544, %v3536
    %v3609 = vpack.c.b16 %v3545, %v3537
    %v3610 = vpack.c.b16 %v3546, %v3538
    %v3611 = vpack.c.b16 %v3547, %v3539
    %3676 = vmatprep.subr.bf16.mxu0 %v3549
    %3677 = vmatpush1.bf16.msra.mxu0 %v3548
    %3678 = vmatprep.subr.bf16.mxu0 %v3557
    %3679 = vmatpush1.bf16.msra.mxu0 %v3556
    %3680 = vmatprep.subr.bf16.mxu0 %v3565
    %3681 = vmatpush1.bf16.msra.mxu0 %v3564
    %3682 = vmatprep.subr.bf16.mxu0 %v3573
    %3683 = vmatpush1.bf16.msra.mxu0 %v3572
    %3684 = vmatprep.subr.bf16.mxu0 %v3581
    %3685 = vmatpush1.bf16.msra.mxu0 %v3580
    %3686 = vmatprep.subr.bf16.mxu0 %v3589
    %3687 = vmatpush1.bf16.msra.mxu0 %v3588
    %3688 = vmatprep.subr.bf16.mxu0 %v3597
    %3689 = vmatpush1.bf16.msra.mxu0 %v3596
    %3690 = vmatprep.subr.bf16.mxu0 %v3605
    %3691 = vmatpush1.bf16.msra.mxu0 %v3604
    %3692 = vmatprep.subr.bf16.mxu0 0
    %3693 = vmatpush1.bf16.msra.mxu0 0
    %3694 = vmatprep.subr.bf16.mxu0 0
    %3695 = vmatpush1.bf16.msra.mxu0 0
    %3696 = vmatprep.subr.bf16.mxu0 0
    %3697 = vmatpush1.bf16.msra.mxu0 0
    %3698 = vmatprep.subr.bf16.mxu0 0
    %3699 = vmatpush1.bf16.msra.mxu0 0
    %3700 = vmatprep.subr.bf16.mxu0 0
    %3701 = vmatpush1.bf16.msra.mxu0 0
    %3702 = vmatprep.subr.bf16.mxu0 0
    %3703 = vmatpush1.bf16.msra.mxu0 0
    %3704 = vmatprep.subr.bf16.mxu0 0
    %3705 = vmatpush1.bf16.msra.mxu0 0
    %3706 = vmatprep.subr.bf16.mxu0 0
    %3707 = vmatpush1.bf16.msra.mxu0 0
    %3708 = vmatprep.mubr.bf16.mxu0 0
    %3709 = vmatmul.mubr.bf16.gmra.mrb[0].mxu0 %v3248
    %v3710 = vpop.f32.mrb[0].mxu0
    %v3711 = vadd.f32 %v3319, %v3710
    %v3712 = vpop.f32.mrb[0].mxu0
    %v3713 = vadd.f32 %v3323, %v3712
    %v3714 = vpop.f32.mrb[0].mxu0
    %v3715 = vadd.f32 %v3319, %v3714
    %v3716 = vpop.f32.mrb[0].mxu0
    %v3717 = vadd.f32 %v3323, %v3716
    %3718 = vmatprep.mubr.bf16.mxu0 0
    %3719 = vmatmul.mubr.bf16.gmra.mrb[0].mxu0 %v3249
    %v3720 = vpop.f32.mrb[0].mxu0
    %v3721 = vadd.f32 %v3319, %v3720
    %v3722 = vpop.f32.mrb[0].mxu0
    %v3723 = vadd.f32 %v3323, %v3722
    %v3724 = vpop.f32.mrb[0].mxu0
    %v3725 = vadd.f32 %v3319, %v3724
    %v3726 = vpop.f32.mrb[0].mxu0
    %v3727 = vadd.f32 %v3323, %v3726
    %3728 = vdwg.mxu0
    %3729 = vmatprep.subr.bf16.mxu0 %v3551
    %3730 = vmatpush1.bf16.msra.mxu0 %v3550
    %3731 = vmatprep.subr.bf16.mxu0 %v3559
    %3732 = vmatpush1.bf16.msra.mxu0 %v3558
    %3733 = vmatprep.subr.bf16.mxu0 %v3567
    %3734 = vmatpush1.bf16.msra.mxu0 %v3566
    %3735 = vmatprep.subr.bf16.mxu0 %v3575
    %3736 = vmatpush1.bf16.msra.mxu0 %v3574
    %3737 = vmatprep.subr.bf16.mxu0 %v3583
    %3738 = vmatpush1.bf16.msra.mxu0 %v3582
    %3739 = vmatprep.subr.bf16.mxu0 %v3591
    %3740 = vmatpush1.bf16.msra.mxu0 %v3590
    %3741 = vmatprep.subr.bf16.mxu0 %v3599
    %3742 = vmatpush1.bf16.msra.mxu0 %v3598
    %3743 = vmatprep.subr.bf16.mxu0 %v3607
    %3744 = vmatpush1.bf16.msra.mxu0 %v3606
    %3745 = vmatprep.subr.bf16.mxu0 0
    %3746 = vmatpush1.bf16.msra.mxu0 0
    %3747 = vmatprep.subr.bf16.mxu0 0
    %3748 = vmatpush1.bf16.msra.mxu0 0
    %3749 = vmatprep.subr.bf16.mxu0 0
    %3750 = vmatpush1.bf16.msra.mxu0 0
    %3751 = vmatprep.subr.bf16.mxu0 0
    %3752 = vmatpush1.bf16.msra.mxu0 0
    %3753 = vmatprep.subr.bf16.mxu0 0
    %3754 = vmatpush1.bf16.msra.mxu0 0
    %3755 = vmatprep.subr.bf16.mxu0 0
    %3756 = vmatpush1.bf16.msra.mxu0 0
    %3757 = vmatprep.subr.bf16.mxu0 0
    %3758 = vmatpush1.bf16.msra.mxu0 0
    %3759 = vmatprep.subr.bf16.mxu0 0
    %3760 = vmatpush1.bf16.msra.mxu0 0
    %3761 = vmatprep.mubr.bf16.mxu0 0
    %3762 = vmatmul.mubr.bf16.gmra.mrb[0].mxu0 %v3248
    %v3763 = vpop.f32.mrb[0].mxu0
    %v3764 = vadd.f32 %v3327, %v3763
    %v3765 = vpop.f32.mrb[0].mxu0
    %v3766 = vadd.f32 %v3331, %v3765
    %v3767 = vpop.f32.mrb[0].mxu0
    %v3768 = vadd.f32 %v3327, %v3767
    %v3769 = vpop.f32.mrb[0].mxu0
    %v3770 = vadd.f32 %v3331, %v3769
    %3771 = vmatprep.mubr.bf16.mxu0 0
    %3772 = vmatmul.mubr.bf16.gmra.mrb[0].mxu0 %v3249
    %v3773 = vpop.f32.mrb[0].mxu0
    %v3774 = vadd.f32 %v3327, %v3773
    %v3775 = vpop.f32.mrb[0].mxu0
    %v3776 = vadd.f32 %v3331, %v3775
    %v3777 = vpop.f32.mrb[0].mxu0
    %v3778 = vadd.f32 %v3327, %v3777
    %v3779 = vpop.f32.mrb[0].mxu0
    %v3780 = vadd.f32 %v3331, %v3779
    %3781 = vdwg.mxu0
    %3782 = vmatprep.subr.bf16.mxu0 %v3553
    %3783 = vmatpush1.bf16.msra.mxu0 %v3552
    %3784 = vmatprep.subr.bf16.mxu0 %v3561
    %3785 = vmatpush1.bf16.msra.mxu0 %v3560
    %3786 = vmatprep.subr.bf16.mxu0 %v3569
    %3787 = vmatpush1.bf16.msra.mxu0 %v3568
    %3788 = vmatprep.subr.bf16.mxu0 %v3577
    %3789 = vmatpush1.bf16.msra.mxu0 %v3576
    %3790 = vmatprep.subr.bf16.mxu0 %v3585
    %3791 = vmatpush1.bf16.msra.mxu0 %v3584
    %3792 = vmatprep.subr.bf16.mxu0 %v3593
    %3793 = vmatpush1.bf16.msra.mxu0 %v3592
    %3794 = vmatprep.subr.bf16.mxu0 %v3601
    %3795 = vmatpush1.bf16.msra.mxu0 %v3600
    %3796 = vmatprep.subr.bf16.mxu0 %v3609
    %3797 = vmatpush1.bf16.msra.mxu0 %v3608
    %3798 = vmatprep.subr.bf16.mxu0 0
    %3799 = vmatpush1.bf16.msra.mxu0 0
    %3800 = vmatprep.subr.bf16.mxu0 0
    %3801 = vmatpush1.bf16.msra.mxu0 0
    %3802 = vmatprep.subr.bf16.mxu0 0
    %3803 = vmatpush1.bf16.msra.mxu0 0
    %3804 = vmatprep.subr.bf16.mxu0 0
    %3805 = vmatpush1.bf16.msra.mxu0 0
    %3806 = vmatprep.subr.bf16.mxu0 0
    %3807 = vmatpush1.bf16.msra.mxu0 0
    %3808 = vmatprep.subr.bf16.mxu0 0
    %3809 = vmatpush1.bf16.msra.mxu0 0
    %3810 = vmatprep.subr.bf16.mxu0 0
    %3811 = vmatpush1.bf16.msra.mxu0 0
    %3812 = vmatprep.subr.bf16.mxu0 0
    %3813 = vmatpush1.bf16.msra.mxu0 0
    %3814 = vmatprep.mubr.bf16.mxu0 0
    %3815 = vmatmul.mubr.bf16.gmra.mrb[0].mxu0 %v3248
    %v3816 = vpop.f32.mrb[0].mxu0
    %v3817 = vadd.f32 %v3335, %v3816
    %v3818 = vpop.f32.mrb[0].mxu0
    %v3819 = vadd.f32 %v3339, %v3818
    %v3820 = vpop.f32.mrb[0].mxu0
    %v3821 = vadd.f32 %v3335, %v3820
    %v3822 = vpop.f32.mrb[0].mxu0
    %v3823 = vadd.f32 %v3339, %v3822
    %3824 = vmatprep.mubr.bf16.mxu0 0
    %3825 = vmatmul.mubr.bf16.gmra.mrb[0].mxu0 %v3249
    %v3826 = vpop.f32.mrb[0].mxu0
    %v3827 = vadd.f32 %v3335, %v3826
    %v3828 = vpop.f32.mrb[0].mxu0
    %v3829 = vadd.f32 %v3339, %v3828
    %v3830 = vpop.f32.mrb[0].mxu0
    %v3831 = vadd.f32 %v3335, %v3830
    %v3832 = vpop.f32.mrb[0].mxu0
    %v3833 = vadd.f32 %v3339, %v3832
    %3834 = vdwg.mxu0
    %3835 = vmatprep.subr.bf16.mxu0 %v3555
    %3836 = vmatpush1.bf16.msra.mxu0 %v3554
    %3837 = vmatprep.subr.bf16.mxu0 %v3563
    %3838 = vmatpush1.bf16.msra.mxu0 %v3562
    %3839 = vmatprep.subr.bf16.mxu0 %v3571
    %3840 = vmatpush1.bf16.msra.mxu0 %v3570
    %3841 = vmatprep.subr.bf16.mxu0 %v3579
    %3842 = vmatpush1.bf16.msra.mxu0 %v3578
    %3843 = vmatprep.subr.bf16.mxu0 %v3587
    %3844 = vmatpush1.bf16.msra.mxu0 %v3586
    %3845 = vmatprep.subr.bf16.mxu0 %v3595
    %3846 = vmatpush1.bf16.msra.mxu0 %v3594
    %3847 = vmatprep.subr.bf16.mxu0 %v3603
    %3848 = vmatpush1.bf16.msra.mxu0 %v3602
    %3849 = vmatprep.subr.bf16.mxu0 %v3611
    %3850 = vmatpush1.bf16.msra.mxu0 %v3610
    %3851 = vmatprep.subr.bf16.mxu0 0
    %3852 = vmatpush1.bf16.msra.mxu0 0
    %3853 = vmatprep.subr.bf16.mxu0 0
    %3854 = vmatpush1.bf16.msra.mxu0 0
    %3855 = vmatprep.subr.bf16.mxu0 0
    %3856 = vmatpush1.bf16.msra.mxu0 0
    %3857 = vmatprep.subr.bf16.mxu0 0
    %3858 = vmatpush1.bf16.msra.mxu0 0
    %3859 = vmatprep.subr.bf16.mxu0 0
    %3860 = vmatpush1.bf16.msra.mxu0 0
    %3861 = vmatprep.subr.bf16.mxu0 0
    %3862 = vmatpush1.bf16.msra.mxu0 0
    %3863 = vmatprep.subr.bf16.mxu0 0
    %3864 = vmatpush1.bf16.msra.mxu0 0
    %3865 = vmatprep.subr.bf16.mxu0 0
    %3866 = vmatpush1.bf16.msra.mxu0 0
    %3867 = vmatprep.mubr.bf16.mxu0 0
    %3868 = vmatmul.mubr.bf16.gmra.mrb[0].mxu0 %v3248
    %v3869 = vpop.f32.mrb[0].mxu0
    %v3870 = vadd.f32 %v3343, %v3869
    %v3871 = vpop.f32.mrb[0].mxu0
    %v3872 = vadd.f32 %v3347, %v3871
    %v3873 = vpop.f32.mrb[0].mxu0
    %v3874 = vadd.f32 %v3343, %v3873
    %v3875 = vpop.f32.mrb[0].mxu0
    %v3876 = vadd.f32 %v3347, %v3875
    %3877 = vmatprep.mubr.bf16.mxu0 0
    %3878 = vmatmul.mubr.bf16.gmra.mrb[0].mxu0 %v3249
    %v3879 = vpop.f32.mrb[0].mxu0
    %v3880 = vadd.f32 %v3343, %v3879
    %v3881 = vpop.f32.mrb[0].mxu0
    %v3882 = vadd.f32 %v3347, %v3881
    %v3883 = vpop.f32.mrb[0].mxu0
    %v3884 = vadd.f32 %v3343, %v3883
    %v3885 = vpop.f32.mrb[0].mxu0
    %v3886 = vadd.f32 %v3347, %v3885
    %3887 = vdwg.mxu0
    %v3888 = vxor.u32 %v3711, 2147483648
    %v3889 = vxor.u32 %v3713, 2147483648
    %v3890 = vxor.u32 %v3764, 2147483648
    %v3891 = vxor.u32 %v3766, 2147483648
    %v3892 = vxor.u32 %v3817, 2147483648
    %v3893 = vxor.u32 %v3819, 2147483648
    %v3894 = vxor.u32 %v3870, 2147483648
    %v3895 = vxor.u32 %v3872, 2147483648
    %v3896 = vxor.u32 %v3715, 2147483648
    %v3897 = vxor.u32 %v3717, 2147483648
    %v3898 = vxor.u32 %v3768, 2147483648
    %v3899 = vxor.u32 %v3770, 2147483648
    %v3900 = vxor.u32 %v3821, 2147483648
    %v3901 = vxor.u32 %v3823, 2147483648
    %v3902 = vxor.u32 %v3874, 2147483648
    %v3903 = vxor.u32 %v3876, 2147483648
    %v3904 = vxor.u32 %v3721, 2147483648
    %v3905 = vxor.u32 %v3723, 2147483648
    %v3906 = vxor.u32 %v3774, 2147483648
    %v3907 = vxor.u32 %v3776, 2147483648
    %v3908 = vxor.u32 %v3827, 2147483648
    %v3909 = vxor.u32 %v3829, 2147483648
    %v3910 = vxor.u32 %v3880, 2147483648
    %v3911 = vxor.u32 %v3882, 2147483648
    %v3912 = vxor.u32 %v3725, 2147483648
    %v3913 = vxor.u32 %v3727, 2147483648
    %v3914 = vxor.u32 %v3778, 2147483648
    %v3915 = vxor.u32 %v3780, 2147483648
    %v3916 = vxor.u32 %v3831, 2147483648
    %v3917 = vxor.u32 %v3833, 2147483648
    %v3918 = vxor.u32 %v3884, 2147483648
    %v3919 = vxor.u32 %v3886, 2147483648
    %v3920 = vmul.f32 %v3888, 1.442695
    %v3921 = vpow.pop %v3920
    %v3922 = vmul.f32 %v3889, 1.442695
    %v3923 = vpow.pop %v3922
    %v3924 = vmul.f32 %v3890, 1.442695
    %v3925 = vpow.pop %v3924
    %v3926 = vmul.f32 %v3891, 1.442695
    %v3927 = vpow.pop %v3926
    %v3928 = vmul.f32 %v3892, 1.442695
    %v3929 = vpow.pop %v3928
    %v3930 = vmul.f32 %v3893, 1.442695
    %v3931 = vpow.pop %v3930
    %v3932 = vmul.f32 %v3894, 1.442695
    %v3933 = vpow.pop %v3932
    %v3934 = vmul.f32 %v3895, 1.442695
    %v3935 = vpow.pop %v3934
    %v3936 = vmul.f32 %v3896, 1.442695
    %v3937 = vpow.pop %v3936
    %v3938 = vmul.f32 %v3897, 1.442695
    %v3939 = vpow.pop %v3938
    %v3940 = vmul.f32 %v3898, 1.442695
    %v3941 = vpow.pop %v3940
    %v3942 = vmul.f32 %v3899, 1.442695
    %v3943 = vpow.pop %v3942
    %v3944 = vmul.f32 %v3900, 1.442695
    %v3945 = vpow.pop %v3944
    %v3946 = vmul.f32 %v3901, 1.442695
    %v3947 = vpow.pop %v3946
    %v3948 = vmul.f32 %v3902, 1.442695
    %v3949 = vpow.pop %v3948
    %v3950 = vmul.f32 %v3903, 1.442695
    %v3951 = vpow.pop %v3950
    %v3952 = vmul.f32 %v3904, 1.442695
    %v3953 = vpow.pop %v3952
    %v3954 = vmul.f32 %v3905, 1.442695
    %v3955 = vpow.pop %v3954
    %v3956 = vmul.f32 %v3906, 1.442695
    %v3957 = vpow.pop %v3956
    %v3958 = vmul.f32 %v3907, 1.442695
    %v3959 = vpow.pop %v3958
    %v3960 = vmul.f32 %v3908, 1.442695
    %v3961 = vpow.pop %v3960
    %v3962 = vmul.f32 %v3909, 1.442695
    %v3963 = vpow.pop %v3962
    %v3964 = vmul.f32 %v3910, 1.442695
    %v3965 = vpow.pop %v3964
    %v3966 = vmul.f32 %v3911, 1.442695
    %v3967 = vpow.pop %v3966
    %v3968 = vmul.f32 %v3912, 1.442695
    %v3969 = vpow.pop %v3968
    %v3970 = vmul.f32 %v3913, 1.442695
    %v3971 = vpow.pop %v3970
    %v3972 = vmul.f32 %v3914, 1.442695
    %v3973 = vpow.pop %v3972
    %v3974 = vmul.f32 %v3915, 1.442695
    %v3975 = vpow.pop %v3974
    %v3976 = vmul.f32 %v3916, 1.442695
    %v3977 = vpow.pop %v3976
    %v3978 = vmul.f32 %v3917, 1.442695
    %v3979 = vpow.pop %v3978
    %v3980 = vmul.f32 %v3918, 1.442695
    %v3981 = vpow.pop %v3980
    %v3982 = vmul.f32 %v3919, 1.442695
    %v3983 = vpow.pop %v3982
    %v3984 = vadd.f32 %v3921, 1.0
    %v3985 = vadd.f32 %v3923, 1.0
    %v3986 = vadd.f32 %v3925, 1.0
    %v3987 = vadd.f32 %v3927, 1.0
    %v3988 = vadd.f32 %v3929, 1.0
    %v3989 = vadd.f32 %v3931, 1.0
    %v3990 = vadd.f32 %v3933, 1.0
    %v3991 = vadd.f32 %v3935, 1.0
    %v3992 = vadd.f32 %v3937, 1.0
    %v3993 = vadd.f32 %v3939, 1.0
    %v3994 = vadd.f32 %v3941, 1.0
    %v3995 = vadd.f32 %v3943, 1.0
    %v3996 = vadd.f32 %v3945, 1.0
    %v3997 = vadd.f32 %v3947, 1.0
    %v3998 = vadd.f32 %v3949, 1.0
    %v3999 = vadd.f32 %v3951, 1.0
    %v4000 = vadd.f32 %v3953, 1.0
    %v4001 = vadd.f32 %v3955, 1.0
    %v4002 = vadd.f32 %v3957, 1.0
    %v4003 = vadd.f32 %v3959, 1.0
    %v4004 = vadd.f32 %v3961, 1.0
    %v4005 = vadd.f32 %v3963, 1.0
    %v4006 = vadd.f32 %v3965, 1.0
    %v4007 = vadd.f32 %v3967, 1.0
    %v4008 = vadd.f32 %v3969, 1.0
    %v4009 = vadd.f32 %v3971, 1.0
    %v4010 = vadd.f32 %v3973, 1.0
    %v4011 = vadd.f32 %v3975, 1.0
    %v4012 = vadd.f32 %v3977, 1.0
    %v4013 = vadd.f32 %v3979, 1.0
    %v4014 = vadd.f32 %v3981, 1.0
    %v4015 = vadd.f32 %v3983, 1.0
    %v4016 = vrcp.pop %v3984
    %v4017 = vmul.f32 1.0, %v4016
    %v4018 = vrcp.pop %v3985
    %v4019 = vmul.f32 1.0, %v4018
    %v4020 = vrcp.pop %v3986
    %v4021 = vmul.f32 1.0, %v4020
    %v4022 = vrcp.pop %v3987
    %v4023 = vmul.f32 1.0, %v4022
    %v4024 = vrcp.pop %v3988
    %v4025 = vmul.f32 1.0, %v4024
    %v4026 = vrcp.pop %v3989
    %v4027 = vmul.f32 1.0, %v4026
    %v4028 = vrcp.pop %v3990
    %v4029 = vmul.f32 1.0, %v4028
    %v4030 = vrcp.pop %v3991
    %v4031 = vmul.f32 1.0, %v4030
    %v4032 = vrcp.pop %v3992
    %v4033 = vmul.f32 1.0, %v4032
    %v4034 = vrcp.pop %v3993
    %v4035 = vmul.f32 1.0, %v4034
    %v4036 = vrcp.pop %v3994
    %v4037 = vmul.f32 1.0, %v4036
    %v4038 = vrcp.pop %v3995
    %v4039 = vmul.f32 1.0, %v4038
    %v4040 = vrcp.pop %v3996
    %v4041 = vmul.f32 1.0, %v4040
    %v4042 = vrcp.pop %v3997
    %v4043 = vmul.f32 1.0, %v4042
    %v4044 = vrcp.pop %v3998
    %v4045 = vmul.f32 1.0, %v4044
    %v4046 = vrcp.pop %v3999
    %v4047 = vmul.f32 1.0, %v4046
    %v4048 = vrcp.pop %v4000
    %v4049 = vmul.f32 1.0, %v4048
    %v4050 = vrcp.pop %v4001
    %v4051 = vmul.f32 1.0, %v4050
    %v4052 = vrcp.pop %v4002
    %v4053 = vmul.f32 1.0, %v4052
    %v4054 = vrcp.pop %v4003
    %v4055 = vmul.f32 1.0, %v4054
    %v4056 = vrcp.pop %v4004
    %v4057 = vmul.f32 1.0, %v4056
    %v4058 = vrcp.pop %v4005
    %v4059 = vmul.f32 1.0, %v4058
    %v4060 = vrcp.pop %v4006
    %v4061 = vmul.f32 1.0, %v4060
    %v4062 = vrcp.pop %v4007
    %v4063 = vmul.f32 1.0, %v4062
    %v4064 = vrcp.pop %v4008
    %v4065 = vmul.f32 1.0, %v4064
    %v4066 = vrcp.pop %v4009
    %v4067 = vmul.f32 1.0, %v4066
    %v4068 = vrcp.pop %v4010
    %v4069 = vmul.f32 1.0, %v4068
    %v4070 = vrcp.pop %v4011
    %v4071 = vmul.f32 1.0, %v4070
    %v4072 = vrcp.pop %v4012
    %v4073 = vmul.f32 1.0, %v4072
    %v4074 = vrcp.pop %v4013
    %v4075 = vmul.f32 1.0, %v4074
    %v4076 = vrcp.pop %v4014
    %v4077 = vmul.f32 1.0, %v4076
    %v4078 = vrcp.pop %v4015
    %v4079 = vmul.f32 1.0, %v4078
    %v4080 = vpack.c.bf16 %v4033, %v4017
    %v4081 = vpack.c.bf16 %v4035, %v4019
    %v4082 = vpack.c.bf16 %v4037, %v4021
    %v4083 = vpack.c.bf16 %v4039, %v4023
    %v4084 = vpack.c.bf16 %v4041, %v4025
    %v4085 = vpack.c.bf16 %v4043, %v4027
    %v4086 = vpack.c.bf16 %v4045, %v4029
    %v4087 = vpack.c.bf16 %v4047, %v4031
    %v4088 = vpack.c.bf16 %v4065, %v4049
    %v4089 = vpack.c.bf16 %v4067, %v4051
    %v4090 = vpack.c.bf16 %v4069, %v4053
    %v4091 = vpack.c.bf16 %v4071, %v4055
    %v4092 = vpack.c.bf16 %v4073, %v4057
    %v4093 = vpack.c.bf16 %v4075, %v4059
    %v4094 = vpack.c.bf16 %v4077, %v4061
    %v4095 = vpack.c.bf16 %v4079, %v4063
    %v4112 = vunpack.c.l.b16 %v4080
    %v4113 = vunpack.c.l.b16 %v4081
    %v4114 = vunpack.c.l.b16 %v4082
    %v4115 = vunpack.c.l.b16 %v4083
    %v4116 = vunpack.c.l.b16 %v4084
    %v4117 = vunpack.c.l.b16 %v4085
    %v4118 = vunpack.c.l.b16 %v4086
    %v4119 = vunpack.c.l.b16 %v4087
    %v4120 = vunpack.c.h.b16 %v4080
    %v4121 = vunpack.c.h.b16 %v4081
    %v4122 = vunpack.c.h.b16 %v4082
    %v4123 = vunpack.c.h.b16 %v4083
    %v4124 = vunpack.c.h.b16 %v4084
    %v4125 = vunpack.c.h.b16 %v4085
    %v4126 = vunpack.c.h.b16 %v4086
    %v4127 = vunpack.c.h.b16 %v4087
    %v4128 = vunpack.c.l.b16 %v4088
    %v4129 = vunpack.c.l.b16 %v4089
    %v4130 = vunpack.c.l.b16 %v4090
    %v4131 = vunpack.c.l.b16 %v4091
    %v4132 = vunpack.c.l.b16 %v4092
    %v4133 = vunpack.c.l.b16 %v4093
    %v4134 = vunpack.c.l.b16 %v4094
    %v4135 = vunpack.c.l.b16 %v4095
    %v4136 = vunpack.c.h.b16 %v4088
    %v4137 = vunpack.c.h.b16 %v4089
    %v4138 = vunpack.c.h.b16 %v4090
    %v4139 = vunpack.c.h.b16 %v4091
    %v4140 = vunpack.c.h.b16 %v4092
    %v4141 = vunpack.c.h.b16 %v4093
    %v4142 = vunpack.c.h.b16 %v4094
    %v4143 = vunpack.c.h.b16 %v4095
    %v4144 = vpack.c.b16 %v4113, %v4112
    %v4145 = vpack.c.b16 %v4115, %v4114
    %v4146 = vpack.c.b16 %v4117, %v4116
    %v4147 = vpack.c.b16 %v4119, %v4118
    %v4148 = vpack.c.b16 %v4121, %v4120
    %v4149 = vpack.c.b16 %v4123, %v4122
    %v4150 = vpack.c.b16 %v4125, %v4124
    %v4151 = vpack.c.b16 %v4127, %v4126
    %v4152 = vpack.c.b16 %v4129, %v4128
    %v4153 = vpack.c.b16 %v4131, %v4130
    %v4154 = vpack.c.b16 %v4133, %v4132
    %v4155 = vpack.c.b16 %v4135, %v4134
    %v4156 = vpack.c.b16 %v4137, %v4136
    %v4157 = vpack.c.b16 %v4139, %v4138
    %v4158 = vpack.c.b16 %v4141, %v4140
    %v4159 = vpack.c.b16 %v4143, %v4142
    %4176 = vst [vmem:[%s25] sm:$0xff] %v4144
    %4177 = vst [vmem:[%s25 + $0x8] sm:$0xff] %v4145
    %4178 = vst [vmem:[%s25 + $0x10] sm:$0xff] %v4146
    %4179 = vst [vmem:[%s25 + $0x18] sm:$0xff] %v4147
    %4180 = vst [vmem:[%s25 + $0x20] sm:$0xff] %v4148
    %4181 = vst [vmem:[%s25 + $0x28] sm:$0xff] %v4149
    %4182 = vst [vmem:[%s25 + $0x30] sm:$0xff] %v4150
    %4183 = vst [vmem:[%s25 + $0x38] sm:$0xff] %v4151
    %4184 = vst [vmem:[%s25 + $0x40] sm:$0xff] %v4152
    %4185 = vst [vmem:[%s25 + $0x48] sm:$0xff] %v4153
    %4186 = vst [vmem:[%s25 + $0x50] sm:$0xff] %v4154
    %4187 = vst [vmem:[%s25 + $0x58] sm:$0xff] %v4155
    %4188 = vst [vmem:[%s25 + $0x60] sm:$0xff] %v4156
    %4189 = vst [vmem:[%s25 + $0x68] sm:$0xff] %v4157
    %4190 = vst [vmem:[%s25 + $0x70] sm:$0xff] %v4158
    %4191 = vst [vmem:[%s25 + $0x78] sm:$0xff] %v4159
    // Predicated region
    $region130: #{_pair_vae_forward.3} parent=1 // pred_check
      _
    $region131: #{_pair_vae_forward.3} parent=1 // pred_check_branch
      %4193 = sbr.rel (0) target = $region133
    $region132: #{_pair_vae_forward.3} parent=1 // pred_region
      _
    $region133: #{_pair_vae_forward.3} parent=1 // pred_fallthru
      _
    // Predicated region
    $region134: #{_pair_vae_forward.3} parent=1 // pred_check
      _
    $region135: #{_pair_vae_forward.3} parent=1 // pred_check_branch
      %4195 = sbr.rel (0) target = $region137
    $region136: #{_pair_vae_forward.3} parent=1 // pred_region
      _
    $region137: #{_pair_vae_forward.3} parent=1 // pred_fallthru
      _
    // Predicated region
    $region138: #{_pair_vae_forward.3} parent=1 // pred_check
      _
    $region139: #{_pair_vae_forward.3} parent=1 // pred_check_branch
      %4197 = sbr.rel (0) target = $region141
    $region140: #{_pair_vae_forward.3} parent=1 // pred_region
      _
    $region141: #{_pair_vae_forward.3} parent=1 // pred_fallthru
      _
    // Predicated region
    $region142: #{_pair_vae_forward.3} parent=1 // pred_check
      _
    $region143: #{_pair_vae_forward.3} parent=1 // pred_check_branch
      %4199 = sbr.rel (0) target = $region145
    $region144: #{_pair_vae_forward.3} parent=1 // pred_region
      _
    $region145: #{_pair_vae_forward.3} parent=1 // pred_fallthru
      _
    // Predicated region
    $region146: #{_pair_vae_forward.3} parent=1 // pred_check
      _
    $region147: #{_pair_vae_forward.3} parent=1 // pred_check_branch
      %4201 = sbr.rel (0) target = $region149
    $region148: #{_pair_vae_forward.3} parent=1 // pred_region
      _
    $region149: #{_pair_vae_forward.3} parent=1 // pred_fallthru
      _
    // Predicated region
    $region150: #{_pair_vae_forward.3} parent=1 // pred_check
      _
    $region151: #{_pair_vae_forward.3} parent=1 // pred_check_branch
      %4203 = sbr.rel (0) target = $region153
    $region152: #{_pair_vae_forward.3} parent=1 // pred_region
      _
    $region153: #{_pair_vae_forward.3} parent=1 // pred_fallthru
      _
    // Predicated region
    $region154: #{_pair_vae_forward.3} parent=1 // pred_check
      _
    $region155: #{_pair_vae_forward.3} parent=1 // pred_check_branch
      %4205 = sbr.rel (0) target = $region157
    $region156: #{_pair_vae_forward.3} parent=1 // pred_region
      _
    $region157: #{_pair_vae_forward.3} parent=1 // pred_fallthru
      _
    // Predicated region
    $region158: #{_pair_vae_forward.3} parent=1 // pred_check
      _
    $region159: #{_pair_vae_forward.3} parent=1 // pred_check_branch
      %4207 = sbr.rel (0) target = $region161
    $region160: #{_pair_vae_forward.3} parent=1 // pred_region
      _
    $region161: #{_pair_vae_forward.3} parent=1 // pred_fallthru
      _
    %4208 = vsyncpa [#allocation4], 1
    %4209 = vsyncpa [#allocation6], 1
    %4210 = vsyncpa [#allocation9], 1
    %4211 = vsyncpa [#allocation12], 1
    %4212 = vsyncpa [#allocation15], 1

</llo_original>
